<compile_context>
chip_gen: v7x
topology: tpu7x:2x2x1
jax: 0.10.0
libtpu: 0.0.40
codegen_flags: <defaults>
</compile_context>

<pallas_src>
import functools

import jax
import jax.numpy as jnp
from jax.experimental import pallas as pl
from jax.experimental.pallas import tpu as pltpu


# --------------------------------------------------------------------------- #
# Fused kernel: CNN (all frames) -> LSTM (unrolled) -> FC + softmax
# --------------------------------------------------------------------------- #
def _make_fused_kernel(*, Cin, Cout, K, H, W, pool, T, B, hidden, num_layers):
    HW = H * W
    TB = T * B
    taps = Cin * K * K

    def kernel(*refs):
        patches_ref, convw_ref, convb_ref, pool_ref = refs[:4]
        pos = 4
        lstm_refs = []
        for _ in range(num_layers):
            lstm_refs.append(refs[pos:pos + 3])
            pos += 3
        h0_ref, c0_ref, fcw_ref, fcb_ref, out_ref = refs[pos:pos + 5]

        # ---- CNN: conv(KxK, pad) + bias + ReLU + maxpool, all T*B frames at once ----
        tap_vals = [patches_ref[tt] for tt in range(taps)]            # each (TB, H*W)
        feat_chans = []
        for co in range(Cout):
            acc = jnp.zeros((TB, HW), jnp.float32)
            for tt in range(taps):
                acc = acc + tap_vals[tt] * convw_ref[co * taps + tt]  # SMEM scalar bcast
            y = jnp.maximum(acc + convb_ref[co], 0.0)                 # (TB, H*W)
            # max-pool via 0/1 lane-selection matmuls (MXU), exact for one-hot selectors
            pm = jnp.dot(y, pool_ref[0], preferred_element_type=jnp.float32)
            for p in range(1, pool * pool):
                pm = jnp.maximum(
                    pm, jnp.dot(y, pool_ref[p], preferred_element_type=jnp.float32))
            feat_chans.append(pm)                                     # (TB, Hp*Wp)
        # lane-dense feature slab; per-row flat order (Cout, Hp, Wp); rows ordered (t, b)
        seq = jnp.concatenate(feat_chans, axis=-1)                    # (TB, Cout*Hp*Wp)

        # ---- LSTM: hoisted input projection + statically unrolled recurrence ----
        h_last = None
        for layer in range(num_layers):
            wih_ref, whh_ref, b_ref = lstm_refs[layer]
            gates_x = jnp.dot(seq, wih_ref[...],
                              preferred_element_type=jnp.float32) + b_ref[...]  # (TB, 4H)
            h = h0_ref[layer]                                         # (B, H)
            c = c0_ref[layer]
            hs = []
            for t in range(T):                       # unrolled; h/c stay in registers
                g = gates_x[t * B:(t + 1) * B, :] + jnp.dot(
                    h, whh_ref[...], preferred_element_type=jnp.float32)  # (B, 4H)
                i_g = jax.nn.sigmoid(g[:, 0 * hidden:1 * hidden])
                f_g = jax.nn.sigmoid(g[:, 1 * hidden:2 * hidden])
                g_g = jnp.tanh(g[:, 2 * hidden:3 * hidden])
                o_g = jax.nn.sigmoid(g[:, 3 * hidden:4 * hidden])
                c = f_g * c + i_g * g_g
                h = o_g * jnp.tanh(c)
                hs.append(h)
            h_last = h
            if layer + 1 < num_layers:
                seq = jnp.concatenate(hs, axis=0)                     # (TB, hidden)

        # ---- FC + softmax (nn.Softmax() on a 2-D input => dim=1) ----
        logits = jnp.dot(h_last, fcw_ref[...],
                         preferred_element_type=jnp.float32) + fcb_ref[...]
        m = jnp.max(logits, axis=-1, keepdims=True)
        e = jnp.exp(logits - m)
        out_ref[...] = e / jnp.sum(e, axis=-1, keepdims=True)

    return kernel


# --------------------------------------------------------------------------- #
# Wrapper: layout plumbing (im2col taps, pooling selectors) + one pallas_call
# --------------------------------------------------------------------------- #
def cnnlstm_forward(params, x, h0, c0, *, pool_size, conv_padding):
    B, T, Cin, H, W = x.shape
    conv_w, conv_b = params["conv_w"], params["conv_b"]
    Cout, _, K, _ = conv_w.shape
    # TODO(synk): conv_stride != 1 unsupported; module's H//pool output math needs a
    # spatially-preserving conv (stride 1, 2*padding == K-1).
    assert 2 * conv_padding == K - 1
    assert H % pool_size == 0 and W % pool_size == 0
    Hp, Wp = H // pool_size, W // pool_size
    hid = params["lstm"][0][1].shape[1]
    num_layers = len(params["lstm"])
    out_size = params["fc_w"].shape[0]
    TB = T * B

    # im2col taps (pure layout: pad / transpose / slice / stack), frames ordered (t, b).
    xp = jnp.pad(x, ((0, 0), (0, 0), (0, 0),
                     (conv_padding, conv_padding), (conv_padding, conv_padding)))
    xp = xp.transpose(1, 0, 2, 3, 4)                       # (T, B, Cin, Hpad, Wpad)
    tap_list = []
    for ci in range(Cin):
        for kh in range(K):
            for kw in range(K):
                tap_list.append(xp[:, :, ci, kh:kh + H, kw:kw + W].reshape(TB, H * W))
    patches = jnp.stack(tap_list, axis=0)                  # (Cin*K*K, TB, H*W)

    # 0/1 lane-selection matrices for pool x pool max-pooling (weight-independent consts).
    j = jnp.arange(Hp * Wp)
    hp_, wp_ = j // Wp, j % Wp
    sels = []
    for dh in range(pool_size):
        for dw in range(pool_size):
            src = (hp_ * pool_size + dh) * W + (wp_ * pool_size + dw)
            sels.append(jax.nn.one_hot(src, H * W, dtype=jnp.float32).T)  # (H*W, Hp*Wp)
    pool_sel = jnp.stack(sels, axis=0)                     # (pool^2, H*W, Hp*Wp)

    inputs = [patches, conv_w.reshape(-1), conv_b, pool_sel]
    in_specs = [
        pl.BlockSpec((Cin * K * K, TB, H * W), lambda i: (0, 0, 0)),
        pl.BlockSpec(memory_space=pltpu.MemorySpace.SMEM),   # conv weights (flat scalars)
        pl.BlockSpec(memory_space=pltpu.MemorySpace.SMEM),   # conv bias
        pl.BlockSpec((pool_size * pool_size, H * W, Hp * Wp), lambda i: (0, 0, 0)),
    ]
    for (wih, whh, bih, bhh) in params["lstm"]:
        in_dim = wih.shape[1]
        inputs += [wih.T, whh.T, (bih + bhh)[None, :]]
        in_specs += [pl.BlockSpec((in_dim, 4 * hid), lambda i: (0, 0)),
                     pl.BlockSpec((hid, 4 * hid), lambda i: (0, 0)),
                     pl.BlockSpec((1, 4 * hid), lambda i: (0, 0))]
    inputs += [h0, c0, params["fc_w"].T, params["fc_b"][None, :]]
    in_specs += [pl.BlockSpec((num_layers, B, hid), lambda i: (0, 0, 0)),
                 pl.BlockSpec((num_layers, B, hid), lambda i: (0, 0, 0)),
                 pl.BlockSpec((hid, out_size), lambda i: (0, 0)),
                 pl.BlockSpec((1, out_size), lambda i: (0, 0))]

    kernel = _make_fused_kernel(Cin=Cin, Cout=Cout, K=K, H=H, W=W, pool=pool_size,
                                T=T, B=B, hidden=hid, num_layers=num_layers)
    return pl.pallas_call(
        kernel,
        out_shape=jax.ShapeDtypeStruct((B, out_size), jnp.float32),
        grid_spec=pltpu.PrefetchScalarGridSpec(
            num_scalar_prefetch=0,
            grid=(1,),
            in_specs=in_specs,
            out_specs=pl.BlockSpec((B, out_size), lambda i: (0, 0)),
        ),
        compiler_params=pltpu.CompilerParams(dimension_semantics=("arbitrary",)),
    )(*inputs)


# --------------------------------------------------------------------------- #
# Parameter init (deterministic, no checkpoint)
# --------------------------------------------------------------------------- #
def init_params(key, *, image_size, input_channels, output_channels,
                conv_kernel_size, pool_size, hidden_size, num_layers, output_size):
    lstm_input_size = output_channels * (image_size // pool_size) ** 2
    keys = iter(jax.random.split(key, 4 + 4 * num_layers))
    params = {
        "conv_w": 0.1 * jax.random.normal(
            next(keys), (output_channels, input_channels,
                         conv_kernel_size, conv_kernel_size), jnp.float32),
        "conv_b": 0.1 * jax.random.normal(next(keys), (output_channels,), jnp.float32),
        "lstm": [],
        "fc_w": 0.1 * jax.random.normal(next(keys), (output_size, hidden_size), jnp.float32),
        "fc_b": 0.1 * jax.random.normal(next(keys), (output_size,), jnp.float32),
    }
    in_dim = lstm_input_size
    for _ in range(num_layers):
        wih = 0.1 * jax.random.normal(next(keys), (4 * hidden_size, in_dim), jnp.float32)
        whh = 0.1 * jax.random.normal(next(keys), (4 * hidden_size, hidden_size), jnp.float32)
        bih = 0.1 * jax.random.normal(next(keys), (4 * hidden_size,), jnp.float32)
        bhh = 0.1 * jax.random.normal(next(keys), (4 * hidden_size,), jnp.float32)
        params["lstm"].append((wih, whh, bih, bhh))
        in_dim = hidden_size
    return params


if __name__ == "__main__":
    # Hyperparameters consistent with the module's forward.
    image_size = 16
    input_channels = 1
    output_channels = 4
    conv_kernel_size = 3
    conv_stride = 1          # kernel assumes stride 1 (required by the module's shape math)
    conv_padding = 1
    pool_size = 2
    seq_length = 8
    hidden_size = 32
    num_layers = 1
    output_size = 16
    batch = 2

    key = jax.random.PRNGKey(0)
    k_par, k_x, k_h, k_c = jax.random.split(key, 4)

    params = init_params(
        k_par, image_size=image_size, input_channels=input_channels,
        output_channels=output_channels, conv_kernel_size=conv_kernel_size,
        pool_size=pool_size, hidden_size=hidden_size, num_layers=num_layers,
        output_size=output_size)

    x = jax.random.normal(
        k_x, (batch, seq_length, input_channels, image_size, image_size), jnp.float32)
    # torch.randn h0/c0 inside the reference forward -> deterministic normals here.
    h0 = jax.random.normal(k_h, (num_layers, batch, hidden_size), jnp.float32)
    c0 = jax.random.normal(k_c, (num_layers, batch, hidden_size), jnp.float32)

    fwd = jax.jit(functools.partial(cnnlstm_forward,
                                    pool_size=pool_size, conv_padding=conv_padding))
    out = fwd(params, x, h0, c0)
    out = jax.block_until_ready(out)
    assert out.shape == (batch, output_size)
    print("KERNEL_OK")
</pallas_src>

<mosaic_0001>
module attributes {stable_mosaic.version = 11 : i64} {
  func.func @kernel(%arg0: i32, %arg1: memref<9x16x256xf32, #tpu.memory_space<vmem>>, %arg2: memref<36xf32, #tpu.memory_space<smem>>, %arg3: memref<4xf32, #tpu.memory_space<smem>>, %arg4: memref<4x256x64xf32, #tpu.memory_space<vmem>>, %arg5: memref<256x128xf32, #tpu.memory_space<vmem>>, %arg6: memref<32x128xf32, #tpu.memory_space<vmem>>, %arg7: memref<1x128xf32, #tpu.memory_space<vmem>>, %arg8: memref<1x2x32xf32, #tpu.memory_space<vmem>>, %arg9: memref<1x2x32xf32, #tpu.memory_space<vmem>>, %arg10: memref<32x16xf32, #tpu.memory_space<vmem>>, %arg11: memref<1x16xf32, #tpu.memory_space<vmem>>, %arg12: memref<2x16xf32, #tpu.memory_space<vmem>>) attributes {dimension_semantics = [#tpu.dimension_semantics<arbitrary>], iteration_bounds = array<i64: 1>, scalar_prefetch = 0 : i64, scratch_operands = 0 : i64, tpu.core_type = #tpu.core_type<tc>, window_params = [{pipeline_mode = #tpu.pipeline_mode<synchronous>, transform_indices = @transform_0, window_bounds = array<i64: 9, 16, 256>}, {transform_indices = @transform_1, window_bounds = array<i64: 36>}, {transform_indices = @transform_2, window_bounds = array<i64: 4>}, {pipeline_mode = #tpu.pipeline_mode<synchronous>, transform_indices = @transform_3, window_bounds = array<i64: 4, 256, 64>}, {pipeline_mode = #tpu.pipeline_mode<synchronous>, transform_indices = @transform_4, window_bounds = array<i64: 256, 128>}, {pipeline_mode = #tpu.pipeline_mode<synchronous>, transform_indices = @transform_5, window_bounds = array<i64: 32, 128>}, {pipeline_mode = #tpu.pipeline_mode<synchronous>, transform_indices = @transform_6, window_bounds = array<i64: 1, 128>}, {pipeline_mode = #tpu.pipeline_mode<synchronous>, transform_indices = @transform_7, window_bounds = array<i64: 1, 2, 32>}, {pipeline_mode = #tpu.pipeline_mode<synchronous>, transform_indices = @transform_8, window_bounds = array<i64: 1, 2, 32>}, {pipeline_mode = #tpu.pipeline_mode<synchronous>, transform_indices = @transform_9, window_bounds = array<i64: 32, 16>}, {pipeline_mode = #tpu.pipeline_mode<synchronous>, transform_indices = @transform_10, window_bounds = array<i64: 1, 16>}, {pipeline_mode = #tpu.pipeline_mode<synchronous>, transform_indices = @transform_11, window_bounds = array<i64: 2, 16>}]} {
    %c0 = arith.constant 0 : index
    %c0_0 = arith.constant 0 : index
    %c0_1 = arith.constant 0 : index
    %0 = vector.load %arg1[%c0, %c0_0, %c0_1] : memref<9x16x256xf32, #tpu.memory_space<vmem>>, vector<1x16x256xf32>
    %1 = vector.shape_cast %0 : vector<1x16x256xf32> to vector<16x256xf32>
    %c1 = arith.constant 1 : index
    %c0_2 = arith.constant 0 : index
    %c0_3 = arith.constant 0 : index
    %2 = vector.load %arg1[%c1, %c0_2, %c0_3] : memref<9x16x256xf32, #tpu.memory_space<vmem>>, vector<1x16x256xf32>
    %3 = vector.shape_cast %2 : vector<1x16x256xf32> to vector<16x256xf32>
    %c2 = arith.constant 2 : index
    %c0_4 = arith.constant 0 : index
    %c0_5 = arith.constant 0 : index
    %4 = vector.load %arg1[%c2, %c0_4, %c0_5] : memref<9x16x256xf32, #tpu.memory_space<vmem>>, vector<1x16x256xf32>
    %5 = vector.shape_cast %4 : vector<1x16x256xf32> to vector<16x256xf32>
    %c3 = arith.constant 3 : index
    %c0_6 = arith.constant 0 : index
    %c0_7 = arith.constant 0 : index
    %6 = vector.load %arg1[%c3, %c0_6, %c0_7] : memref<9x16x256xf32, #tpu.memory_space<vmem>>, vector<1x16x256xf32>
    %7 = vector.shape_cast %6 : vector<1x16x256xf32> to vector<16x256xf32>
    %c4 = arith.constant 4 : index
    %c0_8 = arith.constant 0 : index
    %c0_9 = arith.constant 0 : index
    %8 = vector.load %arg1[%c4, %c0_8, %c0_9] : memref<9x16x256xf32, #tpu.memory_space<vmem>>, vector<1x16x256xf32>
    %9 = vector.shape_cast %8 : vector<1x16x256xf32> to vector<16x256xf32>
    %c5 = arith.constant 5 : index
    %c0_10 = arith.constant 0 : index
    %c0_11 = arith.constant 0 : index
    %10 = vector.load %arg1[%c5, %c0_10, %c0_11] : memref<9x16x256xf32, #tpu.memory_space<vmem>>, vector<1x16x256xf32>
    %11 = vector.shape_cast %10 : vector<1x16x256xf32> to vector<16x256xf32>
    %c6 = arith.constant 6 : index
    %c0_12 = arith.constant 0 : index
    %c0_13 = arith.constant 0 : index
    %12 = vector.load %arg1[%c6, %c0_12, %c0_13] : memref<9x16x256xf32, #tpu.memory_space<vmem>>, vector<1x16x256xf32>
    %13 = vector.shape_cast %12 : vector<1x16x256xf32> to vector<16x256xf32>
    %c7 = arith.constant 7 : index
    %c0_14 = arith.constant 0 : index
    %c0_15 = arith.constant 0 : index
    %14 = vector.load %arg1[%c7, %c0_14, %c0_15] : memref<9x16x256xf32, #tpu.memory_space<vmem>>, vector<1x16x256xf32>
    %15 = vector.shape_cast %14 : vector<1x16x256xf32> to vector<16x256xf32>
    %c8 = arith.constant 8 : index
    %c0_16 = arith.constant 0 : index
    %c0_17 = arith.constant 0 : index
    %16 = vector.load %arg1[%c8, %c0_16, %c0_17] : memref<9x16x256xf32, #tpu.memory_space<vmem>>, vector<1x16x256xf32>
    %17 = vector.shape_cast %16 : vector<1x16x256xf32> to vector<16x256xf32>
    %cst = arith.constant 0.000000e+00 : f32
    %18 = vector.broadcast %cst : f32 to vector<16x256xf32>
    %c0_18 = arith.constant 0 : index
    %19 = memref.load %arg2[%c0_18] : memref<36xf32, #tpu.memory_space<smem>>
    %20 = vector.broadcast %19 : f32 to vector<16x256xf32>
    %21 = arith.mulf %1, %20 : vector<16x256xf32>
    %22 = arith.addf %18, %21 : vector<16x256xf32>
    %c1_19 = arith.constant 1 : index
    %23 = memref.load %arg2[%c1_19] : memref<36xf32, #tpu.memory_space<smem>>
    %24 = vector.broadcast %23 : f32 to vector<16x256xf32>
    %25 = arith.mulf %3, %24 : vector<16x256xf32>
    %26 = arith.addf %22, %25 : vector<16x256xf32>
    %c2_20 = arith.constant 2 : index
    %27 = memref.load %arg2[%c2_20] : memref<36xf32, #tpu.memory_space<smem>>
    %28 = vector.broadcast %27 : f32 to vector<16x256xf32>
    %29 = arith.mulf %5, %28 : vector<16x256xf32>
    %30 = arith.addf %26, %29 : vector<16x256xf32>
    %c3_21 = arith.constant 3 : index
    %31 = memref.load %arg2[%c3_21] : memref<36xf32, #tpu.memory_space<smem>>
    %32 = vector.broadcast %31 : f32 to vector<16x256xf32>
    %33 = arith.mulf %7, %32 : vector<16x256xf32>
    %34 = arith.addf %30, %33 : vector<16x256xf32>
    %c4_22 = arith.constant 4 : index
    %35 = memref.load %arg2[%c4_22] : memref<36xf32, #tpu.memory_space<smem>>
    %36 = vector.broadcast %35 : f32 to vector<16x256xf32>
    %37 = arith.mulf %9, %36 : vector<16x256xf32>
    %38 = arith.addf %34, %37 : vector<16x256xf32>
    %c5_23 = arith.constant 5 : index
    %39 = memref.load %arg2[%c5_23] : memref<36xf32, #tpu.memory_space<smem>>
    %40 = vector.broadcast %39 : f32 to vector<16x256xf32>
    %41 = arith.mulf %11, %40 : vector<16x256xf32>
    %42 = arith.addf %38, %41 : vector<16x256xf32>
    %c6_24 = arith.constant 6 : index
    %43 = memref.load %arg2[%c6_24] : memref<36xf32, #tpu.memory_space<smem>>
    %44 = vector.broadcast %43 : f32 to vector<16x256xf32>
    %45 = arith.mulf %13, %44 : vector<16x256xf32>
    %46 = arith.addf %42, %45 : vector<16x256xf32>
    %c7_25 = arith.constant 7 : index
    %47 = memref.load %arg2[%c7_25] : memref<36xf32, #tpu.memory_space<smem>>
    %48 = vector.broadcast %47 : f32 to vector<16x256xf32>
    %49 = arith.mulf %15, %48 : vector<16x256xf32>
    %50 = arith.addf %46, %49 : vector<16x256xf32>
    %c8_26 = arith.constant 8 : index
    %51 = memref.load %arg2[%c8_26] : memref<36xf32, #tpu.memory_space<smem>>
    %52 = vector.broadcast %51 : f32 to vector<16x256xf32>
    %53 = arith.mulf %17, %52 : vector<16x256xf32>
    %54 = arith.addf %50, %53 : vector<16x256xf32>
    %c0_27 = arith.constant 0 : index
    %55 = memref.load %arg3[%c0_27] : memref<4xf32, #tpu.memory_space<smem>>
    %56 = vector.broadcast %55 : f32 to vector<16x256xf32>
    %57 = arith.addf %54, %56 : vector<16x256xf32>
    %cst_28 = arith.constant 0.000000e+00 : f32
    %58 = vector.broadcast %cst_28 : f32 to vector<16x256xf32>
    %59 = arith.maximumf %57, %58 : vector<16x256xf32>
    %c0_29 = arith.constant 0 : index
    %c0_30 = arith.constant 0 : index
    %c0_31 = arith.constant 0 : index
    %60 = vector.load %arg4[%c0_29, %c0_30, %c0_31] : memref<4x256x64xf32, #tpu.memory_space<vmem>>, vector<1x256x64xf32>
    %61 = vector.shape_cast %60 : vector<1x256x64xf32> to vector<256x64xf32>
    %cst_32 = arith.constant dense<0.000000e+00> : vector<16x64xf32>
    %62 = tpu.matmul %59, %61, %cst_32 {dimension_numbers = #tpu.dot_dimension_numbers<[1], [0], [0], [1], [0, 0, 1, 1], [], []>} : vector<16x256xf32>, vector<256x64xf32>, vector<16x64xf32> -> vector<16x64xf32>
    %c1_33 = arith.constant 1 : index
    %c0_34 = arith.constant 0 : index
    %c0_35 = arith.constant 0 : index
    %63 = vector.load %arg4[%c1_33, %c0_34, %c0_35] : memref<4x256x64xf32, #tpu.memory_space<vmem>>, vector<1x256x64xf32>
    %64 = vector.shape_cast %63 : vector<1x256x64xf32> to vector<256x64xf32>
    %cst_36 = arith.constant dense<0.000000e+00> : vector<16x64xf32>
    %65 = tpu.matmul %59, %64, %cst_36 {dimension_numbers = #tpu.dot_dimension_numbers<[1], [0], [0], [1], [0, 0, 1, 1], [], []>} : vector<16x256xf32>, vector<256x64xf32>, vector<16x64xf32> -> vector<16x64xf32>
    %66 = arith.maximumf %62, %65 : vector<16x64xf32>
    %c2_37 = arith.constant 2 : index
    %c0_38 = arith.constant 0 : index
    %c0_39 = arith.constant 0 : index
    %67 = vector.load %arg4[%c2_37, %c0_38, %c0_39] : memref<4x256x64xf32, #tpu.memory_space<vmem>>, vector<1x256x64xf32>
    %68 = vector.shape_cast %67 : vector<1x256x64xf32> to vector<256x64xf32>
    %cst_40 = arith.constant dense<0.000000e+00> : vector<16x64xf32>
    %69 = tpu.matmul %59, %68, %cst_40 {dimension_numbers = #tpu.dot_dimension_numbers<[1], [0], [0], [1], [0, 0, 1, 1], [], []>} : vector<16x256xf32>, vector<256x64xf32>, vector<16x64xf32> -> vector<16x64xf32>
    %70 = arith.maximumf %66, %69 : vector<16x64xf32>
    %c3_41 = arith.constant 3 : index
    %c0_42 = arith.constant 0 : index
    %c0_43 = arith.constant 0 : index
    %71 = vector.load %arg4[%c3_41, %c0_42, %c0_43] : memref<4x256x64xf32, #tpu.memory_space<vmem>>, vector<1x256x64xf32>
    %72 = vector.shape_cast %71 : vector<1x256x64xf32> to vector<256x64xf32>
    %cst_44 = arith.constant dense<0.000000e+00> : vector<16x64xf32>
    %73 = tpu.matmul %59, %72, %cst_44 {dimension_numbers = #tpu.dot_dimension_numbers<[1], [0], [0], [1], [0, 0, 1, 1], [], []>} : vector<16x256xf32>, vector<256x64xf32>, vector<16x64xf32> -> vector<16x64xf32>
    %74 = arith.maximumf %70, %73 : vector<16x64xf32>
    %cst_45 = arith.constant 0.000000e+00 : f32
    %75 = vector.broadcast %cst_45 : f32 to vector<16x256xf32>
    %c9 = arith.constant 9 : index
    %76 = memref.load %arg2[%c9] : memref<36xf32, #tpu.memory_space<smem>>
    %77 = vector.broadcast %76 : f32 to vector<16x256xf32>
    %78 = arith.mulf %1, %77 : vector<16x256xf32>
    %79 = arith.addf %75, %78 : vector<16x256xf32>
    %c10 = arith.constant 10 : index
    %80 = memref.load %arg2[%c10] : memref<36xf32, #tpu.memory_space<smem>>
    %81 = vector.broadcast %80 : f32 to vector<16x256xf32>
    %82 = arith.mulf %3, %81 : vector<16x256xf32>
    %83 = arith.addf %79, %82 : vector<16x256xf32>
    %c11 = arith.constant 11 : index
    %84 = memref.load %arg2[%c11] : memref<36xf32, #tpu.memory_space<smem>>
    %85 = vector.broadcast %84 : f32 to vector<16x256xf32>
    %86 = arith.mulf %5, %85 : vector<16x256xf32>
    %87 = arith.addf %83, %86 : vector<16x256xf32>
    %c12 = arith.constant 12 : index
    %88 = memref.load %arg2[%c12] : memref<36xf32, #tpu.memory_space<smem>>
    %89 = vector.broadcast %88 : f32 to vector<16x256xf32>
    %90 = arith.mulf %7, %89 : vector<16x256xf32>
    %91 = arith.addf %87, %90 : vector<16x256xf32>
    %c13 = arith.constant 13 : index
    %92 = memref.load %arg2[%c13] : memref<36xf32, #tpu.memory_space<smem>>
    %93 = vector.broadcast %92 : f32 to vector<16x256xf32>
    %94 = arith.mulf %9, %93 : vector<16x256xf32>
    %95 = arith.addf %91, %94 : vector<16x256xf32>
    %c14 = arith.constant 14 : index
    %96 = memref.load %arg2[%c14] : memref<36xf32, #tpu.memory_space<smem>>
    %97 = vector.broadcast %96 : f32 to vector<16x256xf32>
    %98 = arith.mulf %11, %97 : vector<16x256xf32>
    %99 = arith.addf %95, %98 : vector<16x256xf32>
    %c15 = arith.constant 15 : index
    %100 = memref.load %arg2[%c15] : memref<36xf32, #tpu.memory_space<smem>>
    %101 = vector.broadcast %100 : f32 to vector<16x256xf32>
    %102 = arith.mulf %13, %101 : vector<16x256xf32>
    %103 = arith.addf %99, %102 : vector<16x256xf32>
    %c16 = arith.constant 16 : index
    %104 = memref.load %arg2[%c16] : memref<36xf32, #tpu.memory_space<smem>>
    %105 = vector.broadcast %104 : f32 to vector<16x256xf32>
    %106 = arith.mulf %15, %105 : vector<16x256xf32>
    %107 = arith.addf %103, %106 : vector<16x256xf32>
    %c17 = arith.constant 17 : index
    %108 = memref.load %arg2[%c17] : memref<36xf32, #tpu.memory_space<smem>>
    %109 = vector.broadcast %108 : f32 to vector<16x256xf32>
    %110 = arith.mulf %17, %109 : vector<16x256xf32>
    %111 = arith.addf %107, %110 : vector<16x256xf32>
    %c1_46 = arith.constant 1 : index
    %112 = memref.load %arg3[%c1_46] : memref<4xf32, #tpu.memory_space<smem>>
    %113 = vector.broadcast %112 : f32 to vector<16x256xf32>
    %114 = arith.addf %111, %113 : vector<16x256xf32>
    %cst_47 = arith.constant 0.000000e+00 : f32
    %115 = vector.broadcast %cst_47 : f32 to vector<16x256xf32>
    %116 = arith.maximumf %114, %115 : vector<16x256xf32>
    %c0_48 = arith.constant 0 : index
    %c0_49 = arith.constant 0 : index
    %c0_50 = arith.constant 0 : index
    %117 = vector.load %arg4[%c0_48, %c0_49, %c0_50] : memref<4x256x64xf32, #tpu.memory_space<vmem>>, vector<1x256x64xf32>
    %118 = vector.shape_cast %117 : vector<1x256x64xf32> to vector<256x64xf32>
    %cst_51 = arith.constant dense<0.000000e+00> : vector<16x64xf32>
    %119 = tpu.matmul %116, %118, %cst_51 {dimension_numbers = #tpu.dot_dimension_numbers<[1], [0], [0], [1], [0, 0, 1, 1], [], []>} : vector<16x256xf32>, vector<256x64xf32>, vector<16x64xf32> -> vector<16x64xf32>
    %c1_52 = arith.constant 1 : index
    %c0_53 = arith.constant 0 : index
    %c0_54 = arith.constant 0 : index
    %120 = vector.load %arg4[%c1_52, %c0_53, %c0_54] : memref<4x256x64xf32, #tpu.memory_space<vmem>>, vector<1x256x64xf32>
    %121 = vector.shape_cast %120 : vector<1x256x64xf32> to vector<256x64xf32>
    %cst_55 = arith.constant dense<0.000000e+00> : vector<16x64xf32>
    %122 = tpu.matmul %116, %121, %cst_55 {dimension_numbers = #tpu.dot_dimension_numbers<[1], [0], [0], [1], [0, 0, 1, 1], [], []>} : vector<16x256xf32>, vector<256x64xf32>, vector<16x64xf32> -> vector<16x64xf32>
    %123 = arith.maximumf %119, %122 : vector<16x64xf32>
    %c2_56 = arith.constant 2 : index
    %c0_57 = arith.constant 0 : index
    %c0_58 = arith.constant 0 : index
    %124 = vector.load %arg4[%c2_56, %c0_57, %c0_58] : memref<4x256x64xf32, #tpu.memory_space<vmem>>, vector<1x256x64xf32>
    %125 = vector.shape_cast %124 : vector<1x256x64xf32> to vector<256x64xf32>
    %cst_59 = arith.constant dense<0.000000e+00> : vector<16x64xf32>
    %126 = tpu.matmul %116, %125, %cst_59 {dimension_numbers = #tpu.dot_dimension_numbers<[1], [0], [0], [1], [0, 0, 1, 1], [], []>} : vector<16x256xf32>, vector<256x64xf32>, vector<16x64xf32> -> vector<16x64xf32>
    %127 = arith.maximumf %123, %126 : vector<16x64xf32>
    %c3_60 = arith.constant 3 : index
    %c0_61 = arith.constant 0 : index
    %c0_62 = arith.constant 0 : index
    %128 = vector.load %arg4[%c3_60, %c0_61, %c0_62] : memref<4x256x64xf32, #tpu.memory_space<vmem>>, vector<1x256x64xf32>
    %129 = vector.shape_cast %128 : vector<1x256x64xf32> to vector<256x64xf32>
    %cst_63 = arith.constant dense<0.000000e+00> : vector<16x64xf32>
    %130 = tpu.matmul %116, %129, %cst_63 {dimension_numbers = #tpu.dot_dimension_numbers<[1], [0], [0], [1], [0, 0, 1, 1], [], []>} : vector<16x256xf32>, vector<256x64xf32>, vector<16x64xf32> -> vector<16x64xf32>
    %131 = arith.maximumf %127, %130 : vector<16x64xf32>
    %cst_64 = arith.constant 0.000000e+00 : f32
    %132 = vector.broadcast %cst_64 : f32 to vector<16x256xf32>
    %c18 = arith.constant 18 : index
    %133 = memref.load %arg2[%c18] : memref<36xf32, #tpu.memory_space<smem>>
    %134 = vector.broadcast %133 : f32 to vector<16x256xf32>
    %135 = arith.mulf %1, %134 : vector<16x256xf32>
    %136 = arith.addf %132, %135 : vector<16x256xf32>
    %c19 = arith.constant 19 : index
    %137 = memref.load %arg2[%c19] : memref<36xf32, #tpu.memory_space<smem>>
    %138 = vector.broadcast %137 : f32 to vector<16x256xf32>
    %139 = arith.mulf %3, %138 : vector<16x256xf32>
    %140 = arith.addf %136, %139 : vector<16x256xf32>
    %c20 = arith.constant 20 : index
    %141 = memref.load %arg2[%c20] : memref<36xf32, #tpu.memory_space<smem>>
    %142 = vector.broadcast %141 : f32 to vector<16x256xf32>
    %143 = arith.mulf %5, %142 : vector<16x256xf32>
    %144 = arith.addf %140, %143 : vector<16x256xf32>
    %c21 = arith.constant 21 : index
    %145 = memref.load %arg2[%c21] : memref<36xf32, #tpu.memory_space<smem>>
    %146 = vector.broadcast %145 : f32 to vector<16x256xf32>
    %147 = arith.mulf %7, %146 : vector<16x256xf32>
    %148 = arith.addf %144, %147 : vector<16x256xf32>
    %c22 = arith.constant 22 : index
    %149 = memref.load %arg2[%c22] : memref<36xf32, #tpu.memory_space<smem>>
    %150 = vector.broadcast %149 : f32 to vector<16x256xf32>
    %151 = arith.mulf %9, %150 : vector<16x256xf32>
    %152 = arith.addf %148, %151 : vector<16x256xf32>
    %c23 = arith.constant 23 : index
    %153 = memref.load %arg2[%c23] : memref<36xf32, #tpu.memory_space<smem>>
    %154 = vector.broadcast %153 : f32 to vector<16x256xf32>
    %155 = arith.mulf %11, %154 : vector<16x256xf32>
    %156 = arith.addf %152, %155 : vector<16x256xf32>
    %c24 = arith.constant 24 : index
    %157 = memref.load %arg2[%c24] : memref<36xf32, #tpu.memory_space<smem>>
    %158 = vector.broadcast %157 : f32 to vector<16x256xf32>
    %159 = arith.mulf %13, %158 : vector<16x256xf32>
    %160 = arith.addf %156, %159 : vector<16x256xf32>
    %c25 = arith.constant 25 : index
    %161 = memref.load %arg2[%c25] : memref<36xf32, #tpu.memory_space<smem>>
    %162 = vector.broadcast %161 : f32 to vector<16x256xf32>
    %163 = arith.mulf %15, %162 : vector<16x256xf32>
    %164 = arith.addf %160, %163 : vector<16x256xf32>
    %c26 = arith.constant 26 : index
    %165 = memref.load %arg2[%c26] : memref<36xf32, #tpu.memory_space<smem>>
    %166 = vector.broadcast %165 : f32 to vector<16x256xf32>
    %167 = arith.mulf %17, %166 : vector<16x256xf32>
    %168 = arith.addf %164, %167 : vector<16x256xf32>
    %c2_65 = arith.constant 2 : index
    %169 = memref.load %arg3[%c2_65] : memref<4xf32, #tpu.memory_space<smem>>
    %170 = vector.broadcast %169 : f32 to vector<16x256xf32>
    %171 = arith.addf %168, %170 : vector<16x256xf32>
    %cst_66 = arith.constant 0.000000e+00 : f32
    %172 = vector.broadcast %cst_66 : f32 to vector<16x256xf32>
    %173 = arith.maximumf %171, %172 : vector<16x256xf32>
    %c0_67 = arith.constant 0 : index
    %c0_68 = arith.constant 0 : index
    %c0_69 = arith.constant 0 : index
    %174 = vector.load %arg4[%c0_67, %c0_68, %c0_69] : memref<4x256x64xf32, #tpu.memory_space<vmem>>, vector<1x256x64xf32>
    %175 = vector.shape_cast %174 : vector<1x256x64xf32> to vector<256x64xf32>
    %cst_70 = arith.constant dense<0.000000e+00> : vector<16x64xf32>
    %176 = tpu.matmul %173, %175, %cst_70 {dimension_numbers = #tpu.dot_dimension_numbers<[1], [0], [0], [1], [0, 0, 1, 1], [], []>} : vector<16x256xf32>, vector<256x64xf32>, vector<16x64xf32> -> vector<16x64xf32>
    %c1_71 = arith.constant 1 : index
    %c0_72 = arith.constant 0 : index
    %c0_73 = arith.constant 0 : index
    %177 = vector.load %arg4[%c1_71, %c0_72, %c0_73] : memref<4x256x64xf32, #tpu.memory_space<vmem>>, vector<1x256x64xf32>
    %178 = vector.shape_cast %177 : vector<1x256x64xf32> to vector<256x64xf32>
    %cst_74 = arith.constant dense<0.000000e+00> : vector<16x64xf32>
    %179 = tpu.matmul %173, %178, %cst_74 {dimension_numbers = #tpu.dot_dimension_numbers<[1], [0], [0], [1], [0, 0, 1, 1], [], []>} : vector<16x256xf32>, vector<256x64xf32>, vector<16x64xf32> -> vector<16x64xf32>
    %180 = arith.maximumf %176, %179 : vector<16x64xf32>
    %c2_75 = arith.constant 2 : index
    %c0_76 = arith.constant 0 : index
    %c0_77 = arith.constant 0 : index
    %181 = vector.load %arg4[%c2_75, %c0_76, %c0_77] : memref<4x256x64xf32, #tpu.memory_space<vmem>>, vector<1x256x64xf32>
    %182 = vector.shape_cast %181 : vector<1x256x64xf32> to vector<256x64xf32>
    %cst_78 = arith.constant dense<0.000000e+00> : vector<16x64xf32>
    %183 = tpu.matmul %173, %182, %cst_78 {dimension_numbers = #tpu.dot_dimension_numbers<[1], [0], [0], [1], [0, 0, 1, 1], [], []>} : vector<16x256xf32>, vector<256x64xf32>, vector<16x64xf32> -> vector<16x64xf32>
    %184 = arith.maximumf %180, %183 : vector<16x64xf32>
    %c3_79 = arith.constant 3 : index
    %c0_80 = arith.constant 0 : index
    %c0_81 = arith.constant 0 : index
    %185 = vector.load %arg4[%c3_79, %c0_80, %c0_81] : memref<4x256x64xf32, #tpu.memory_space<vmem>>, vector<1x256x64xf32>
    %186 = vector.shape_cast %185 : vector<1x256x64xf32> to vector<256x64xf32>
    %cst_82 = arith.constant dense<0.000000e+00> : vector<16x64xf32>
    %187 = tpu.matmul %173, %186, %cst_82 {dimension_numbers = #tpu.dot_dimension_numbers<[1], [0], [0], [1], [0, 0, 1, 1], [], []>} : vector<16x256xf32>, vector<256x64xf32>, vector<16x64xf32> -> vector<16x64xf32>
    %188 = arith.maximumf %184, %187 : vector<16x64xf32>
    %cst_83 = arith.constant 0.000000e+00 : f32
    %189 = vector.broadcast %cst_83 : f32 to vector<16x256xf32>
    %c27 = arith.constant 27 : index
    %190 = memref.load %arg2[%c27] : memref<36xf32, #tpu.memory_space<smem>>
    %191 = vector.broadcast %190 : f32 to vector<16x256xf32>
    %192 = arith.mulf %1, %191 : vector<16x256xf32>
    %193 = arith.addf %189, %192 : vector<16x256xf32>
    %c28 = arith.constant 28 : index
    %194 = memref.load %arg2[%c28] : memref<36xf32, #tpu.memory_space<smem>>
    %195 = vector.broadcast %194 : f32 to vector<16x256xf32>
    %196 = arith.mulf %3, %195 : vector<16x256xf32>
    %197 = arith.addf %193, %196 : vector<16x256xf32>
    %c29 = arith.constant 29 : index
    %198 = memref.load %arg2[%c29] : memref<36xf32, #tpu.memory_space<smem>>
    %199 = vector.broadcast %198 : f32 to vector<16x256xf32>
    %200 = arith.mulf %5, %199 : vector<16x256xf32>
    %201 = arith.addf %197, %200 : vector<16x256xf32>
    %c30 = arith.constant 30 : index
    %202 = memref.load %arg2[%c30] : memref<36xf32, #tpu.memory_space<smem>>
    %203 = vector.broadcast %202 : f32 to vector<16x256xf32>
    %204 = arith.mulf %7, %203 : vector<16x256xf32>
    %205 = arith.addf %201, %204 : vector<16x256xf32>
    %c31 = arith.constant 31 : index
    %206 = memref.load %arg2[%c31] : memref<36xf32, #tpu.memory_space<smem>>
    %207 = vector.broadcast %206 : f32 to vector<16x256xf32>
    %208 = arith.mulf %9, %207 : vector<16x256xf32>
    %209 = arith.addf %205, %208 : vector<16x256xf32>
    %c32 = arith.constant 32 : index
    %210 = memref.load %arg2[%c32] : memref<36xf32, #tpu.memory_space<smem>>
    %211 = vector.broadcast %210 : f32 to vector<16x256xf32>
    %212 = arith.mulf %11, %211 : vector<16x256xf32>
    %213 = arith.addf %209, %212 : vector<16x256xf32>
    %c33 = arith.constant 33 : index
    %214 = memref.load %arg2[%c33] : memref<36xf32, #tpu.memory_space<smem>>
    %215 = vector.broadcast %214 : f32 to vector<16x256xf32>
    %216 = arith.mulf %13, %215 : vector<16x256xf32>
    %217 = arith.addf %213, %216 : vector<16x256xf32>
    %c34 = arith.constant 34 : index
    %218 = memref.load %arg2[%c34] : memref<36xf32, #tpu.memory_space<smem>>
    %219 = vector.broadcast %218 : f32 to vector<16x256xf32>
    %220 = arith.mulf %15, %219 : vector<16x256xf32>
    %221 = arith.addf %217, %220 : vector<16x256xf32>
    %c35 = arith.constant 35 : index
    %222 = memref.load %arg2[%c35] : memref<36xf32, #tpu.memory_space<smem>>
    %223 = vector.broadcast %222 : f32 to vector<16x256xf32>
    %224 = arith.mulf %17, %223 : vector<16x256xf32>
    %225 = arith.addf %221, %224 : vector<16x256xf32>
    %c3_84 = arith.constant 3 : index
    %226 = memref.load %arg3[%c3_84] : memref<4xf32, #tpu.memory_space<smem>>
    %227 = vector.broadcast %226 : f32 to vector<16x256xf32>
    %228 = arith.addf %225, %227 : vector<16x256xf32>
    %cst_85 = arith.constant 0.000000e+00 : f32
    %229 = vector.broadcast %cst_85 : f32 to vector<16x256xf32>
    %230 = arith.maximumf %228, %229 : vector<16x256xf32>
    %c0_86 = arith.constant 0 : index
    %c0_87 = arith.constant 0 : index
    %c0_88 = arith.constant 0 : index
    %231 = vector.load %arg4[%c0_86, %c0_87, %c0_88] : memref<4x256x64xf32, #tpu.memory_space<vmem>>, vector<1x256x64xf32>
    %232 = vector.shape_cast %231 : vector<1x256x64xf32> to vector<256x64xf32>
    %cst_89 = arith.constant dense<0.000000e+00> : vector<16x64xf32>
    %233 = tpu.matmul %230, %232, %cst_89 {dimension_numbers = #tpu.dot_dimension_numbers<[1], [0], [0], [1], [0, 0, 1, 1], [], []>} : vector<16x256xf32>, vector<256x64xf32>, vector<16x64xf32> -> vector<16x64xf32>
    %c1_90 = arith.constant 1 : index
    %c0_91 = arith.constant 0 : index
    %c0_92 = arith.constant 0 : index
    %234 = vector.load %arg4[%c1_90, %c0_91, %c0_92] : memref<4x256x64xf32, #tpu.memory_space<vmem>>, vector<1x256x64xf32>
    %235 = vector.shape_cast %234 : vector<1x256x64xf32> to vector<256x64xf32>
    %cst_93 = arith.constant dense<0.000000e+00> : vector<16x64xf32>
    %236 = tpu.matmul %230, %235, %cst_93 {dimension_numbers = #tpu.dot_dimension_numbers<[1], [0], [0], [1], [0, 0, 1, 1], [], []>} : vector<16x256xf32>, vector<256x64xf32>, vector<16x64xf32> -> vector<16x64xf32>
    %237 = arith.maximumf %233, %236 : vector<16x64xf32>
    %c2_94 = arith.constant 2 : index
    %c0_95 = arith.constant 0 : index
    %c0_96 = arith.constant 0 : index
    %238 = vector.load %arg4[%c2_94, %c0_95, %c0_96] : memref<4x256x64xf32, #tpu.memory_space<vmem>>, vector<1x256x64xf32>
    %239 = vector.shape_cast %238 : vector<1x256x64xf32> to vector<256x64xf32>
    %cst_97 = arith.constant dense<0.000000e+00> : vector<16x64xf32>
    %240 = tpu.matmul %230, %239, %cst_97 {dimension_numbers = #tpu.dot_dimension_numbers<[1], [0], [0], [1], [0, 0, 1, 1], [], []>} : vector<16x256xf32>, vector<256x64xf32>, vector<16x64xf32> -> vector<16x64xf32>
    %241 = arith.maximumf %237, %240 : vector<16x64xf32>
    %c3_98 = arith.constant 3 : index
    %c0_99 = arith.constant 0 : index
    %c0_100 = arith.constant 0 : index
    %242 = vector.load %arg4[%c3_98, %c0_99, %c0_100] : memref<4x256x64xf32, #tpu.memory_space<vmem>>, vector<1x256x64xf32>
    %243 = vector.shape_cast %242 : vector<1x256x64xf32> to vector<256x64xf32>
    %cst_101 = arith.constant dense<0.000000e+00> : vector<16x64xf32>
    %244 = tpu.matmul %230, %243, %cst_101 {dimension_numbers = #tpu.dot_dimension_numbers<[1], [0], [0], [1], [0, 0, 1, 1], [], []>} : vector<16x256xf32>, vector<256x64xf32>, vector<16x64xf32> -> vector<16x64xf32>
    %245 = arith.maximumf %241, %244 : vector<16x64xf32>
    %246 = tpu.concatenate %74, %131, %188, %245 in 1 : vector<16x64xf32>, vector<16x64xf32>, vector<16x64xf32>, vector<16x64xf32> -> vector<16x256xf32>
    %c0_102 = arith.constant 0 : index
    %c0_103 = arith.constant 0 : index
    %247 = vector.load %arg5[%c0_102, %c0_103] : memref<256x128xf32, #tpu.memory_space<vmem>>, vector<256x128xf32>
    %cst_104 = arith.constant dense<0.000000e+00> : vector<16x128xf32>
    %248 = tpu.matmul %246, %247, %cst_104 {dimension_numbers = #tpu.dot_dimension_numbers<[1], [0], [0], [1], [0, 0, 1, 1], [], []>} : vector<16x256xf32>, vector<256x128xf32>, vector<16x128xf32> -> vector<16x128xf32>
    %c0_105 = arith.constant 0 : index
    %c0_106 = arith.constant 0 : index
    %249 = vector.load %arg7[%c0_105, %c0_106] : memref<1x128xf32, #tpu.memory_space<vmem>>, vector<1x128xf32>
    %250 = vector.broadcast %249 : vector<1x128xf32> to vector<16x128xf32>
    %251 = arith.addf %248, %250 : vector<16x128xf32>
    %c0_107 = arith.constant 0 : index
    %c0_108 = arith.constant 0 : index
    %c0_109 = arith.constant 0 : index
    %252 = vector.load %arg8[%c0_107, %c0_108, %c0_109] : memref<1x2x32xf32, #tpu.memory_space<vmem>>, vector<1x2x32xf32>
    %253 = vector.shape_cast %252 : vector<1x2x32xf32> to vector<2x32xf32>
    %c0_110 = arith.constant 0 : index
    %c0_111 = arith.constant 0 : index
    %c0_112 = arith.constant 0 : index
    %254 = vector.load %arg9[%c0_110, %c0_111, %c0_112] : memref<1x2x32xf32, #tpu.memory_space<vmem>>, vector<1x2x32xf32>
    %255 = vector.shape_cast %254 : vector<1x2x32xf32> to vector<2x32xf32>
    %256 = vector.extract_strided_slice %251 {offsets = [0, 0], sizes = [2, 128], strides = [1, 1]} : vector<16x128xf32> to vector<2x128xf32>
    %c0_113 = arith.constant 0 : index
    %c0_114 = arith.constant 0 : index
    %257 = vector.load %arg6[%c0_113, %c0_114] : memref<32x128xf32, #tpu.memory_space<vmem>>, vector<32x128xf32>
    %cst_115 = arith.constant dense<0.000000e+00> : vector<2x128xf32>
    %258 = tpu.matmul %253, %257, %cst_115 {dimension_numbers = #tpu.dot_dimension_numbers<[1], [0], [0], [1], [0, 0, 1, 1], [], []>} : vector<2x32xf32>, vector<32x128xf32>, vector<2x128xf32> -> vector<2x128xf32>
    %259 = arith.addf %256, %258 : vector<2x128xf32>
    %260 = vector.extract_strided_slice %259 {offsets = [0, 0], sizes = [2, 32], strides = [1, 1]} : vector<2x128xf32> to vector<2x32xf32>
    %261 = arith.negf %260 : vector<2x32xf32>
    %262 = math.exp %261 : vector<2x32xf32>
    %cst_116 = arith.constant 1.000000e+00 : f32
    %263 = vector.broadcast %cst_116 : f32 to vector<2x32xf32>
    %264 = arith.addf %263, %262 : vector<2x32xf32>
    %265 = arith.divf %263, %264 : vector<2x32xf32>
    %266 = vector.extract_strided_slice %259 {offsets = [0, 32], sizes = [2, 32], strides = [1, 1]} : vector<2x128xf32> to vector<2x32xf32>
    %267 = arith.negf %266 : vector<2x32xf32>
    %268 = math.exp %267 : vector<2x32xf32>
    %cst_117 = arith.constant 1.000000e+00 : f32
    %269 = vector.broadcast %cst_117 : f32 to vector<2x32xf32>
    %270 = arith.addf %269, %268 : vector<2x32xf32>
    %271 = arith.divf %269, %270 : vector<2x32xf32>
    %272 = vector.extract_strided_slice %259 {offsets = [0, 64], sizes = [2, 32], strides = [1, 1]} : vector<2x128xf32> to vector<2x32xf32>
    %273 = math.tanh %272 : vector<2x32xf32>
    %274 = vector.extract_strided_slice %259 {offsets = [0, 96], sizes = [2, 32], strides = [1, 1]} : vector<2x128xf32> to vector<2x32xf32>
    %275 = arith.negf %274 : vector<2x32xf32>
    %276 = math.exp %275 : vector<2x32xf32>
    %cst_118 = arith.constant 1.000000e+00 : f32
    %277 = vector.broadcast %cst_118 : f32 to vector<2x32xf32>
    %278 = arith.addf %277, %276 : vector<2x32xf32>
    %279 = arith.divf %277, %278 : vector<2x32xf32>
    %280 = arith.mulf %271, %255 : vector<2x32xf32>
    %281 = arith.mulf %265, %273 : vector<2x32xf32>
    %282 = arith.addf %280, %281 : vector<2x32xf32>
    %283 = math.tanh %282 : vector<2x32xf32>
    %284 = arith.mulf %279, %283 : vector<2x32xf32>
    %285 = vector.extract_strided_slice %251 {offsets = [2, 0], sizes = [2, 128], strides = [1, 1]} : vector<16x128xf32> to vector<2x128xf32>
    %c0_119 = arith.constant 0 : index
    %c0_120 = arith.constant 0 : index
    %286 = vector.load %arg6[%c0_119, %c0_120] : memref<32x128xf32, #tpu.memory_space<vmem>>, vector<32x128xf32>
    %cst_121 = arith.constant dense<0.000000e+00> : vector<2x128xf32>
    %287 = tpu.matmul %284, %286, %cst_121 {dimension_numbers = #tpu.dot_dimension_numbers<[1], [0], [0], [1], [0, 0, 1, 1], [], []>} : vector<2x32xf32>, vector<32x128xf32>, vector<2x128xf32> -> vector<2x128xf32>
    %288 = arith.addf %285, %287 : vector<2x128xf32>
    %289 = vector.extract_strided_slice %288 {offsets = [0, 0], sizes = [2, 32], strides = [1, 1]} : vector<2x128xf32> to vector<2x32xf32>
    %290 = arith.negf %289 : vector<2x32xf32>
    %291 = math.exp %290 : vector<2x32xf32>
    %cst_122 = arith.constant 1.000000e+00 : f32
    %292 = vector.broadcast %cst_122 : f32 to vector<2x32xf32>
    %293 = arith.addf %292, %291 : vector<2x32xf32>
    %294 = arith.divf %292, %293 : vector<2x32xf32>
    %295 = vector.extract_strided_slice %288 {offsets = [0, 32], sizes = [2, 32], strides = [1, 1]} : vector<2x128xf32> to vector<2x32xf32>
    %296 = arith.negf %295 : vector<2x32xf32>
    %297 = math.exp %296 : vector<2x32xf32>
    %cst_123 = arith.constant 1.000000e+00 : f32
    %298 = vector.broadcast %cst_123 : f32 to vector<2x32xf32>
    %299 = arith.addf %298, %297 : vector<2x32xf32>
    %300 = arith.divf %298, %299 : vector<2x32xf32>
    %301 = vector.extract_strided_slice %288 {offsets = [0, 64], sizes = [2, 32], strides = [1, 1]} : vector<2x128xf32> to vector<2x32xf32>
    %302 = math.tanh %301 : vector<2x32xf32>
    %303 = vector.extract_strided_slice %288 {offsets = [0, 96], sizes = [2, 32], strides = [1, 1]} : vector<2x128xf32> to vector<2x32xf32>
    %304 = arith.negf %303 : vector<2x32xf32>
    %305 = math.exp %304 : vector<2x32xf32>
    %cst_124 = arith.constant 1.000000e+00 : f32
    %306 = vector.broadcast %cst_124 : f32 to vector<2x32xf32>
    %307 = arith.addf %306, %305 : vector<2x32xf32>
    %308 = arith.divf %306, %307 : vector<2x32xf32>
    %309 = arith.mulf %300, %282 : vector<2x32xf32>
    %310 = arith.mulf %294, %302 : vector<2x32xf32>
    %311 = arith.addf %309, %310 : vector<2x32xf32>
    %312 = math.tanh %311 : vector<2x32xf32>
    %313 = arith.mulf %308, %312 : vector<2x32xf32>
    %314 = vector.extract_strided_slice %251 {offsets = [4, 0], sizes = [2, 128], strides = [1, 1]} : vector<16x128xf32> to vector<2x128xf32>
    %c0_125 = arith.constant 0 : index
    %c0_126 = arith.constant 0 : index
    %315 = vector.load %arg6[%c0_125, %c0_126] : memref<32x128xf32, #tpu.memory_space<vmem>>, vector<32x128xf32>
    %cst_127 = arith.constant dense<0.000000e+00> : vector<2x128xf32>
    %316 = tpu.matmul %313, %315, %cst_127 {dimension_numbers = #tpu.dot_dimension_numbers<[1], [0], [0], [1], [0, 0, 1, 1], [], []>} : vector<2x32xf32>, vector<32x128xf32>, vector<2x128xf32> -> vector<2x128xf32>
    %317 = arith.addf %314, %316 : vector<2x128xf32>
    %318 = vector.extract_strided_slice %317 {offsets = [0, 0], sizes = [2, 32], strides = [1, 1]} : vector<2x128xf32> to vector<2x32xf32>
    %319 = arith.negf %318 : vector<2x32xf32>
    %320 = math.exp %319 : vector<2x32xf32>
    %cst_128 = arith.constant 1.000000e+00 : f32
    %321 = vector.broadcast %cst_128 : f32 to vector<2x32xf32>
    %322 = arith.addf %321, %320 : vector<2x32xf32>
    %323 = arith.divf %321, %322 : vector<2x32xf32>
    %324 = vector.extract_strided_slice %317 {offsets = [0, 32], sizes = [2, 32], strides = [1, 1]} : vector<2x128xf32> to vector<2x32xf32>
    %325 = arith.negf %324 : vector<2x32xf32>
    %326 = math.exp %325 : vector<2x32xf32>
    %cst_129 = arith.constant 1.000000e+00 : f32
    %327 = vector.broadcast %cst_129 : f32 to vector<2x32xf32>
    %328 = arith.addf %327, %326 : vector<2x32xf32>
    %329 = arith.divf %327, %328 : vector<2x32xf32>
    %330 = vector.extract_strided_slice %317 {offsets = [0, 64], sizes = [2, 32], strides = [1, 1]} : vector<2x128xf32> to vector<2x32xf32>
    %331 = math.tanh %330 : vector<2x32xf32>
    %332 = vector.extract_strided_slice %317 {offsets = [0, 96], sizes = [2, 32], strides = [1, 1]} : vector<2x128xf32> to vector<2x32xf32>
    %333 = arith.negf %332 : vector<2x32xf32>
    %334 = math.exp %333 : vector<2x32xf32>
    %cst_130 = arith.constant 1.000000e+00 : f32
    %335 = vector.broadcast %cst_130 : f32 to vector<2x32xf32>
    %336 = arith.addf %335, %334 : vector<2x32xf32>
    %337 = arith.divf %335, %336 : vector<2x32xf32>
    %338 = arith.mulf %329, %311 : vector<2x32xf32>
    %339 = arith.mulf %323, %331 : vector<2x32xf32>
    %340 = arith.addf %338, %339 : vector<2x32xf32>
    %341 = math.tanh %340 : vector<2x32xf32>
    %342 = arith.mulf %337, %341 : vector<2x32xf32>
    %343 = vector.extract_strided_slice %251 {offsets = [6, 0], sizes = [2, 128], strides = [1, 1]} : vector<16x128xf32> to vector<2x128xf32>
    %c0_131 = arith.constant 0 : index
    %c0_132 = arith.constant 0 : index
    %344 = vector.load %arg6[%c0_131, %c0_132] : memref<32x128xf32, #tpu.memory_space<vmem>>, vector<32x128xf32>
    %cst_133 = arith.constant dense<0.000000e+00> : vector<2x128xf32>
    %345 = tpu.matmul %342, %344, %cst_133 {dimension_numbers = #tpu.dot_dimension_numbers<[1], [0], [0], [1], [0, 0, 1, 1], [], []>} : vector<2x32xf32>, vector<32x128xf32>, vector<2x128xf32> -> vector<2x128xf32>
    %346 = arith.addf %343, %345 : vector<2x128xf32>
    %347 = vector.extract_strided_slice %346 {offsets = [0, 0], sizes = [2, 32], strides = [1, 1]} : vector<2x128xf32> to vector<2x32xf32>
    %348 = arith.negf %347 : vector<2x32xf32>
    %349 = math.exp %348 : vector<2x32xf32>
    %cst_134 = arith.constant 1.000000e+00 : f32
    %350 = vector.broadcast %cst_134 : f32 to vector<2x32xf32>
    %351 = arith.addf %350, %349 : vector<2x32xf32>
    %352 = arith.divf %350, %351 : vector<2x32xf32>
    %353 = vector.extract_strided_slice %346 {offsets = [0, 32], sizes = [2, 32], strides = [1, 1]} : vector<2x128xf32> to vector<2x32xf32>
    %354 = arith.negf %353 : vector<2x32xf32>
    %355 = math.exp %354 : vector<2x32xf32>
    %cst_135 = arith.constant 1.000000e+00 : f32
    %356 = vector.broadcast %cst_135 : f32 to vector<2x32xf32>
    %357 = arith.addf %356, %355 : vector<2x32xf32>
    %358 = arith.divf %356, %357 : vector<2x32xf32>
    %359 = vector.extract_strided_slice %346 {offsets = [0, 64], sizes = [2, 32], strides = [1, 1]} : vector<2x128xf32> to vector<2x32xf32>
    %360 = math.tanh %359 : vector<2x32xf32>
    %361 = vector.extract_strided_slice %346 {offsets = [0, 96], sizes = [2, 32], strides = [1, 1]} : vector<2x128xf32> to vector<2x32xf32>
    %362 = arith.negf %361 : vector<2x32xf32>
    %363 = math.exp %362 : vector<2x32xf32>
    %cst_136 = arith.constant 1.000000e+00 : f32
    %364 = vector.broadcast %cst_136 : f32 to vector<2x32xf32>
    %365 = arith.addf %364, %363 : vector<2x32xf32>
    %366 = arith.divf %364, %365 : vector<2x32xf32>
    %367 = arith.mulf %358, %340 : vector<2x32xf32>
    %368 = arith.mulf %352, %360 : vector<2x32xf32>
    %369 = arith.addf %367, %368 : vector<2x32xf32>
    %370 = math.tanh %369 : vector<2x32xf32>
    %371 = arith.mulf %366, %370 : vector<2x32xf32>
    %372 = vector.extract_strided_slice %251 {offsets = [8, 0], sizes = [2, 128], strides = [1, 1]} : vector<16x128xf32> to vector<2x128xf32>
    %c0_137 = arith.constant 0 : index
    %c0_138 = arith.constant 0 : index
    %373 = vector.load %arg6[%c0_137, %c0_138] : memref<32x128xf32, #tpu.memory_space<vmem>>, vector<32x128xf32>
    %cst_139 = arith.constant dense<0.000000e+00> : vector<2x128xf32>
    %374 = tpu.matmul %371, %373, %cst_139 {dimension_numbers = #tpu.dot_dimension_numbers<[1], [0], [0], [1], [0, 0, 1, 1], [], []>} : vector<2x32xf32>, vector<32x128xf32>, vector<2x128xf32> -> vector<2x128xf32>
    %375 = arith.addf %372, %374 : vector<2x128xf32>
    %376 = vector.extract_strided_slice %375 {offsets = [0, 0], sizes = [2, 32], strides = [1, 1]} : vector<2x128xf32> to vector<2x32xf32>
    %377 = arith.negf %376 : vector<2x32xf32>
    %378 = math.exp %377 : vector<2x32xf32>
    %cst_140 = arith.constant 1.000000e+00 : f32
    %379 = vector.broadcast %cst_140 : f32 to vector<2x32xf32>
    %380 = arith.addf %379, %378 : vector<2x32xf32>
    %381 = arith.divf %379, %380 : vector<2x32xf32>
    %382 = vector.extract_strided_slice %375 {offsets = [0, 32], sizes = [2, 32], strides = [1, 1]} : vector<2x128xf32> to vector<2x32xf32>
    %383 = arith.negf %382 : vector<2x32xf32>
    %384 = math.exp %383 : vector<2x32xf32>
    %cst_141 = arith.constant 1.000000e+00 : f32
    %385 = vector.broadcast %cst_141 : f32 to vector<2x32xf32>
    %386 = arith.addf %385, %384 : vector<2x32xf32>
    %387 = arith.divf %385, %386 : vector<2x32xf32>
    %388 = vector.extract_strided_slice %375 {offsets = [0, 64], sizes = [2, 32], strides = [1, 1]} : vector<2x128xf32> to vector<2x32xf32>
    %389 = math.tanh %388 : vector<2x32xf32>
    %390 = vector.extract_strided_slice %375 {offsets = [0, 96], sizes = [2, 32], strides = [1, 1]} : vector<2x128xf32> to vector<2x32xf32>
    %391 = arith.negf %390 : vector<2x32xf32>
    %392 = math.exp %391 : vector<2x32xf32>
    %cst_142 = arith.constant 1.000000e+00 : f32
    %393 = vector.broadcast %cst_142 : f32 to vector<2x32xf32>
    %394 = arith.addf %393, %392 : vector<2x32xf32>
    %395 = arith.divf %393, %394 : vector<2x32xf32>
    %396 = arith.mulf %387, %369 : vector<2x32xf32>
    %397 = arith.mulf %381, %389 : vector<2x32xf32>
    %398 = arith.addf %396, %397 : vector<2x32xf32>
    %399 = math.tanh %398 : vector<2x32xf32>
    %400 = arith.mulf %395, %399 : vector<2x32xf32>
    %401 = vector.extract_strided_slice %251 {offsets = [10, 0], sizes = [2, 128], strides = [1, 1]} : vector<16x128xf32> to vector<2x128xf32>
    %c0_143 = arith.constant 0 : index
    %c0_144 = arith.constant 0 : index
    %402 = vector.load %arg6[%c0_143, %c0_144] : memref<32x128xf32, #tpu.memory_space<vmem>>, vector<32x128xf32>
    %cst_145 = arith.constant dense<0.000000e+00> : vector<2x128xf32>
    %403 = tpu.matmul %400, %402, %cst_145 {dimension_numbers = #tpu.dot_dimension_numbers<[1], [0], [0], [1], [0, 0, 1, 1], [], []>} : vector<2x32xf32>, vector<32x128xf32>, vector<2x128xf32> -> vector<2x128xf32>
    %404 = arith.addf %401, %403 : vector<2x128xf32>
    %405 = vector.extract_strided_slice %404 {offsets = [0, 0], sizes = [2, 32], strides = [1, 1]} : vector<2x128xf32> to vector<2x32xf32>
    %406 = arith.negf %405 : vector<2x32xf32>
    %407 = math.exp %406 : vector<2x32xf32>
    %cst_146 = arith.constant 1.000000e+00 : f32
    %408 = vector.broadcast %cst_146 : f32 to vector<2x32xf32>
    %409 = arith.addf %408, %407 : vector<2x32xf32>
    %410 = arith.divf %408, %409 : vector<2x32xf32>
    %411 = vector.extract_strided_slice %404 {offsets = [0, 32], sizes = [2, 32], strides = [1, 1]} : vector<2x128xf32> to vector<2x32xf32>
    %412 = arith.negf %411 : vector<2x32xf32>
    %413 = math.exp %412 : vector<2x32xf32>
    %cst_147 = arith.constant 1.000000e+00 : f32
    %414 = vector.broadcast %cst_147 : f32 to vector<2x32xf32>
    %415 = arith.addf %414, %413 : vector<2x32xf32>
    %416 = arith.divf %414, %415 : vector<2x32xf32>
    %417 = vector.extract_strided_slice %404 {offsets = [0, 64], sizes = [2, 32], strides = [1, 1]} : vector<2x128xf32> to vector<2x32xf32>
    %418 = math.tanh %417 : vector<2x32xf32>
    %419 = vector.extract_strided_slice %404 {offsets = [0, 96], sizes = [2, 32], strides = [1, 1]} : vector<2x128xf32> to vector<2x32xf32>
    %420 = arith.negf %419 : vector<2x32xf32>
    %421 = math.exp %420 : vector<2x32xf32>
    %cst_148 = arith.constant 1.000000e+00 : f32
    %422 = vector.broadcast %cst_148 : f32 to vector<2x32xf32>
    %423 = arith.addf %422, %421 : vector<2x32xf32>
    %424 = arith.divf %422, %423 : vector<2x32xf32>
    %425 = arith.mulf %416, %398 : vector<2x32xf32>
    %426 = arith.mulf %410, %418 : vector<2x32xf32>
    %427 = arith.addf %425, %426 : vector<2x32xf32>
    %428 = math.tanh %427 : vector<2x32xf32>
    %429 = arith.mulf %424, %428 : vector<2x32xf32>
    %430 = vector.extract_strided_slice %251 {offsets = [12, 0], sizes = [2, 128], strides = [1, 1]} : vector<16x128xf32> to vector<2x128xf32>
    %c0_149 = arith.constant 0 : index
    %c0_150 = arith.constant 0 : index
    %431 = vector.load %arg6[%c0_149, %c0_150] : memref<32x128xf32, #tpu.memory_space<vmem>>, vector<32x128xf32>
    %cst_151 = arith.constant dense<0.000000e+00> : vector<2x128xf32>
    %432 = tpu.matmul %429, %431, %cst_151 {dimension_numbers = #tpu.dot_dimension_numbers<[1], [0], [0], [1], [0, 0, 1, 1], [], []>} : vector<2x32xf32>, vector<32x128xf32>, vector<2x128xf32> -> vector<2x128xf32>
    %433 = arith.addf %430, %432 : vector<2x128xf32>
    %434 = vector.extract_strided_slice %433 {offsets = [0, 0], sizes = [2, 32], strides = [1, 1]} : vector<2x128xf32> to vector<2x32xf32>
    %435 = arith.negf %434 : vector<2x32xf32>
    %436 = math.exp %435 : vector<2x32xf32>
    %cst_152 = arith.constant 1.000000e+00 : f32
    %437 = vector.broadcast %cst_152 : f32 to vector<2x32xf32>
    %438 = arith.addf %437, %436 : vector<2x32xf32>
    %439 = arith.divf %437, %438 : vector<2x32xf32>
    %440 = vector.extract_strided_slice %433 {offsets = [0, 32], sizes = [2, 32], strides = [1, 1]} : vector<2x128xf32> to vector<2x32xf32>
    %441 = arith.negf %440 : vector<2x32xf32>
    %442 = math.exp %441 : vector<2x32xf32>
    %cst_153 = arith.constant 1.000000e+00 : f32
    %443 = vector.broadcast %cst_153 : f32 to vector<2x32xf32>
    %444 = arith.addf %443, %442 : vector<2x32xf32>
    %445 = arith.divf %443, %444 : vector<2x32xf32>
    %446 = vector.extract_strided_slice %433 {offsets = [0, 64], sizes = [2, 32], strides = [1, 1]} : vector<2x128xf32> to vector<2x32xf32>
    %447 = math.tanh %446 : vector<2x32xf32>
    %448 = vector.extract_strided_slice %433 {offsets = [0, 96], sizes = [2, 32], strides = [1, 1]} : vector<2x128xf32> to vector<2x32xf32>
    %449 = arith.negf %448 : vector<2x32xf32>
    %450 = math.exp %449 : vector<2x32xf32>
    %cst_154 = arith.constant 1.000000e+00 : f32
    %451 = vector.broadcast %cst_154 : f32 to vector<2x32xf32>
    %452 = arith.addf %451, %450 : vector<2x32xf32>
    %453 = arith.divf %451, %452 : vector<2x32xf32>
    %454 = arith.mulf %445, %427 : vector<2x32xf32>
    %455 = arith.mulf %439, %447 : vector<2x32xf32>
    %456 = arith.addf %454, %455 : vector<2x32xf32>
    %457 = math.tanh %456 : vector<2x32xf32>
    %458 = arith.mulf %453, %457 : vector<2x32xf32>
    %459 = vector.extract_strided_slice %251 {offsets = [14, 0], sizes = [2, 128], strides = [1, 1]} : vector<16x128xf32> to vector<2x128xf32>
    %c0_155 = arith.constant 0 : index
    %c0_156 = arith.constant 0 : index
    %460 = vector.load %arg6[%c0_155, %c0_156] : memref<32x128xf32, #tpu.memory_space<vmem>>, vector<32x128xf32>
    %cst_157 = arith.constant dense<0.000000e+00> : vector<2x128xf32>
    %461 = tpu.matmul %458, %460, %cst_157 {dimension_numbers = #tpu.dot_dimension_numbers<[1], [0], [0], [1], [0, 0, 1, 1], [], []>} : vector<2x32xf32>, vector<32x128xf32>, vector<2x128xf32> -> vector<2x128xf32>
    %462 = arith.addf %459, %461 : vector<2x128xf32>
    %463 = vector.extract_strided_slice %462 {offsets = [0, 0], sizes = [2, 32], strides = [1, 1]} : vector<2x128xf32> to vector<2x32xf32>
    %464 = arith.negf %463 : vector<2x32xf32>
    %465 = math.exp %464 : vector<2x32xf32>
    %cst_158 = arith.constant 1.000000e+00 : f32
    %466 = vector.broadcast %cst_158 : f32 to vector<2x32xf32>
    %467 = arith.addf %466, %465 : vector<2x32xf32>
    %468 = arith.divf %466, %467 : vector<2x32xf32>
    %469 = vector.extract_strided_slice %462 {offsets = [0, 32], sizes = [2, 32], strides = [1, 1]} : vector<2x128xf32> to vector<2x32xf32>
    %470 = arith.negf %469 : vector<2x32xf32>
    %471 = math.exp %470 : vector<2x32xf32>
    %cst_159 = arith.constant 1.000000e+00 : f32
    %472 = vector.broadcast %cst_159 : f32 to vector<2x32xf32>
    %473 = arith.addf %472, %471 : vector<2x32xf32>
    %474 = arith.divf %472, %473 : vector<2x32xf32>
    %475 = vector.extract_strided_slice %462 {offsets = [0, 64], sizes = [2, 32], strides = [1, 1]} : vector<2x128xf32> to vector<2x32xf32>
    %476 = math.tanh %475 : vector<2x32xf32>
    %477 = vector.extract_strided_slice %462 {offsets = [0, 96], sizes = [2, 32], strides = [1, 1]} : vector<2x128xf32> to vector<2x32xf32>
    %478 = arith.negf %477 : vector<2x32xf32>
    %479 = math.exp %478 : vector<2x32xf32>
    %cst_160 = arith.constant 1.000000e+00 : f32
    %480 = vector.broadcast %cst_160 : f32 to vector<2x32xf32>
    %481 = arith.addf %480, %479 : vector<2x32xf32>
    %482 = arith.divf %480, %481 : vector<2x32xf32>
    %483 = arith.mulf %474, %456 : vector<2x32xf32>
    %484 = arith.mulf %468, %476 : vector<2x32xf32>
    %485 = arith.addf %483, %484 : vector<2x32xf32>
    %486 = math.tanh %485 : vector<2x32xf32>
    %487 = arith.mulf %482, %486 : vector<2x32xf32>
    %c0_161 = arith.constant 0 : index
    %c0_162 = arith.constant 0 : index
    %488 = vector.load %arg10[%c0_161, %c0_162] : memref<32x16xf32, #tpu.memory_space<vmem>>, vector<32x16xf32>
    %cst_163 = arith.constant dense<0.000000e+00> : vector<2x16xf32>
    %489 = tpu.matmul %487, %488, %cst_163 {dimension_numbers = #tpu.dot_dimension_numbers<[1], [0], [0], [1], [0, 0, 1, 1], [], []>} : vector<2x32xf32>, vector<32x16xf32>, vector<2x16xf32> -> vector<2x16xf32>
    %c0_164 = arith.constant 0 : index
    %c0_165 = arith.constant 0 : index
    %490 = vector.load %arg11[%c0_164, %c0_165] : memref<1x16xf32, #tpu.memory_space<vmem>>, vector<1x16xf32>
    %491 = vector.broadcast %490 : vector<1x16xf32> to vector<2x16xf32>
    %492 = arith.addf %489, %491 : vector<2x16xf32>
    %cst_166 = arith.constant dense<0xFF800000> : vector<2xf32>
    %493 = vector.multi_reduction <maximumf>, %492, %cst_166 [1] : vector<2x16xf32> to vector<2xf32>
    %494 = vector.shape_cast %493 : vector<2xf32> to vector<2x1xf32>
    %495 = vector.broadcast %494 : vector<2x1xf32> to vector<2x16xf32>
    %496 = arith.subf %492, %495 : vector<2x16xf32>
    %497 = math.exp %496 : vector<2x16xf32>
    %cst_167 = arith.constant dense<0.000000e+00> : vector<2xf32>
    %498 = vector.multi_reduction <add>, %497, %cst_167 [1] : vector<2x16xf32> to vector<2xf32>
    %499 = vector.shape_cast %498 : vector<2xf32> to vector<2x1xf32>
    %500 = vector.broadcast %499 : vector<2x1xf32> to vector<2x16xf32>
    %501 = arith.divf %497, %500 : vector<2x16xf32>
    %c0_168 = arith.constant 0 : index
    %c0_169 = arith.constant 0 : index
    %502 = vector.load %arg12[%c0_168, %c0_169] : memref<2x16xf32, #tpu.memory_space<vmem>>, vector<2x16xf32>
    tpu.vector_store %arg12[%c0_168, %c0_169], %501 {strides = array<i32>} : memref<2x16xf32, #tpu.memory_space<vmem>>, vector<2x16xf32>,
    return
  }
  func.func @transform_0(%arg0: i32) -> (i32, i32, i32) {
    %c0_i32 = arith.constant 0 : i32
    %c0_i32_0 = arith.constant 0 : i32
    %c0_i32_1 = arith.constant 0 : i32
    %c0_i32_2 = arith.constant 0 : i32
    return %c0_i32, %c0_i32_0, %c0_i32_1 : i32, i32, i32
  }
  func.func @transform_1(%arg0: i32) -> i32 {
    %c0_i32 = arith.constant 0 : i32
    %c0_i32_0 = arith.constant 0 : i32
    return %c0_i32 : i32
  }
  func.func @transform_2(%arg0: i32) -> i32 {
    %c0_i32 = arith.constant 0 : i32
    %c0_i32_0 = arith.constant 0 : i32
    return %c0_i32 : i32
  }
  func.func @transform_3(%arg0: i32) -> (i32, i32, i32) {
    %c0_i32 = arith.constant 0 : i32
    %c0_i32_0 = arith.constant 0 : i32
    %c0_i32_1 = arith.constant 0 : i32
    %c0_i32_2 = arith.constant 0 : i32
    return %c0_i32, %c0_i32_0, %c0_i32_1 : i32, i32, i32
  }
  func.func @transform_4(%arg0: i32) -> (i32, i32) {
    %c0_i32 = arith.constant 0 : i32
    %c0_i32_0 = arith.constant 0 : i32
    %c0_i32_1 = arith.constant 0 : i32
    return %c0_i32, %c0_i32_0 : i32, i32
  }
  func.func @transform_5(%arg0: i32) -> (i32, i32) {
    %c0_i32 = arith.constant 0 : i32
    %c0_i32_0 = arith.constant 0 : i32
    %c0_i32_1 = arith.constant 0 : i32
    return %c0_i32, %c0_i32_0 : i32, i32
  }
  func.func @transform_6(%arg0: i32) -> (i32, i32) {
    %c0_i32 = arith.constant 0 : i32
    %c0_i32_0 = arith.constant 0 : i32
    %c0_i32_1 = arith.constant 0 : i32
    return %c0_i32, %c0_i32_0 : i32, i32
  }
  func.func @transform_7(%arg0: i32) -> (i32, i32, i32) {
    %c0_i32 = arith.constant 0 : i32
    %c0_i32_0 = arith.constant 0 : i32
    %c0_i32_1 = arith.constant 0 : i32
    %c0_i32_2 = arith.constant 0 : i32
    return %c0_i32, %c0_i32_0, %c0_i32_1 : i32, i32, i32
  }
  func.func @transform_8(%arg0: i32) -> (i32, i32, i32) {
    %c0_i32 = arith.constant 0 : i32
    %c0_i32_0 = arith.constant 0 : i32
    %c0_i32_1 = arith.constant 0 : i32
    %c0_i32_2 = arith.constant 0 : i32
    return %c0_i32, %c0_i32_0, %c0_i32_1 : i32, i32, i32
  }
  func.func @transform_9(%arg0: i32) -> (i32, i32) {
    %c0_i32 = arith.constant 0 : i32
    %c0_i32_0 = arith.constant 0 : i32
    %c0_i32_1 = arith.constant 0 : i32
    return %c0_i32, %c0_i32_0 : i32, i32
  }
  func.func @transform_10(%arg0: i32) -> (i32, i32) {
    %c0_i32 = arith.constant 0 : i32
    %c0_i32_0 = arith.constant 0 : i32
    %c0_i32_1 = arith.constant 0 : i32
    return %c0_i32, %c0_i32_0 : i32, i32
  }
  func.func @transform_11(%arg0: i32) -> (i32, i32) {
    %c0_i32 = arith.constant 0 : i32
    %c0_i32_0 = arith.constant 0 : i32
    %c0_i32_1 = arith.constant 0 : i32
    return %c0_i32, %c0_i32_0 : i32, i32
  }
}

</mosaic_0001>

<llo_original>
// kernel: squeeze.9
$region0: #{squeeze.9}
  %s0 = inlined_call_operand.vmem [shape: f32[8,2,1,16,16], index: 0, kind: input, shape index: {}]
  %s1 = inlined_call_operand.vmem [shape: f32[1,16,256], index: 1, kind: output, shape index: {}]
  %v2 = vld [vmem:[%s0] ss:$8 sm:$0xf]
  %v3 = vld [vmem:[%s0] ss:$8 sm:$0xf0]
  %vm4 = vcmask 1047556
  %v5 = vsel %vm4, %v3, %v2
  %vm6 = vcmask 130048
  %7 = vst.msk [vmem:[%s1] ss:$8 sm:$0x3] %vm6, %v5
  %s8 = scalar_lea.vmem %s1, 4294967281
  %9 = vst.msk [vmem:[%s8] ss:$8 sm:$0xc] %vm6, %v5
  %s10 = scalar_lea.vmem %s1, 4294967266
  %11 = vst.msk [vmem:[%s10] ss:$8 sm:$0x30] %vm6, %v5
  %s12 = scalar_lea.vmem %s1, 4294967251
  %13 = vst.msk [vmem:[%s12] ss:$8 sm:$0xc0] %vm6, %v5
  %s14 = scalar_lea.vmem %s0, 64
  %v15 = vld [vmem:[%s14] ss:$8 sm:$0xf]
  %s16 = scalar_lea.vmem %s0, 64
  %v17 = vld [vmem:[%s16] ss:$8 sm:$0xf0]
  %vm18 = vcmask 1047556
  %v19 = vsel %vm18, %v17, %v15
  %vm20 = vcmask 130048
  %s21 = scalar_lea.vmem %s1, 4
  %22 = vst.msk [vmem:[%s21] ss:$8 sm:$0x3] %vm20, %v19
  %s23 = scalar_lea.vmem %s1, 4294967285
  %24 = vst.msk [vmem:[%s23] ss:$8 sm:$0xc] %vm20, %v19
  %s25 = scalar_lea.vmem %s1, 4294967270
  %26 = vst.msk [vmem:[%s25] ss:$8 sm:$0x30] %vm20, %v19
  %s27 = scalar_lea.vmem %s1, 4294967255
  %28 = vst.msk [vmem:[%s27] ss:$8 sm:$0xc0] %vm20, %v19
  %s29 = scalar_lea.vmem %s0, 128
  %v30 = vld [vmem:[%s29] ss:$8 sm:$0xf]
  %s31 = scalar_lea.vmem %s0, 128
  %v32 = vld [vmem:[%s31] ss:$8 sm:$0xf0]
  %vm33 = vcmask 1047556
  %v34 = vsel %vm33, %v32, %v30
  %vm35 = vcmask 130048
  %s36 = scalar_lea.vmem %s1, 16
  %37 = vst.msk [vmem:[%s36] ss:$8 sm:$0x3] %vm35, %v34
  %s38 = scalar_lea.vmem %s1, 1
  %39 = vst.msk [vmem:[%s38] ss:$8 sm:$0xc] %vm35, %v34
  %s40 = scalar_lea.vmem %s1, 4294967282
  %41 = vst.msk [vmem:[%s40] ss:$8 sm:$0x30] %vm35, %v34
  %s42 = scalar_lea.vmem %s1, 4294967267
  %43 = vst.msk [vmem:[%s42] ss:$8 sm:$0xc0] %vm35, %v34
  %s44 = scalar_lea.vmem %s0, 192
  %v45 = vld [vmem:[%s44] ss:$8 sm:$0xf]
  %s46 = scalar_lea.vmem %s0, 192
  %v47 = vld [vmem:[%s46] ss:$8 sm:$0xf0]
  %vm48 = vcmask 1047556
  %v49 = vsel %vm48, %v47, %v45
  %vm50 = vcmask 130048
  %s51 = scalar_lea.vmem %s1, 20
  %52 = vst.msk [vmem:[%s51] ss:$8 sm:$0x3] %vm50, %v49
  %s53 = scalar_lea.vmem %s1, 5
  %54 = vst.msk [vmem:[%s53] ss:$8 sm:$0xc] %vm50, %v49
  %s55 = scalar_lea.vmem %s1, 4294967286
  %56 = vst.msk [vmem:[%s55] ss:$8 sm:$0x30] %vm50, %v49
  %s57 = scalar_lea.vmem %s1, 4294967271
  %58 = vst.msk [vmem:[%s57] ss:$8 sm:$0xc0] %vm50, %v49
  %s59 = scalar_lea.vmem %s0, 7
  %s60 = smov 3
  %v61 = vld [vmem:[%s59] ss:$16 sm:%s60]
  %s62 = scalar_lea.vmem %s0, 7
  %s63 = smov 12
  %v64 = vld [vmem:[%s62] ss:$16 sm:%s63]
  %vm65 = vcmask 1043458
  %v66 = vsel %vm65, %v64, %v61
  %s67 = scalar_lea.vmem %s0, 7
  %s68 = smov 48
  %v69 = vld [vmem:[%s67] ss:$16 sm:%s68]
  %vm70 = vcmask 1045508
  %v71 = vsel %vm70, %v69, %v66
  %s72 = scalar_lea.vmem %s0, 7
  %s73 = smov 192
  %v74 = vld [vmem:[%s72] ss:$16 sm:%s73]
  %vm75 = vcmask 1047558
  %v76 = vsel %vm75, %v74, %v71
  %77 = vrot.lane.b32.xlu0 %v76, 112
  %v78 = vpop.permute.xlu0 %77
  %vm79 = vcmask 1048448
  %80 = vst.msk [vmem:[%s1] sm:$0xff] %vm79, %v78
  %s81 = scalar_lea.vmem %s0, 15
  %s82 = smov 3
  %v83 = vld [vmem:[%s81] ss:$16 sm:%s82]
  %s84 = scalar_lea.vmem %s0, 15
  %s85 = smov 12
  %v86 = vld [vmem:[%s84] ss:$16 sm:%s85]
  %vm87 = vcmask 1043458
  %v88 = vsel %vm87, %v86, %v83
  %s89 = scalar_lea.vmem %s0, 15
  %s90 = smov 48
  %v91 = vld [vmem:[%s89] ss:$16 sm:%s90]
  %vm92 = vcmask 1045508
  %v93 = vsel %vm92, %v91, %v88
  %s94 = scalar_lea.vmem %s0, 15
  %s95 = smov 192
  %v96 = vld [vmem:[%s94] ss:$16 sm:%s95]
  %vm97 = vcmask 1047558
  %v98 = vsel %vm97, %v96, %v93
  %99 = vrot.lane.b32.xlu0 %v98, 112
  %v100 = vpop.permute.xlu0 %99
  %vm101 = vcmask 1048448
  %s102 = scalar_lea.vmem %s1, 8
  %103 = vst.msk [vmem:[%s102] sm:$0xff] %vm101, %v100
  %s104 = scalar_lea.vmem %s0, 135
  %s105 = smov 3
  %v106 = vld [vmem:[%s104] ss:$16 sm:%s105]
  %s107 = scalar_lea.vmem %s0, 135
  %s108 = smov 12
  %v109 = vld [vmem:[%s107] ss:$16 sm:%s108]
  %vm110 = vcmask 1043458
  %v111 = vsel %vm110, %v109, %v106
  %s112 = scalar_lea.vmem %s0, 135
  %s113 = smov 48
  %v114 = vld [vmem:[%s112] ss:$16 sm:%s113]
  %vm115 = vcmask 1045508
  %v116 = vsel %vm115, %v114, %v111
  %s117 = scalar_lea.vmem %s0, 135
  %s118 = smov 192
  %v119 = vld [vmem:[%s117] ss:$16 sm:%s118]
  %vm120 = vcmask 1047558
  %v121 = vsel %vm120, %v119, %v116
  %122 = vrot.lane.b32.xlu0 %v121, 112
  %v123 = vpop.permute.xlu0 %122
  %vm124 = vcmask 1048448
  %s125 = scalar_lea.vmem %s1, 16
  %126 = vst.msk [vmem:[%s125] sm:$0xff] %vm124, %v123
  %s127 = scalar_lea.vmem %s0, 143
  %s128 = smov 3
  %v129 = vld [vmem:[%s127] ss:$16 sm:%s128]
  %s130 = scalar_lea.vmem %s0, 143
  %s131 = smov 12
  %v132 = vld [vmem:[%s130] ss:$16 sm:%s131]
  %vm133 = vcmask 1043458
  %v134 = vsel %vm133, %v132, %v129
  %s135 = scalar_lea.vmem %s0, 143
  %s136 = smov 48
  %v137 = vld [vmem:[%s135] ss:$16 sm:%s136]
  %vm138 = vcmask 1045508
  %v139 = vsel %vm138, %v137, %v134
  %s140 = scalar_lea.vmem %s0, 143
  %s141 = smov 192
  %v142 = vld [vmem:[%s140] ss:$16 sm:%s141]
  %vm143 = vcmask 1047558
  %v144 = vsel %vm143, %v142, %v139
  %145 = vrot.lane.b32.xlu0 %v144, 112
  %v146 = vpop.permute.xlu0 %145
  %vm147 = vcmask 1048448
  %s148 = scalar_lea.vmem %s1, 24
  %149 = vst.msk [vmem:[%s148] sm:$0xff] %vm147, %v146
  %s150 = scalar_lea.vmem %s0, 6
  %s151 = smov 3
  %v152 = vld [vmem:[%s150] ss:$16 sm:%s151]
  %s153 = scalar_lea.vmem %s0, 6
  %s154 = smov 12
  %v155 = vld [vmem:[%s153] ss:$16 sm:%s154]
  %vm156 = vcmask 1043458
  %v157 = vsel %vm156, %v155, %v152
  %s158 = scalar_lea.vmem %s0, 6
  %s159 = smov 48
  %v160 = vld [vmem:[%s158] ss:$16 sm:%s159]
  %vm161 = vcmask 1045508
  %v162 = vsel %vm161, %v160, %v157
  %s163 = scalar_lea.vmem %s0, 6
  %s164 = smov 192
  %v165 = vld [vmem:[%s163] ss:$16 sm:%s164]
  %vm166 = vcmask 1047558
  %v167 = vsel %vm166, %v165, %v162
  %168 = vrot.lane.b32.xlu0 %v167, 96
  %v169 = vpop.permute.xlu0 %168
  %vm170 = vcmask 917248
  %171 = vst.msk [vmem:[%s1] sm:$0xff] %vm170, %v169
  %s172 = scalar_lea.vmem %s0, 14
  %s173 = smov 3
  %v174 = vld [vmem:[%s172] ss:$16 sm:%s173]
  %s175 = scalar_lea.vmem %s0, 14
  %s176 = smov 12
  %v177 = vld [vmem:[%s175] ss:$16 sm:%s176]
  %vm178 = vcmask 1043458
  %v179 = vsel %vm178, %v177, %v174
  %s180 = scalar_lea.vmem %s0, 14
  %s181 = smov 48
  %v182 = vld [vmem:[%s180] ss:$16 sm:%s181]
  %vm183 = vcmask 1045508
  %v184 = vsel %vm183, %v182, %v179
  %s185 = scalar_lea.vmem %s0, 14
  %s186 = smov 192
  %v187 = vld [vmem:[%s185] ss:$16 sm:%s186]
  %vm188 = vcmask 1047558
  %v189 = vsel %vm188, %v187, %v184
  %190 = vrot.lane.b32.xlu0 %v189, 96
  %v191 = vpop.permute.xlu0 %190
  %vm192 = vcmask 917248
  %s193 = scalar_lea.vmem %s1, 8
  %194 = vst.msk [vmem:[%s193] sm:$0xff] %vm192, %v191
  %s195 = scalar_lea.vmem %s0, 134
  %s196 = smov 3
  %v197 = vld [vmem:[%s195] ss:$16 sm:%s196]
  %s198 = scalar_lea.vmem %s0, 134
  %s199 = smov 12
  %v200 = vld [vmem:[%s198] ss:$16 sm:%s199]
  %vm201 = vcmask 1043458
  %v202 = vsel %vm201, %v200, %v197
  %s203 = scalar_lea.vmem %s0, 134
  %s204 = smov 48
  %v205 = vld [vmem:[%s203] ss:$16 sm:%s204]
  %vm206 = vcmask 1045508
  %v207 = vsel %vm206, %v205, %v202
  %s208 = scalar_lea.vmem %s0, 134
  %s209 = smov 192
  %v210 = vld [vmem:[%s208] ss:$16 sm:%s209]
  %vm211 = vcmask 1047558
  %v212 = vsel %vm211, %v210, %v207
  %213 = vrot.lane.b32.xlu0 %v212, 96
  %v214 = vpop.permute.xlu0 %213
  %vm215 = vcmask 917248
  %s216 = scalar_lea.vmem %s1, 16
  %217 = vst.msk [vmem:[%s216] sm:$0xff] %vm215, %v214
  %s218 = scalar_lea.vmem %s0, 142
  %s219 = smov 3
  %v220 = vld [vmem:[%s218] ss:$16 sm:%s219]
  %s221 = scalar_lea.vmem %s0, 142
  %s222 = smov 12
  %v223 = vld [vmem:[%s221] ss:$16 sm:%s222]
  %vm224 = vcmask 1043458
  %v225 = vsel %vm224, %v223, %v220
  %s226 = scalar_lea.vmem %s0, 142
  %s227 = smov 48
  %v228 = vld [vmem:[%s226] ss:$16 sm:%s227]
  %vm229 = vcmask 1045508
  %v230 = vsel %vm229, %v228, %v225
  %s231 = scalar_lea.vmem %s0, 142
  %s232 = smov 192
  %v233 = vld [vmem:[%s231] ss:$16 sm:%s232]
  %vm234 = vcmask 1047558
  %v235 = vsel %vm234, %v233, %v230
  %236 = vrot.lane.b32.xlu0 %v235, 96
  %v237 = vpop.permute.xlu0 %236
  %vm238 = vcmask 917248
  %s239 = scalar_lea.vmem %s1, 24
  %240 = vst.msk [vmem:[%s239] sm:$0xff] %vm238, %v237
  %s241 = scalar_lea.vmem %s0, 5
  %s242 = smov 3
  %v243 = vld [vmem:[%s241] ss:$16 sm:%s242]
  %s244 = scalar_lea.vmem %s0, 5
  %s245 = smov 12
  %v246 = vld [vmem:[%s244] ss:$16 sm:%s245]
  %vm247 = vcmask 1043458
  %v248 = vsel %vm247, %v246, %v243
  %s249 = scalar_lea.vmem %s0, 5
  %s250 = smov 48
  %v251 = vld [vmem:[%s249] ss:$16 sm:%s250]
  %vm252 = vcmask 1045508
  %v253 = vsel %vm252, %v251, %v248
  %s254 = scalar_lea.vmem %s0, 5
  %s255 = smov 192
  %v256 = vld [vmem:[%s254] ss:$16 sm:%s255]
  %vm257 = vcmask 1047558
  %v258 = vsel %vm257, %v256, %v253
  %259 = vrot.lane.b32.xlu0 %v258, 80
  %v260 = vpop.permute.xlu0 %259
  %vm261 = vcmask 786048
  %262 = vst.msk [vmem:[%s1] sm:$0xff] %vm261, %v260
  %s263 = scalar_lea.vmem %s0, 13
  %s264 = smov 3
  %v265 = vld [vmem:[%s263] ss:$16 sm:%s264]
  %s266 = scalar_lea.vmem %s0, 13
  %s267 = smov 12
  %v268 = vld [vmem:[%s266] ss:$16 sm:%s267]
  %vm269 = vcmask 1043458
  %v270 = vsel %vm269, %v268, %v265
  %s271 = scalar_lea.vmem %s0, 13
  %s272 = smov 48
  %v273 = vld [vmem:[%s271] ss:$16 sm:%s272]
  %vm274 = vcmask 1045508
  %v275 = vsel %vm274, %v273, %v270
  %s276 = scalar_lea.vmem %s0, 13
  %s277 = smov 192
  %v278 = vld [vmem:[%s276] ss:$16 sm:%s277]
  %vm279 = vcmask 1047558
  %v280 = vsel %vm279, %v278, %v275
  %281 = vrot.lane.b32.xlu0 %v280, 80
  %v282 = vpop.permute.xlu0 %281
  %vm283 = vcmask 786048
  %s284 = scalar_lea.vmem %s1, 8
  %285 = vst.msk [vmem:[%s284] sm:$0xff] %vm283, %v282
  %s286 = scalar_lea.vmem %s0, 133
  %s287 = smov 3
  %v288 = vld [vmem:[%s286] ss:$16 sm:%s287]
  %s289 = scalar_lea.vmem %s0, 133
  %s290 = smov 12
  %v291 = vld [vmem:[%s289] ss:$16 sm:%s290]
  %vm292 = vcmask 1043458
  %v293 = vsel %vm292, %v291, %v288
  %s294 = scalar_lea.vmem %s0, 133
  %s295 = smov 48
  %v296 = vld [vmem:[%s294] ss:$16 sm:%s295]
  %vm297 = vcmask 1045508
  %v298 = vsel %vm297, %v296, %v293
  %s299 = scalar_lea.vmem %s0, 133
  %s300 = smov 192
  %v301 = vld [vmem:[%s299] ss:$16 sm:%s300]
  %vm302 = vcmask 1047558
  %v303 = vsel %vm302, %v301, %v298
  %304 = vrot.lane.b32.xlu0 %v303, 80
  %v305 = vpop.permute.xlu0 %304
  %vm306 = vcmask 786048
  %s307 = scalar_lea.vmem %s1, 16
  %308 = vst.msk [vmem:[%s307] sm:$0xff] %vm306, %v305
  %s309 = scalar_lea.vmem %s0, 141
  %s310 = smov 3
  %v311 = vld [vmem:[%s309] ss:$16 sm:%s310]
  %s312 = scalar_lea.vmem %s0, 141
  %s313 = smov 12
  %v314 = vld [vmem:[%s312] ss:$16 sm:%s313]
  %vm315 = vcmask 1043458
  %v316 = vsel %vm315, %v314, %v311
  %s317 = scalar_lea.vmem %s0, 141
  %s318 = smov 48
  %v319 = vld [vmem:[%s317] ss:$16 sm:%s318]
  %vm320 = vcmask 1045508
  %v321 = vsel %vm320, %v319, %v316
  %s322 = scalar_lea.vmem %s0, 141
  %s323 = smov 192
  %v324 = vld [vmem:[%s322] ss:$16 sm:%s323]
  %vm325 = vcmask 1047558
  %v326 = vsel %vm325, %v324, %v321
  %327 = vrot.lane.b32.xlu0 %v326, 80
  %v328 = vpop.permute.xlu0 %327
  %vm329 = vcmask 786048
  %s330 = scalar_lea.vmem %s1, 24
  %331 = vst.msk [vmem:[%s330] sm:$0xff] %vm329, %v328
  %s332 = scalar_lea.vmem %s0, 4
  %s333 = smov 3
  %v334 = vld [vmem:[%s332] ss:$16 sm:%s333]
  %s335 = scalar_lea.vmem %s0, 4
  %s336 = smov 12
  %v337 = vld [vmem:[%s335] ss:$16 sm:%s336]
  %vm338 = vcmask 1043458
  %v339 = vsel %vm338, %v337, %v334
  %s340 = scalar_lea.vmem %s0, 4
  %s341 = smov 48
  %v342 = vld [vmem:[%s340] ss:$16 sm:%s341]
  %vm343 = vcmask 1045508
  %v344 = vsel %vm343, %v342, %v339
  %s345 = scalar_lea.vmem %s0, 4
  %s346 = smov 192
  %v347 = vld [vmem:[%s345] ss:$16 sm:%s346]
  %vm348 = vcmask 1047558
  %v349 = vsel %vm348, %v347, %v344
  %350 = vrot.lane.b32.xlu0 %v349, 64
  %v351 = vpop.permute.xlu0 %350
  %vm352 = vcmask 654848
  %353 = vst.msk [vmem:[%s1] sm:$0xff] %vm352, %v351
  %s354 = scalar_lea.vmem %s0, 12
  %s355 = smov 3
  %v356 = vld [vmem:[%s354] ss:$16 sm:%s355]
  %s357 = scalar_lea.vmem %s0, 12
  %s358 = smov 12
  %v359 = vld [vmem:[%s357] ss:$16 sm:%s358]
  %vm360 = vcmask 1043458
  %v361 = vsel %vm360, %v359, %v356
  %s362 = scalar_lea.vmem %s0, 12
  %s363 = smov 48
  %v364 = vld [vmem:[%s362] ss:$16 sm:%s363]
  %vm365 = vcmask 1045508
  %v366 = vsel %vm365, %v364, %v361
  %s367 = scalar_lea.vmem %s0, 12
  %s368 = smov 192
  %v369 = vld [vmem:[%s367] ss:$16 sm:%s368]
  %vm370 = vcmask 1047558
  %v371 = vsel %vm370, %v369, %v366
  %372 = vrot.lane.b32.xlu0 %v371, 64
  %v373 = vpop.permute.xlu0 %372
  %vm374 = vcmask 654848
  %s375 = scalar_lea.vmem %s1, 8
  %376 = vst.msk [vmem:[%s375] sm:$0xff] %vm374, %v373
  %s377 = scalar_lea.vmem %s0, 132
  %s378 = smov 3
  %v379 = vld [vmem:[%s377] ss:$16 sm:%s378]
  %s380 = scalar_lea.vmem %s0, 132
  %s381 = smov 12
  %v382 = vld [vmem:[%s380] ss:$16 sm:%s381]
  %vm383 = vcmask 1043458
  %v384 = vsel %vm383, %v382, %v379
  %s385 = scalar_lea.vmem %s0, 132
  %s386 = smov 48
  %v387 = vld [vmem:[%s385] ss:$16 sm:%s386]
  %vm388 = vcmask 1045508
  %v389 = vsel %vm388, %v387, %v384
  %s390 = scalar_lea.vmem %s0, 132
  %s391 = smov 192
  %v392 = vld [vmem:[%s390] ss:$16 sm:%s391]
  %vm393 = vcmask 1047558
  %v394 = vsel %vm393, %v392, %v389
  %395 = vrot.lane.b32.xlu0 %v394, 64
  %v396 = vpop.permute.xlu0 %395
  %vm397 = vcmask 654848
  %s398 = scalar_lea.vmem %s1, 16
  %399 = vst.msk [vmem:[%s398] sm:$0xff] %vm397, %v396
  %s400 = scalar_lea.vmem %s0, 140
  %s401 = smov 3
  %v402 = vld [vmem:[%s400] ss:$16 sm:%s401]
  %s403 = scalar_lea.vmem %s0, 140
  %s404 = smov 12
  %v405 = vld [vmem:[%s403] ss:$16 sm:%s404]
  %vm406 = vcmask 1043458
  %v407 = vsel %vm406, %v405, %v402
  %s408 = scalar_lea.vmem %s0, 140
  %s409 = smov 48
  %v410 = vld [vmem:[%s408] ss:$16 sm:%s409]
  %vm411 = vcmask 1045508
  %v412 = vsel %vm411, %v410, %v407
  %s413 = scalar_lea.vmem %s0, 140
  %s414 = smov 192
  %v415 = vld [vmem:[%s413] ss:$16 sm:%s414]
  %vm416 = vcmask 1047558
  %v417 = vsel %vm416, %v415, %v412
  %418 = vrot.lane.b32.xlu0 %v417, 64
  %v419 = vpop.permute.xlu0 %418
  %vm420 = vcmask 654848
  %s421 = scalar_lea.vmem %s1, 24
  %422 = vst.msk [vmem:[%s421] sm:$0xff] %vm420, %v419
  %s423 = scalar_lea.vmem %s0, 3
  %s424 = smov 3
  %v425 = vld [vmem:[%s423] ss:$16 sm:%s424]
  %s426 = scalar_lea.vmem %s0, 3
  %s427 = smov 12
  %v428 = vld [vmem:[%s426] ss:$16 sm:%s427]
  %vm429 = vcmask 1043458
  %v430 = vsel %vm429, %v428, %v425
  %s431 = scalar_lea.vmem %s0, 3
  %s432 = smov 48
  %v433 = vld [vmem:[%s431] ss:$16 sm:%s432]
  %vm434 = vcmask 1045508
  %v435 = vsel %vm434, %v433, %v430
  %s436 = scalar_lea.vmem %s0, 3
  %s437 = smov 192
  %v438 = vld [vmem:[%s436] ss:$16 sm:%s437]
  %vm439 = vcmask 1047558
  %v440 = vsel %vm439, %v438, %v435
  %441 = vrot.lane.b32.xlu0 %v440, 48
  %v442 = vpop.permute.xlu0 %441
  %vm443 = vcmask 523648
  %444 = vst.msk [vmem:[%s1] sm:$0xff] %vm443, %v442
  %s445 = scalar_lea.vmem %s0, 11
  %s446 = smov 3
  %v447 = vld [vmem:[%s445] ss:$16 sm:%s446]
  %s448 = scalar_lea.vmem %s0, 11
  %s449 = smov 12
  %v450 = vld [vmem:[%s448] ss:$16 sm:%s449]
  %vm451 = vcmask 1043458
  %v452 = vsel %vm451, %v450, %v447
  %s453 = scalar_lea.vmem %s0, 11
  %s454 = smov 48
  %v455 = vld [vmem:[%s453] ss:$16 sm:%s454]
  %vm456 = vcmask 1045508
  %v457 = vsel %vm456, %v455, %v452
  %s458 = scalar_lea.vmem %s0, 11
  %s459 = smov 192
  %v460 = vld [vmem:[%s458] ss:$16 sm:%s459]
  %vm461 = vcmask 1047558
  %v462 = vsel %vm461, %v460, %v457
  %463 = vrot.lane.b32.xlu0 %v462, 48
  %v464 = vpop.permute.xlu0 %463
  %vm465 = vcmask 523648
  %s466 = scalar_lea.vmem %s1, 8
  %467 = vst.msk [vmem:[%s466] sm:$0xff] %vm465, %v464
  %s468 = scalar_lea.vmem %s0, 131
  %s469 = smov 3
  %v470 = vld [vmem:[%s468] ss:$16 sm:%s469]
  %s471 = scalar_lea.vmem %s0, 131
  %s472 = smov 12
  %v473 = vld [vmem:[%s471] ss:$16 sm:%s472]
  %vm474 = vcmask 1043458
  %v475 = vsel %vm474, %v473, %v470
  %s476 = scalar_lea.vmem %s0, 131
  %s477 = smov 48
  %v478 = vld [vmem:[%s476] ss:$16 sm:%s477]
  %vm479 = vcmask 1045508
  %v480 = vsel %vm479, %v478, %v475
  %s481 = scalar_lea.vmem %s0, 131
  %s482 = smov 192
  %v483 = vld [vmem:[%s481] ss:$16 sm:%s482]
  %vm484 = vcmask 1047558
  %v485 = vsel %vm484, %v483, %v480
  %486 = vrot.lane.b32.xlu0 %v485, 48
  %v487 = vpop.permute.xlu0 %486
  %vm488 = vcmask 523648
  %s489 = scalar_lea.vmem %s1, 16
  %490 = vst.msk [vmem:[%s489] sm:$0xff] %vm488, %v487
  %s491 = scalar_lea.vmem %s0, 139
  %s492 = smov 3
  %v493 = vld [vmem:[%s491] ss:$16 sm:%s492]
  %s494 = scalar_lea.vmem %s0, 139
  %s495 = smov 12
  %v496 = vld [vmem:[%s494] ss:$16 sm:%s495]
  %vm497 = vcmask 1043458
  %v498 = vsel %vm497, %v496, %v493
  %s499 = scalar_lea.vmem %s0, 139
  %s500 = smov 48
  %v501 = vld [vmem:[%s499] ss:$16 sm:%s500]
  %vm502 = vcmask 1045508
  %v503 = vsel %vm502, %v501, %v498
  %s504 = scalar_lea.vmem %s0, 139
  %s505 = smov 192
  %v506 = vld [vmem:[%s504] ss:$16 sm:%s505]
  %vm507 = vcmask 1047558
  %v508 = vsel %vm507, %v506, %v503
  %509 = vrot.lane.b32.xlu0 %v508, 48
  %v510 = vpop.permute.xlu0 %509
  %vm511 = vcmask 523648
  %s512 = scalar_lea.vmem %s1, 24
  %513 = vst.msk [vmem:[%s512] sm:$0xff] %vm511, %v510
  %s514 = scalar_lea.vmem %s0, 2
  %s515 = smov 3
  %v516 = vld [vmem:[%s514] ss:$16 sm:%s515]
  %s517 = scalar_lea.vmem %s0, 2
  %s518 = smov 12
  %v519 = vld [vmem:[%s517] ss:$16 sm:%s518]
  %vm520 = vcmask 1043458
  %v521 = vsel %vm520, %v519, %v516
  %s522 = scalar_lea.vmem %s0, 2
  %s523 = smov 48
  %v524 = vld [vmem:[%s522] ss:$16 sm:%s523]
  %vm525 = vcmask 1045508
  %v526 = vsel %vm525, %v524, %v521
  %s527 = scalar_lea.vmem %s0, 2
  %s528 = smov 192
  %v529 = vld [vmem:[%s527] ss:$16 sm:%s528]
  %vm530 = vcmask 1047558
  %v531 = vsel %vm530, %v529, %v526
  %532 = vrot.lane.b32.xlu0 %v531, 32
  %v533 = vpop.permute.xlu0 %532
  %vm534 = vcmask 392448
  %535 = vst.msk [vmem:[%s1] sm:$0xff] %vm534, %v533
  %s536 = scalar_lea.vmem %s0, 10
  %s537 = smov 3
  %v538 = vld [vmem:[%s536] ss:$16 sm:%s537]
  %s539 = scalar_lea.vmem %s0, 10
  %s540 = smov 12
  %v541 = vld [vmem:[%s539] ss:$16 sm:%s540]
  %vm542 = vcmask 1043458
  %v543 = vsel %vm542, %v541, %v538
  %s544 = scalar_lea.vmem %s0, 10
  %s545 = smov 48
  %v546 = vld [vmem:[%s544] ss:$16 sm:%s545]
  %vm547 = vcmask 1045508
  %v548 = vsel %vm547, %v546, %v543
  %s549 = scalar_lea.vmem %s0, 10
  %s550 = smov 192
  %v551 = vld [vmem:[%s549] ss:$16 sm:%s550]
  %vm552 = vcmask 1047558
  %v553 = vsel %vm552, %v551, %v548
  %554 = vrot.lane.b32.xlu0 %v553, 32
  %v555 = vpop.permute.xlu0 %554
  %vm556 = vcmask 392448
  %s557 = scalar_lea.vmem %s1, 8
  %558 = vst.msk [vmem:[%s557] sm:$0xff] %vm556, %v555
  %s559 = scalar_lea.vmem %s0, 130
  %s560 = smov 3
  %v561 = vld [vmem:[%s559] ss:$16 sm:%s560]
  %s562 = scalar_lea.vmem %s0, 130
  %s563 = smov 12
  %v564 = vld [vmem:[%s562] ss:$16 sm:%s563]
  %vm565 = vcmask 1043458
  %v566 = vsel %vm565, %v564, %v561
  %s567 = scalar_lea.vmem %s0, 130
  %s568 = smov 48
  %v569 = vld [vmem:[%s567] ss:$16 sm:%s568]
  %vm570 = vcmask 1045508
  %v571 = vsel %vm570, %v569, %v566
  %s572 = scalar_lea.vmem %s0, 130
  %s573 = smov 192
  %v574 = vld [vmem:[%s572] ss:$16 sm:%s573]
  %vm575 = vcmask 1047558
  %v576 = vsel %vm575, %v574, %v571
  %577 = vrot.lane.b32.xlu0 %v576, 32
  %v578 = vpop.permute.xlu0 %577
  %vm579 = vcmask 392448
  %s580 = scalar_lea.vmem %s1, 16
  %581 = vst.msk [vmem:[%s580] sm:$0xff] %vm579, %v578
  %s582 = scalar_lea.vmem %s0, 138
  %s583 = smov 3
  %v584 = vld [vmem:[%s582] ss:$16 sm:%s583]
  %s585 = scalar_lea.vmem %s0, 138
  %s586 = smov 12
  %v587 = vld [vmem:[%s585] ss:$16 sm:%s586]
  %vm588 = vcmask 1043458
  %v589 = vsel %vm588, %v587, %v584
  %s590 = scalar_lea.vmem %s0, 138
  %s591 = smov 48
  %v592 = vld [vmem:[%s590] ss:$16 sm:%s591]
  %vm593 = vcmask 1045508
  %v594 = vsel %vm593, %v592, %v589
  %s595 = scalar_lea.vmem %s0, 138
  %s596 = smov 192
  %v597 = vld [vmem:[%s595] ss:$16 sm:%s596]
  %vm598 = vcmask 1047558
  %v599 = vsel %vm598, %v597, %v594
  %600 = vrot.lane.b32.xlu0 %v599, 32
  %v601 = vpop.permute.xlu0 %600
  %vm602 = vcmask 392448
  %s603 = scalar_lea.vmem %s1, 24
  %604 = vst.msk [vmem:[%s603] sm:$0xff] %vm602, %v601
  %s605 = scalar_lea.vmem %s0, 1
  %s606 = smov 3
  %v607 = vld [vmem:[%s605] ss:$16 sm:%s606]
  %s608 = scalar_lea.vmem %s0, 1
  %s609 = smov 12
  %v610 = vld [vmem:[%s608] ss:$16 sm:%s609]
  %vm611 = vcmask 1043458
  %v612 = vsel %vm611, %v610, %v607
  %s613 = scalar_lea.vmem %s0, 1
  %s614 = smov 48
  %v615 = vld [vmem:[%s613] ss:$16 sm:%s614]
  %vm616 = vcmask 1045508
  %v617 = vsel %vm616, %v615, %v612
  %s618 = scalar_lea.vmem %s0, 1
  %s619 = smov 192
  %v620 = vld [vmem:[%s618] ss:$16 sm:%s619]
  %vm621 = vcmask 1047558
  %v622 = vsel %vm621, %v620, %v617
  %623 = vrot.lane.b32.xlu0 %v622, 16
  %v624 = vpop.permute.xlu0 %623
  %vm625 = vcmask 261248
  %626 = vst.msk [vmem:[%s1] sm:$0xff] %vm625, %v624
  %s627 = scalar_lea.vmem %s0, 9
  %s628 = smov 3
  %v629 = vld [vmem:[%s627] ss:$16 sm:%s628]
  %s630 = scalar_lea.vmem %s0, 9
  %s631 = smov 12
  %v632 = vld [vmem:[%s630] ss:$16 sm:%s631]
  %vm633 = vcmask 1043458
  %v634 = vsel %vm633, %v632, %v629
  %s635 = scalar_lea.vmem %s0, 9
  %s636 = smov 48
  %v637 = vld [vmem:[%s635] ss:$16 sm:%s636]
  %vm638 = vcmask 1045508
  %v639 = vsel %vm638, %v637, %v634
  %s640 = scalar_lea.vmem %s0, 9
  %s641 = smov 192
  %v642 = vld [vmem:[%s640] ss:$16 sm:%s641]
  %vm643 = vcmask 1047558
  %v644 = vsel %vm643, %v642, %v639
  %645 = vrot.lane.b32.xlu0 %v644, 16
  %v646 = vpop.permute.xlu0 %645
  %vm647 = vcmask 261248
  %s648 = scalar_lea.vmem %s1, 8
  %649 = vst.msk [vmem:[%s648] sm:$0xff] %vm647, %v646
  %s650 = scalar_lea.vmem %s0, 129
  %s651 = smov 3
  %v652 = vld [vmem:[%s650] ss:$16 sm:%s651]
  %s653 = scalar_lea.vmem %s0, 129
  %s654 = smov 12
  %v655 = vld [vmem:[%s653] ss:$16 sm:%s654]
  %vm656 = vcmask 1043458
  %v657 = vsel %vm656, %v655, %v652
  %s658 = scalar_lea.vmem %s0, 129
  %s659 = smov 48
  %v660 = vld [vmem:[%s658] ss:$16 sm:%s659]
  %vm661 = vcmask 1045508
  %v662 = vsel %vm661, %v660, %v657
  %s663 = scalar_lea.vmem %s0, 129
  %s664 = smov 192
  %v665 = vld [vmem:[%s663] ss:$16 sm:%s664]
  %vm666 = vcmask 1047558
  %v667 = vsel %vm666, %v665, %v662
  %668 = vrot.lane.b32.xlu0 %v667, 16
  %v669 = vpop.permute.xlu0 %668
  %vm670 = vcmask 261248
  %s671 = scalar_lea.vmem %s1, 16
  %672 = vst.msk [vmem:[%s671] sm:$0xff] %vm670, %v669
  %s673 = scalar_lea.vmem %s0, 137
  %s674 = smov 3
  %v675 = vld [vmem:[%s673] ss:$16 sm:%s674]
  %s676 = scalar_lea.vmem %s0, 137
  %s677 = smov 12
  %v678 = vld [vmem:[%s676] ss:$16 sm:%s677]
  %vm679 = vcmask 1043458
  %v680 = vsel %vm679, %v678, %v675
  %s681 = scalar_lea.vmem %s0, 137
  %s682 = smov 48
  %v683 = vld [vmem:[%s681] ss:$16 sm:%s682]
  %vm684 = vcmask 1045508
  %v685 = vsel %vm684, %v683, %v680
  %s686 = scalar_lea.vmem %s0, 137
  %s687 = smov 192
  %v688 = vld [vmem:[%s686] ss:$16 sm:%s687]
  %vm689 = vcmask 1047558
  %v690 = vsel %vm689, %v688, %v685
  %691 = vrot.lane.b32.xlu0 %v690, 16
  %v692 = vpop.permute.xlu0 %691
  %vm693 = vcmask 261248
  %s694 = scalar_lea.vmem %s1, 24
  %695 = vst.msk [vmem:[%s694] sm:$0xff] %vm693, %v692

// kernel: cnnlstm_forward.1
$region0: #{cnnlstm_forward.1}
  #allocation0 [shape = 'u32[]', space=smem, size = 0x4, offset = 0x4, fixed_abs, tag = 'smem constant byte address 0x4 - core index']
  #allocation1 [shape = 'u32[144,128]{1,0:T(1,128)}', space=vmem, size = 0x12000, scoped, tag = 'internal scratch']
  %s0 = inlined_call_operand.vmem [shape: f32[9,16,256], index: 0, kind: input, shape index: {}]
  %s1 = inlined_call_operand.vmem [shape: f32[36], index: 1, kind: input, shape index: {}]
  %s2 = inlined_call_operand.vmem [shape: f32[4], index: 2, kind: input, shape index: {}]
  %s3 = inlined_call_operand.vmem [shape: f32[4,256,64], index: 3, kind: input, shape index: {}]
  %s4 = inlined_call_operand.vmem [shape: f32[256,128], index: 4, kind: input, shape index: {}]
  %s5 = inlined_call_operand.vmem [shape: f32[32,128], index: 5, kind: input, shape index: {}]
  %s6 = inlined_call_operand.vmem [shape: f32[1,128], index: 6, kind: input, shape index: {}]
  %s7 = inlined_call_operand.vmem [shape: f32[1,2,32], index: 7, kind: input, shape index: {}]
  %s8 = inlined_call_operand.vmem [shape: f32[1,2,32], index: 8, kind: input, shape index: {}]
  %s9 = inlined_call_operand.vmem [shape: f32[32,16], index: 9, kind: input, shape index: {}]
  %s10 = inlined_call_operand.vmem [shape: f32[1,16], index: 10, kind: input, shape index: {}]
  %s11 = inlined_call_operand.hbm [shape: f32[2,16], index: 11, kind: output, shape index: {}]
  %s12 = sld [smem:[#allocation0]]
  $region62: #{cnnlstm_forward.1} parent=0
    _
  %s14 = ssub.s32 1, %s12
  %s15 = scalar_select 0, %s14, %s12
  $region1: #{cnnlstm_forward.1} parent=0
    #allocation2 [shape = 'u8[512]{0}', space=smem, size = 0x200, scoped, tag = 'input window, operand 1, single buffered']
    #allocation3 [shape = 's32[1]{0}', space=sflag, size = 0x4, scoped, tag = 'scoped memory for cnnlstm_forward.1']
    #allocation4 [shape = 's32[1]{0}', space=sflag, size = 0x4, scoped, tag = 'scoped memory for cnnlstm_forward.1']
    #allocation5 [shape = 'u8[512]{0}', space=smem, size = 0x200, scoped, tag = 'input window, operand 2, single buffered']
    #allocation6 [shape = 's32[1]{0}', space=sflag, size = 0x4, scoped, tag = 'scoped memory for cnnlstm_forward.1']
    #allocation7 [shape = 'u8[1024]{0}', space=vmem, size = 0x400, scoped, tag = 'output window, operand 0, single buffered']
    %16 = vsyncpa [#allocation4], 0
    %17 = vsyncpa [#allocation6], 0
    %18 = vsyncpa [#allocation3], 0
    // Predicated region
    $region2: #{cnnlstm_forward.1} parent=1 // pred_check
      _
    $region3: #{cnnlstm_forward.1} parent=1 // pred_check_branch
      %20 = sbr.rel (0) target = $region5
    $region4: #{cnnlstm_forward.1} parent=1 // pred_region
      _
    $region5: #{cnnlstm_forward.1} parent=1 // pred_fallthru
      _
    // Predicated region
    $region6: #{cnnlstm_forward.1} parent=1 // pred_check
      _
    $region7: #{cnnlstm_forward.1} parent=1 // pred_check_branch
      %22 = sbr.rel (0) target = $region9
    $region8: #{cnnlstm_forward.1} parent=1 // pred_region
      %s24 = ssub.s32 16, 16
      %25 = vsyncadd [#allocation4], %s24
      %s27 = sshll.u32 %s1, 4
      %s28 = int_to_ptr.vmem [resolvable:$true] %s27
      %30 = dma.vmem_to_smem %s28, 16, [#allocation2], [#allocation4]
    $region9: #{cnnlstm_forward.1} parent=1 // pred_fallthru
      _
    // Predicated region
    $region10: #{cnnlstm_forward.1} parent=1 // pred_check
      _
    $region11: #{cnnlstm_forward.1} parent=1 // pred_check_branch
      %32 = sbr.rel (0) target = $region13
    $region12: #{cnnlstm_forward.1} parent=1 // pred_region
      %s34 = ssub.s32 16, 16
      %35 = vsyncadd [#allocation6], %s34
      %s37 = sshll.u32 %s2, 4
      %s38 = int_to_ptr.vmem [resolvable:$true] %s37
      %40 = dma.vmem_to_smem %s38, 16, [#allocation5], [#allocation6]
    $region13: #{cnnlstm_forward.1} parent=1 // pred_fallthru
      _
    // Predicated region
    $region14: #{cnnlstm_forward.1} parent=1 // pred_check
      _
    $region15: #{cnnlstm_forward.1} parent=1 // pred_check_branch
      %42 = sbr.rel (0) target = $region17
    $region16: #{cnnlstm_forward.1} parent=1 // pred_region
      _
    $region17: #{cnnlstm_forward.1} parent=1 // pred_fallthru
      _
    // Predicated region
    $region18: #{cnnlstm_forward.1} parent=1 // pred_check
      _
    $region19: #{cnnlstm_forward.1} parent=1 // pred_check_branch
      %44 = sbr.rel (0) target = $region21
    $region20: #{cnnlstm_forward.1} parent=1 // pred_region
      _
    $region21: #{cnnlstm_forward.1} parent=1 // pred_fallthru
      _
    // Predicated region
    $region22: #{cnnlstm_forward.1} parent=1 // pred_check
      _
    $region23: #{cnnlstm_forward.1} parent=1 // pred_check_branch
      %46 = sbr.rel (0) target = $region25
    $region24: #{cnnlstm_forward.1} parent=1 // pred_region
      _
    $region25: #{cnnlstm_forward.1} parent=1 // pred_fallthru
      _
    // Predicated region
    $region26: #{cnnlstm_forward.1} parent=1 // pred_check
      _
    $region27: #{cnnlstm_forward.1} parent=1 // pred_check_branch
      %48 = sbr.rel (0) target = $region29
    $region28: #{cnnlstm_forward.1} parent=1 // pred_region
      _
    $region29: #{cnnlstm_forward.1} parent=1 // pred_fallthru
      _
    // Predicated region
    $region30: #{cnnlstm_forward.1} parent=1 // pred_check
      _
    $region31: #{cnnlstm_forward.1} parent=1 // pred_check_branch
      %50 = sbr.rel (0) target = $region33
    $region32: #{cnnlstm_forward.1} parent=1 // pred_region
      _
    $region33: #{cnnlstm_forward.1} parent=1 // pred_fallthru
      _
    // Predicated region
    $region34: #{cnnlstm_forward.1} parent=1 // pred_check
      _
    $region35: #{cnnlstm_forward.1} parent=1 // pred_check_branch
      %52 = sbr.rel (0) target = $region37
    $region36: #{cnnlstm_forward.1} parent=1 // pred_region
      _
    $region37: #{cnnlstm_forward.1} parent=1 // pred_fallthru
      _
    // Predicated region
    $region38: #{cnnlstm_forward.1} parent=1 // pred_check
      _
    $region39: #{cnnlstm_forward.1} parent=1 // pred_check_branch
      %54 = sbr.rel (0) target = $region41
    $region40: #{cnnlstm_forward.1} parent=1 // pred_region
      _
    $region41: #{cnnlstm_forward.1} parent=1 // pred_fallthru
      _
    // Predicated region
    $region42: #{cnnlstm_forward.1} parent=1 // pred_check
      _
    $region43: #{cnnlstm_forward.1} parent=1 // pred_check_branch
      %56 = sbr.rel (0) target = $region45
    $region44: #{cnnlstm_forward.1} parent=1 // pred_region
      _
    $region45: #{cnnlstm_forward.1} parent=1 // pred_fallthru
      _
    // Predicated region
    $region46: #{cnnlstm_forward.1} parent=1 // pred_check
      _
    $region47: #{cnnlstm_forward.1} parent=1 // pred_check_branch
      %58 = sbr.rel (0) target = $region49
    $region48: #{cnnlstm_forward.1} parent=1 // pred_region
      %59 = dma.done [#allocation4], 16
    $region49: #{cnnlstm_forward.1} parent=1 // pred_fallthru
      _
    // Predicated region
    $region50: #{cnnlstm_forward.1} parent=1 // pred_check
      _
    $region51: #{cnnlstm_forward.1} parent=1 // pred_check_branch
      %61 = sbr.rel (0) target = $region53
    $region52: #{cnnlstm_forward.1} parent=1 // pred_region
      %62 = dma.done [#allocation6], 16
    $region53: #{cnnlstm_forward.1} parent=1 // pred_fallthru
      _
    %63 = sfence
    %v64 = vld [vmem:[%s0] sm:$0xff]
    %v65 = vld [vmem:[%s0 + $0x8] sm:$0xff]
    %v66 = vld [vmem:[%s0 + $0x10] sm:$0xff]
    %v67 = vld [vmem:[%s0 + $0x18] sm:$0xff]
    %s68 = scalar_lea.vmem %s0, 32
    %v69 = vld [vmem:[%s68] sm:$0xff]
    %v70 = vld [vmem:[%s68 + $0x8] sm:$0xff]
    %v71 = vld [vmem:[%s68 + $0x10] sm:$0xff]
    %v72 = vld [vmem:[%s68 + $0x18] sm:$0xff]
    %s73 = scalar_lea.vmem %s0, 64
    %v74 = vld [vmem:[%s73] sm:$0xff]
    %v75 = vld [vmem:[%s73 + $0x8] sm:$0xff]
    %v76 = vld [vmem:[%s73 + $0x10] sm:$0xff]
    %v77 = vld [vmem:[%s73 + $0x18] sm:$0xff]
    %s78 = scalar_lea.vmem %s0, 96
    %v79 = vld [vmem:[%s78] sm:$0xff]
    %v80 = vld [vmem:[%s78 + $0x8] sm:$0xff]
    %v81 = vld [vmem:[%s78 + $0x10] sm:$0xff]
    %v82 = vld [vmem:[%s78 + $0x18] sm:$0xff]
    %s83 = scalar_lea.vmem %s0, 128
    %v84 = vld [vmem:[%s83] sm:$0xff]
    %v85 = vld [vmem:[%s83 + $0x8] sm:$0xff]
    %v86 = vld [vmem:[%s83 + $0x10] sm:$0xff]
    %v87 = vld [vmem:[%s83 + $0x18] sm:$0xff]
    %s88 = scalar_lea.vmem %s0, 160
    %v89 = vld [vmem:[%s88] sm:$0xff]
    %v90 = vld [vmem:[%s88 + $0x8] sm:$0xff]
    %v91 = vld [vmem:[%s88 + $0x10] sm:$0xff]
    %v92 = vld [vmem:[%s88 + $0x18] sm:$0xff]
    %s93 = scalar_lea.vmem %s0, 192
    %v94 = vld [vmem:[%s93] sm:$0xff]
    %v95 = vld [vmem:[%s93 + $0x8] sm:$0xff]
    %v96 = vld [vmem:[%s93 + $0x10] sm:$0xff]
    %v97 = vld [vmem:[%s93 + $0x18] sm:$0xff]
    %s98 = scalar_lea.vmem %s0, 224
    %v99 = vld [vmem:[%s98] sm:$0xff]
    %v100 = vld [vmem:[%s98 + $0x8] sm:$0xff]
    %v101 = vld [vmem:[%s98 + $0x10] sm:$0xff]
    %v102 = vld [vmem:[%s98 + $0x18] sm:$0xff]
    %s103 = scalar_lea.vmem %s0, 256
    %v104 = vld [vmem:[%s103] sm:$0xff]
    %v105 = vld [vmem:[%s103 + $0x8] sm:$0xff]
    %v106 = vld [vmem:[%s103 + $0x10] sm:$0xff]
    %v107 = vld [vmem:[%s103 + $0x18] sm:$0xff]
    %s108 = sld [smem:[#allocation2]]
    %v109 = vstv %s108
    %v110 = vmul.f32 %v64, %v109
    %v111 = vmul.f32 %v65, %v109
    %v112 = vmul.f32 %v66, %v109
    %v113 = vmul.f32 %v67, %v109
    %v114 = vadd.f32 %v110, 0.0
    %v115 = vadd.f32 %v111, 0.0
    %v116 = vadd.f32 %v112, 0.0
    %v117 = vadd.f32 %v113, 0.0
    %s118 = sld [smem:[#allocation2 + $0x1]]
    %v119 = vstv %s118
    %v120 = vmul.f32 %v69, %v119
    %v121 = vmul.f32 %v70, %v119
    %v122 = vmul.f32 %v71, %v119
    %v123 = vmul.f32 %v72, %v119
    %v124 = vadd.f32 %v114, %v120
    %v125 = vadd.f32 %v115, %v121
    %v126 = vadd.f32 %v116, %v122
    %v127 = vadd.f32 %v117, %v123
    %s128 = sld [smem:[#allocation2 + $0x2]]
    %v129 = vstv %s128
    %v130 = vmul.f32 %v74, %v129
    %v131 = vmul.f32 %v75, %v129
    %v132 = vmul.f32 %v76, %v129
    %v133 = vmul.f32 %v77, %v129
    %v134 = vadd.f32 %v124, %v130
    %v135 = vadd.f32 %v125, %v131
    %v136 = vadd.f32 %v126, %v132
    %v137 = vadd.f32 %v127, %v133
    %s138 = sld [smem:[#allocation2 + $0x3]]
    %v139 = vstv %s138
    %v140 = vmul.f32 %v79, %v139
    %v141 = vmul.f32 %v80, %v139
    %v142 = vmul.f32 %v81, %v139
    %v143 = vmul.f32 %v82, %v139
    %v144 = vadd.f32 %v134, %v140
    %v145 = vadd.f32 %v135, %v141
    %v146 = vadd.f32 %v136, %v142
    %v147 = vadd.f32 %v137, %v143
    %s148 = sld [smem:[#allocation2 + $0x4]]
    %v149 = vstv %s148
    %v150 = vmul.f32 %v84, %v149
    %v151 = vmul.f32 %v85, %v149
    %v152 = vmul.f32 %v86, %v149
    %v153 = vmul.f32 %v87, %v149
    %v154 = vadd.f32 %v144, %v150
    %v155 = vadd.f32 %v145, %v151
    %v156 = vadd.f32 %v146, %v152
    %v157 = vadd.f32 %v147, %v153
    %s158 = sld [smem:[#allocation2 + $0x5]]
    %v159 = vstv %s158
    %v160 = vmul.f32 %v89, %v159
    %v161 = vmul.f32 %v90, %v159
    %v162 = vmul.f32 %v91, %v159
    %v163 = vmul.f32 %v92, %v159
    %v164 = vadd.f32 %v154, %v160
    %v165 = vadd.f32 %v155, %v161
    %v166 = vadd.f32 %v156, %v162
    %v167 = vadd.f32 %v157, %v163
    %s168 = sld [smem:[#allocation2 + $0x6]]
    %v169 = vstv %s168
    %v170 = vmul.f32 %v94, %v169
    %v171 = vmul.f32 %v95, %v169
    %v172 = vmul.f32 %v96, %v169
    %v173 = vmul.f32 %v97, %v169
    %v174 = vadd.f32 %v164, %v170
    %v175 = vadd.f32 %v165, %v171
    %v176 = vadd.f32 %v166, %v172
    %v177 = vadd.f32 %v167, %v173
    %s178 = sld [smem:[#allocation2 + $0x7]]
    %v179 = vstv %s178
    %v180 = vmul.f32 %v99, %v179
    %v181 = vmul.f32 %v100, %v179
    %v182 = vmul.f32 %v101, %v179
    %v183 = vmul.f32 %v102, %v179
    %v184 = vadd.f32 %v174, %v180
    %v185 = vadd.f32 %v175, %v181
    %v186 = vadd.f32 %v176, %v182
    %v187 = vadd.f32 %v177, %v183
    %s188 = sld [smem:[#allocation2 + $0x8]]
    %v189 = vstv %s188
    %v190 = vmul.f32 %v104, %v189
    %v191 = vmul.f32 %v105, %v189
    %v192 = vmul.f32 %v106, %v189
    %v193 = vmul.f32 %v107, %v189
    %v194 = vadd.f32 %v184, %v190
    %v195 = vadd.f32 %v185, %v191
    %v196 = vadd.f32 %v186, %v192
    %v197 = vadd.f32 %v187, %v193
    %s198 = sld [smem:[#allocation5]]
    %v199 = vstv %s198
    %v200 = vadd.f32 %v194, %v199
    %v201 = vadd.f32 %v195, %v199
    %v202 = vadd.f32 %v196, %v199
    %v203 = vadd.f32 %v197, %v199
    %v204 = vmax.f32 %v200, 0.0
    %v205 = vmax.f32 %v201, 0.0
    %v206 = vmax.f32 %v202, 0.0
    %v207 = vmax.f32 %v203, 0.0
    %v208 = vld [vmem:[%s3] sm:$0xff]
    %v209 = vld [vmem:[%s3 + $0x8] sm:$0xff]
    %v210 = vld [vmem:[%s3 + $0x10] sm:$0xff]
    %v211 = vld [vmem:[%s3 + $0x18] sm:$0xff]
    %v212 = vld [vmem:[%s3 + $0x20] sm:$0xff]
    %v213 = vld [vmem:[%s3 + $0x28] sm:$0xff]
    %v214 = vld [vmem:[%s3 + $0x30] sm:$0xff]
    %v215 = vld [vmem:[%s3 + $0x38] sm:$0xff]
    %v216 = vld [vmem:[%s3 + $0x40] sm:$0xff]
    %v217 = vld [vmem:[%s3 + $0x48] sm:$0xff]
    %v218 = vld [vmem:[%s3 + $0x50] sm:$0xff]
    %v219 = vld [vmem:[%s3 + $0x58] sm:$0xff]
    %v220 = vld [vmem:[%s3 + $0x60] sm:$0xff]
    %v221 = vld [vmem:[%s3 + $0x68] sm:$0xff]
    %v222 = vld [vmem:[%s3 + $0x70] sm:$0xff]
    %v223 = vld [vmem:[%s3 + $0x78] sm:$0xff]
    %v224 = vld [vmem:[%s3 + $0x80] sm:$0xff]
    %v225 = vld [vmem:[%s3 + $0x88] sm:$0xff]
    %v226 = vld [vmem:[%s3 + $0x90] sm:$0xff]
    %v227 = vld [vmem:[%s3 + $0x98] sm:$0xff]
    %v228 = vld [vmem:[%s3 + $0xa0] sm:$0xff]
    %v229 = vld [vmem:[%s3 + $0xa8] sm:$0xff]
    %v230 = vld [vmem:[%s3 + $0xb0] sm:$0xff]
    %v231 = vld [vmem:[%s3 + $0xb8] sm:$0xff]
    %v232 = vld [vmem:[%s3 + $0xc0] sm:$0xff]
    %v233 = vld [vmem:[%s3 + $0xc8] sm:$0xff]
    %v234 = vld [vmem:[%s3 + $0xd0] sm:$0xff]
    %v235 = vld [vmem:[%s3 + $0xd8] sm:$0xff]
    %v236 = vld [vmem:[%s3 + $0xe0] sm:$0xff]
    %v237 = vld [vmem:[%s3 + $0xe8] sm:$0xff]
    %v238 = vld [vmem:[%s3 + $0xf0] sm:$0xff]
    %v239 = vld [vmem:[%s3 + $0xf8] sm:$0xff]
    %240 = vmatprep.subr.mxu0 0.0
    %241 = vmatpush1.msra.mxu0 %v208
    %242 = vmatprep.subr.mxu0 0.0
    %243 = vmatpush1.msra.mxu0 %v209
    %244 = vmatprep.subr.mxu0 0.0
    %245 = vmatpush1.msra.mxu0 %v210
    %246 = vmatprep.subr.mxu0 0.0
    %247 = vmatpush1.msra.mxu0 %v211
    %248 = vmatprep.subr.mxu0 0.0
    %249 = vmatpush1.msra.mxu0 %v212
    %250 = vmatprep.subr.mxu0 0.0
    %251 = vmatpush1.msra.mxu0 %v213
    %252 = vmatprep.subr.mxu0 0.0
    %253 = vmatpush1.msra.mxu0 %v214
    %254 = vmatprep.subr.mxu0 0.0
    %255 = vmatpush1.msra.mxu0 %v215
    %256 = vmatprep.subr.mxu0 0.0
    %257 = vmatpush1.msra.mxu0 %v216
    %258 = vmatprep.subr.mxu0 0.0
    %259 = vmatpush1.msra.mxu0 %v217
    %260 = vmatprep.subr.mxu0 0.0
    %261 = vmatpush1.msra.mxu0 %v218
    %262 = vmatprep.subr.mxu0 0.0
    %263 = vmatpush1.msra.mxu0 %v219
    %264 = vmatprep.subr.mxu0 0.0
    %265 = vmatpush1.msra.mxu0 %v220
    %266 = vmatprep.subr.mxu0 0.0
    %267 = vmatpush1.msra.mxu0 %v221
    %268 = vmatprep.subr.mxu0 0.0
    %269 = vmatpush1.msra.mxu0 %v222
    %270 = vmatprep.subr.mxu0 0.0
    %271 = vmatpush1.msra.mxu0 %v223
    %272 = vmatprep.subr.mxu0 0.0
    %273 = vmatpush1.msra.mxu0 %v224
    %274 = vmatprep.subr.mxu0 0.0
    %275 = vmatpush1.msra.mxu0 %v225
    %276 = vmatprep.subr.mxu0 0.0
    %277 = vmatpush1.msra.mxu0 %v226
    %278 = vmatprep.subr.mxu0 0.0
    %279 = vmatpush1.msra.mxu0 %v227
    %280 = vmatprep.subr.mxu0 0.0
    %281 = vmatpush1.msra.mxu0 %v228
    %282 = vmatprep.subr.mxu0 0.0
    %283 = vmatpush1.msra.mxu0 %v229
    %284 = vmatprep.subr.mxu0 0.0
    %285 = vmatpush1.msra.mxu0 %v230
    %286 = vmatprep.subr.mxu0 0.0
    %287 = vmatpush1.msra.mxu0 %v231
    %288 = vmatprep.subr.mxu0 0.0
    %289 = vmatpush1.msra.mxu0 %v232
    %290 = vmatprep.subr.mxu0 0.0
    %291 = vmatpush1.msra.mxu0 %v233
    %292 = vmatprep.subr.mxu0 0.0
    %293 = vmatpush1.msra.mxu0 %v234
    %294 = vmatprep.subr.mxu0 0.0
    %295 = vmatpush1.msra.mxu0 %v235
    %296 = vmatprep.subr.mxu0 0.0
    %297 = vmatpush1.msra.mxu0 %v236
    %298 = vmatprep.subr.mxu0 0.0
    %299 = vmatpush1.msra.mxu0 %v237
    %300 = vmatprep.subr.mxu0 0.0
    %301 = vmatpush1.msra.mxu0 %v238
    %302 = vmatprep.subr.mxu0 0.0
    %303 = vmatpush1.msra.mxu0 %v239
    %304 = vmatprep.mubr.f32.mxu0 %v205
    %305 = vmatmul.mubr.f32.gmra.mrb[0].mxu0 %v204
    %v306 = vpop.f32.mrb[0].mxu0
    %v307 = vadd.f32 0.0, %v306
    %v308 = vpop.f32.mrb[0].mxu0
    %309 = vmatprep.mubr.f32.mxu0 %v207
    %310 = vmatmul.mubr.f32.gmra.mrb[0].mxu0 %v206
    %v311 = vpop.f32.mrb[0].mxu0
    %v312 = vadd.f32 0.0, %v311
    %v313 = vpop.f32.mrb[0].mxu0
    %314 = vdwg.mxu0
    %s315 = scalar_lea.vmem %s3, 256
    %v316 = vld [vmem:[%s315] sm:$0xff]
    %v317 = vld [vmem:[%s315 + $0x8] sm:$0xff]
    %v318 = vld [vmem:[%s315 + $0x10] sm:$0xff]
    %v319 = vld [vmem:[%s315 + $0x18] sm:$0xff]
    %v320 = vld [vmem:[%s315 + $0x20] sm:$0xff]
    %v321 = vld [vmem:[%s315 + $0x28] sm:$0xff]
    %v322 = vld [vmem:[%s315 + $0x30] sm:$0xff]
    %v323 = vld [vmem:[%s315 + $0x38] sm:$0xff]
    %v324 = vld [vmem:[%s315 + $0x40] sm:$0xff]
    %v325 = vld [vmem:[%s315 + $0x48] sm:$0xff]
    %v326 = vld [vmem:[%s315 + $0x50] sm:$0xff]
    %v327 = vld [vmem:[%s315 + $0x58] sm:$0xff]
    %v328 = vld [vmem:[%s315 + $0x60] sm:$0xff]
    %v329 = vld [vmem:[%s315 + $0x68] sm:$0xff]
    %v330 = vld [vmem:[%s315 + $0x70] sm:$0xff]
    %v331 = vld [vmem:[%s315 + $0x78] sm:$0xff]
    %v332 = vld [vmem:[%s315 + $0x80] sm:$0xff]
    %v333 = vld [vmem:[%s315 + $0x88] sm:$0xff]
    %v334 = vld [vmem:[%s315 + $0x90] sm:$0xff]
    %v335 = vld [vmem:[%s315 + $0x98] sm:$0xff]
    %v336 = vld [vmem:[%s315 + $0xa0] sm:$0xff]
    %v337 = vld [vmem:[%s315 + $0xa8] sm:$0xff]
    %v338 = vld [vmem:[%s315 + $0xb0] sm:$0xff]
    %v339 = vld [vmem:[%s315 + $0xb8] sm:$0xff]
    %v340 = vld [vmem:[%s315 + $0xc0] sm:$0xff]
    %v341 = vld [vmem:[%s315 + $0xc8] sm:$0xff]
    %v342 = vld [vmem:[%s315 + $0xd0] sm:$0xff]
    %v343 = vld [vmem:[%s315 + $0xd8] sm:$0xff]
    %v344 = vld [vmem:[%s315 + $0xe0] sm:$0xff]
    %v345 = vld [vmem:[%s315 + $0xe8] sm:$0xff]
    %v346 = vld [vmem:[%s315 + $0xf0] sm:$0xff]
    %v347 = vld [vmem:[%s315 + $0xf8] sm:$0xff]
    %348 = vmatprep.subr.mxu0 0.0
    %349 = vmatpush1.msra.mxu0 %v316
    %350 = vmatprep.subr.mxu0 0.0
    %351 = vmatpush1.msra.mxu0 %v317
    %352 = vmatprep.subr.mxu0 0.0
    %353 = vmatpush1.msra.mxu0 %v318
    %354 = vmatprep.subr.mxu0 0.0
    %355 = vmatpush1.msra.mxu0 %v319
    %356 = vmatprep.subr.mxu0 0.0
    %357 = vmatpush1.msra.mxu0 %v320
    %358 = vmatprep.subr.mxu0 0.0
    %359 = vmatpush1.msra.mxu0 %v321
    %360 = vmatprep.subr.mxu0 0.0
    %361 = vmatpush1.msra.mxu0 %v322
    %362 = vmatprep.subr.mxu0 0.0
    %363 = vmatpush1.msra.mxu0 %v323
    %364 = vmatprep.subr.mxu0 0.0
    %365 = vmatpush1.msra.mxu0 %v324
    %366 = vmatprep.subr.mxu0 0.0
    %367 = vmatpush1.msra.mxu0 %v325
    %368 = vmatprep.subr.mxu0 0.0
    %369 = vmatpush1.msra.mxu0 %v326
    %370 = vmatprep.subr.mxu0 0.0
    %371 = vmatpush1.msra.mxu0 %v327
    %372 = vmatprep.subr.mxu0 0.0
    %373 = vmatpush1.msra.mxu0 %v328
    %374 = vmatprep.subr.mxu0 0.0
    %375 = vmatpush1.msra.mxu0 %v329
    %376 = vmatprep.subr.mxu0 0.0
    %377 = vmatpush1.msra.mxu0 %v330
    %378 = vmatprep.subr.mxu0 0.0
    %379 = vmatpush1.msra.mxu0 %v331
    %380 = vmatprep.subr.mxu0 0.0
    %381 = vmatpush1.msra.mxu0 %v332
    %382 = vmatprep.subr.mxu0 0.0
    %383 = vmatpush1.msra.mxu0 %v333
    %384 = vmatprep.subr.mxu0 0.0
    %385 = vmatpush1.msra.mxu0 %v334
    %386 = vmatprep.subr.mxu0 0.0
    %387 = vmatpush1.msra.mxu0 %v335
    %388 = vmatprep.subr.mxu0 0.0
    %389 = vmatpush1.msra.mxu0 %v336
    %390 = vmatprep.subr.mxu0 0.0
    %391 = vmatpush1.msra.mxu0 %v337
    %392 = vmatprep.subr.mxu0 0.0
    %393 = vmatpush1.msra.mxu0 %v338
    %394 = vmatprep.subr.mxu0 0.0
    %395 = vmatpush1.msra.mxu0 %v339
    %396 = vmatprep.subr.mxu0 0.0
    %397 = vmatpush1.msra.mxu0 %v340
    %398 = vmatprep.subr.mxu0 0.0
    %399 = vmatpush1.msra.mxu0 %v341
    %400 = vmatprep.subr.mxu0 0.0
    %401 = vmatpush1.msra.mxu0 %v342
    %402 = vmatprep.subr.mxu0 0.0
    %403 = vmatpush1.msra.mxu0 %v343
    %404 = vmatprep.subr.mxu0 0.0
    %405 = vmatpush1.msra.mxu0 %v344
    %406 = vmatprep.subr.mxu0 0.0
    %407 = vmatpush1.msra.mxu0 %v345
    %408 = vmatprep.subr.mxu0 0.0
    %409 = vmatpush1.msra.mxu0 %v346
    %410 = vmatprep.subr.mxu0 0.0
    %411 = vmatpush1.msra.mxu0 %v347
    %412 = vmatprep.mubr.f32.mxu0 %v205
    %413 = vmatmul.mubr.f32.gmra.mrb[0].mxu0 %v204
    %v414 = vpop.f32.mrb[0].mxu0
    %v415 = vadd.f32 0.0, %v414
    %v416 = vpop.f32.mrb[0].mxu0
    %417 = vmatprep.mubr.f32.mxu0 %v207
    %418 = vmatmul.mubr.f32.gmra.mrb[0].mxu0 %v206
    %v419 = vpop.f32.mrb[0].mxu0
    %v420 = vadd.f32 0.0, %v419
    %v421 = vpop.f32.mrb[0].mxu0
    %422 = vdwg.mxu0
    %v423 = vmax.f32 %v307, %v415
    %v424 = vmax.f32 %v312, %v420
    %s425 = scalar_lea.vmem %s3, 512
    %v426 = vld [vmem:[%s425] sm:$0xff]
    %v427 = vld [vmem:[%s425 + $0x8] sm:$0xff]
    %v428 = vld [vmem:[%s425 + $0x10] sm:$0xff]
    %v429 = vld [vmem:[%s425 + $0x18] sm:$0xff]
    %v430 = vld [vmem:[%s425 + $0x20] sm:$0xff]
    %v431 = vld [vmem:[%s425 + $0x28] sm:$0xff]
    %v432 = vld [vmem:[%s425 + $0x30] sm:$0xff]
    %v433 = vld [vmem:[%s425 + $0x38] sm:$0xff]
    %v434 = vld [vmem:[%s425 + $0x40] sm:$0xff]
    %v435 = vld [vmem:[%s425 + $0x48] sm:$0xff]
    %v436 = vld [vmem:[%s425 + $0x50] sm:$0xff]
    %v437 = vld [vmem:[%s425 + $0x58] sm:$0xff]
    %v438 = vld [vmem:[%s425 + $0x60] sm:$0xff]
    %v439 = vld [vmem:[%s425 + $0x68] sm:$0xff]
    %v440 = vld [vmem:[%s425 + $0x70] sm:$0xff]
    %v441 = vld [vmem:[%s425 + $0x78] sm:$0xff]
    %v442 = vld [vmem:[%s425 + $0x80] sm:$0xff]
    %v443 = vld [vmem:[%s425 + $0x88] sm:$0xff]
    %v444 = vld [vmem:[%s425 + $0x90] sm:$0xff]
    %v445 = vld [vmem:[%s425 + $0x98] sm:$0xff]
    %v446 = vld [vmem:[%s425 + $0xa0] sm:$0xff]
    %v447 = vld [vmem:[%s425 + $0xa8] sm:$0xff]
    %v448 = vld [vmem:[%s425 + $0xb0] sm:$0xff]
    %v449 = vld [vmem:[%s425 + $0xb8] sm:$0xff]
    %v450 = vld [vmem:[%s425 + $0xc0] sm:$0xff]
    %v451 = vld [vmem:[%s425 + $0xc8] sm:$0xff]
    %v452 = vld [vmem:[%s425 + $0xd0] sm:$0xff]
    %v453 = vld [vmem:[%s425 + $0xd8] sm:$0xff]
    %v454 = vld [vmem:[%s425 + $0xe0] sm:$0xff]
    %v455 = vld [vmem:[%s425 + $0xe8] sm:$0xff]
    %v456 = vld [vmem:[%s425 + $0xf0] sm:$0xff]
    %v457 = vld [vmem:[%s425 + $0xf8] sm:$0xff]
    %458 = vmatprep.subr.mxu0 0.0
    %459 = vmatpush1.msra.mxu0 %v426
    %460 = vmatprep.subr.mxu0 0.0
    %461 = vmatpush1.msra.mxu0 %v427
    %462 = vmatprep.subr.mxu0 0.0
    %463 = vmatpush1.msra.mxu0 %v428
    %464 = vmatprep.subr.mxu0 0.0
    %465 = vmatpush1.msra.mxu0 %v429
    %466 = vmatprep.subr.mxu0 0.0
    %467 = vmatpush1.msra.mxu0 %v430
    %468 = vmatprep.subr.mxu0 0.0
    %469 = vmatpush1.msra.mxu0 %v431
    %470 = vmatprep.subr.mxu0 0.0
    %471 = vmatpush1.msra.mxu0 %v432
    %472 = vmatprep.subr.mxu0 0.0
    %473 = vmatpush1.msra.mxu0 %v433
    %474 = vmatprep.subr.mxu0 0.0
    %475 = vmatpush1.msra.mxu0 %v434
    %476 = vmatprep.subr.mxu0 0.0
    %477 = vmatpush1.msra.mxu0 %v435
    %478 = vmatprep.subr.mxu0 0.0
    %479 = vmatpush1.msra.mxu0 %v436
    %480 = vmatprep.subr.mxu0 0.0
    %481 = vmatpush1.msra.mxu0 %v437
    %482 = vmatprep.subr.mxu0 0.0
    %483 = vmatpush1.msra.mxu0 %v438
    %484 = vmatprep.subr.mxu0 0.0
    %485 = vmatpush1.msra.mxu0 %v439
    %486 = vmatprep.subr.mxu0 0.0
    %487 = vmatpush1.msra.mxu0 %v440
    %488 = vmatprep.subr.mxu0 0.0
    %489 = vmatpush1.msra.mxu0 %v441
    %490 = vmatprep.subr.mxu0 0.0
    %491 = vmatpush1.msra.mxu0 %v442
    %492 = vmatprep.subr.mxu0 0.0
    %493 = vmatpush1.msra.mxu0 %v443
    %494 = vmatprep.subr.mxu0 0.0
    %495 = vmatpush1.msra.mxu0 %v444
    %496 = vmatprep.subr.mxu0 0.0
    %497 = vmatpush1.msra.mxu0 %v445
    %498 = vmatprep.subr.mxu0 0.0
    %499 = vmatpush1.msra.mxu0 %v446
    %500 = vmatprep.subr.mxu0 0.0
    %501 = vmatpush1.msra.mxu0 %v447
    %502 = vmatprep.subr.mxu0 0.0
    %503 = vmatpush1.msra.mxu0 %v448
    %504 = vmatprep.subr.mxu0 0.0
    %505 = vmatpush1.msra.mxu0 %v449
    %506 = vmatprep.subr.mxu0 0.0
    %507 = vmatpush1.msra.mxu0 %v450
    %508 = vmatprep.subr.mxu0 0.0
    %509 = vmatpush1.msra.mxu0 %v451
    %510 = vmatprep.subr.mxu0 0.0
    %511 = vmatpush1.msra.mxu0 %v452
    %512 = vmatprep.subr.mxu0 0.0
    %513 = vmatpush1.msra.mxu0 %v453
    %514 = vmatprep.subr.mxu0 0.0
    %515 = vmatpush1.msra.mxu0 %v454
    %516 = vmatprep.subr.mxu0 0.0
    %517 = vmatpush1.msra.mxu0 %v455
    %518 = vmatprep.subr.mxu0 0.0
    %519 = vmatpush1.msra.mxu0 %v456
    %520 = vmatprep.subr.mxu0 0.0
    %521 = vmatpush1.msra.mxu0 %v457
    %522 = vmatprep.mubr.f32.mxu0 %v205
    %523 = vmatmul.mubr.f32.gmra.mrb[0].mxu0 %v204
    %v524 = vpop.f32.mrb[0].mxu0
    %v525 = vadd.f32 0.0, %v524
    %v526 = vpop.f32.mrb[0].mxu0
    %527 = vmatprep.mubr.f32.mxu0 %v207
    %528 = vmatmul.mubr.f32.gmra.mrb[0].mxu0 %v206
    %v529 = vpop.f32.mrb[0].mxu0
    %v530 = vadd.f32 0.0, %v529
    %v531 = vpop.f32.mrb[0].mxu0
    %532 = vdwg.mxu0
    %v533 = vmax.f32 %v423, %v525
    %v534 = vmax.f32 %v424, %v530
    %s535 = scalar_lea.vmem %s3, 768
    %v536 = vld [vmem:[%s535] sm:$0xff]
    %v537 = vld [vmem:[%s535 + $0x8] sm:$0xff]
    %v538 = vld [vmem:[%s535 + $0x10] sm:$0xff]
    %v539 = vld [vmem:[%s535 + $0x18] sm:$0xff]
    %v540 = vld [vmem:[%s535 + $0x20] sm:$0xff]
    %v541 = vld [vmem:[%s535 + $0x28] sm:$0xff]
    %v542 = vld [vmem:[%s535 + $0x30] sm:$0xff]
    %v543 = vld [vmem:[%s535 + $0x38] sm:$0xff]
    %v544 = vld [vmem:[%s535 + $0x40] sm:$0xff]
    %v545 = vld [vmem:[%s535 + $0x48] sm:$0xff]
    %v546 = vld [vmem:[%s535 + $0x50] sm:$0xff]
    %v547 = vld [vmem:[%s535 + $0x58] sm:$0xff]
    %v548 = vld [vmem:[%s535 + $0x60] sm:$0xff]
    %v549 = vld [vmem:[%s535 + $0x68] sm:$0xff]
    %v550 = vld [vmem:[%s535 + $0x70] sm:$0xff]
    %v551 = vld [vmem:[%s535 + $0x78] sm:$0xff]
    %v552 = vld [vmem:[%s535 + $0x80] sm:$0xff]
    %v553 = vld [vmem:[%s535 + $0x88] sm:$0xff]
    %v554 = vld [vmem:[%s535 + $0x90] sm:$0xff]
    %v555 = vld [vmem:[%s535 + $0x98] sm:$0xff]
    %v556 = vld [vmem:[%s535 + $0xa0] sm:$0xff]
    %v557 = vld [vmem:[%s535 + $0xa8] sm:$0xff]
    %v558 = vld [vmem:[%s535 + $0xb0] sm:$0xff]
    %v559 = vld [vmem:[%s535 + $0xb8] sm:$0xff]
    %v560 = vld [vmem:[%s535 + $0xc0] sm:$0xff]
    %v561 = vld [vmem:[%s535 + $0xc8] sm:$0xff]
    %v562 = vld [vmem:[%s535 + $0xd0] sm:$0xff]
    %v563 = vld [vmem:[%s535 + $0xd8] sm:$0xff]
    %v564 = vld [vmem:[%s535 + $0xe0] sm:$0xff]
    %v565 = vld [vmem:[%s535 + $0xe8] sm:$0xff]
    %v566 = vld [vmem:[%s535 + $0xf0] sm:$0xff]
    %v567 = vld [vmem:[%s535 + $0xf8] sm:$0xff]
    %568 = vmatprep.subr.mxu0 0.0
    %569 = vmatpush1.msra.mxu0 %v536
    %570 = vmatprep.subr.mxu0 0.0
    %571 = vmatpush1.msra.mxu0 %v537
    %572 = vmatprep.subr.mxu0 0.0
    %573 = vmatpush1.msra.mxu0 %v538
    %574 = vmatprep.subr.mxu0 0.0
    %575 = vmatpush1.msra.mxu0 %v539
    %576 = vmatprep.subr.mxu0 0.0
    %577 = vmatpush1.msra.mxu0 %v540
    %578 = vmatprep.subr.mxu0 0.0
    %579 = vmatpush1.msra.mxu0 %v541
    %580 = vmatprep.subr.mxu0 0.0
    %581 = vmatpush1.msra.mxu0 %v542
    %582 = vmatprep.subr.mxu0 0.0
    %583 = vmatpush1.msra.mxu0 %v543
    %584 = vmatprep.subr.mxu0 0.0
    %585 = vmatpush1.msra.mxu0 %v544
    %586 = vmatprep.subr.mxu0 0.0
    %587 = vmatpush1.msra.mxu0 %v545
    %588 = vmatprep.subr.mxu0 0.0
    %589 = vmatpush1.msra.mxu0 %v546
    %590 = vmatprep.subr.mxu0 0.0
    %591 = vmatpush1.msra.mxu0 %v547
    %592 = vmatprep.subr.mxu0 0.0
    %593 = vmatpush1.msra.mxu0 %v548
    %594 = vmatprep.subr.mxu0 0.0
    %595 = vmatpush1.msra.mxu0 %v549
    %596 = vmatprep.subr.mxu0 0.0
    %597 = vmatpush1.msra.mxu0 %v550
    %598 = vmatprep.subr.mxu0 0.0
    %599 = vmatpush1.msra.mxu0 %v551
    %600 = vmatprep.subr.mxu0 0.0
    %601 = vmatpush1.msra.mxu0 %v552
    %602 = vmatprep.subr.mxu0 0.0
    %603 = vmatpush1.msra.mxu0 %v553
    %604 = vmatprep.subr.mxu0 0.0
    %605 = vmatpush1.msra.mxu0 %v554
    %606 = vmatprep.subr.mxu0 0.0
    %607 = vmatpush1.msra.mxu0 %v555
    %608 = vmatprep.subr.mxu0 0.0
    %609 = vmatpush1.msra.mxu0 %v556
    %610 = vmatprep.subr.mxu0 0.0
    %611 = vmatpush1.msra.mxu0 %v557
    %612 = vmatprep.subr.mxu0 0.0
    %613 = vmatpush1.msra.mxu0 %v558
    %614 = vmatprep.subr.mxu0 0.0
    %615 = vmatpush1.msra.mxu0 %v559
    %616 = vmatprep.subr.mxu0 0.0
    %617 = vmatpush1.msra.mxu0 %v560
    %618 = vmatprep.subr.mxu0 0.0
    %619 = vmatpush1.msra.mxu0 %v561
    %620 = vmatprep.subr.mxu0 0.0
    %621 = vmatpush1.msra.mxu0 %v562
    %622 = vmatprep.subr.mxu0 0.0
    %623 = vmatpush1.msra.mxu0 %v563
    %624 = vmatprep.subr.mxu0 0.0
    %625 = vmatpush1.msra.mxu0 %v564
    %626 = vmatprep.subr.mxu0 0.0
    %627 = vmatpush1.msra.mxu0 %v565
    %628 = vmatprep.subr.mxu0 0.0
    %629 = vmatpush1.msra.mxu0 %v566
    %630 = vmatprep.subr.mxu0 0.0
    %631 = vmatpush1.msra.mxu0 %v567
    %632 = vmatprep.mubr.f32.mxu0 %v205
    %633 = vmatmul.mubr.f32.gmra.mrb[0].mxu0 %v204
    %v634 = vpop.f32.mrb[0].mxu0
    %v635 = vadd.f32 0.0, %v634
    %v636 = vpop.f32.mrb[0].mxu0
    %637 = vmatprep.mubr.f32.mxu0 %v207
    %638 = vmatmul.mubr.f32.gmra.mrb[0].mxu0 %v206
    %v639 = vpop.f32.mrb[0].mxu0
    %v640 = vadd.f32 0.0, %v639
    %v641 = vpop.f32.mrb[0].mxu0
    %642 = vdwg.mxu0
    %v643 = vmax.f32 %v533, %v635
    %v644 = vmax.f32 %v534, %v640
    %s645 = sld [smem:[#allocation2 + $0x9]]
    %v646 = vstv %s645
    %v647 = vmul.f32 %v64, %v646
    %v648 = vmul.f32 %v65, %v646
    %v649 = vmul.f32 %v66, %v646
    %v650 = vmul.f32 %v67, %v646
    %v651 = vadd.f32 %v647, 0.0
    %v652 = vadd.f32 %v648, 0.0
    %v653 = vadd.f32 %v649, 0.0
    %v654 = vadd.f32 %v650, 0.0
    %s655 = sld [smem:[#allocation2 + $0xa]]
    %v656 = vstv %s655
    %v657 = vmul.f32 %v69, %v656
    %v658 = vmul.f32 %v70, %v656
    %v659 = vmul.f32 %v71, %v656
    %v660 = vmul.f32 %v72, %v656
    %v661 = vadd.f32 %v651, %v657
    %v662 = vadd.f32 %v652, %v658
    %v663 = vadd.f32 %v653, %v659
    %v664 = vadd.f32 %v654, %v660
    %s665 = sld [smem:[#allocation2 + $0xb]]
    %v666 = vstv %s665
    %v667 = vmul.f32 %v74, %v666
    %v668 = vmul.f32 %v75, %v666
    %v669 = vmul.f32 %v76, %v666
    %v670 = vmul.f32 %v77, %v666
    %v671 = vadd.f32 %v661, %v667
    %v672 = vadd.f32 %v662, %v668
    %v673 = vadd.f32 %v663, %v669
    %v674 = vadd.f32 %v664, %v670
    %s675 = sld [smem:[#allocation2 + $0xc]]
    %v676 = vstv %s675
    %v677 = vmul.f32 %v79, %v676
    %v678 = vmul.f32 %v80, %v676
    %v679 = vmul.f32 %v81, %v676
    %v680 = vmul.f32 %v82, %v676
    %v681 = vadd.f32 %v671, %v677
    %v682 = vadd.f32 %v672, %v678
    %v683 = vadd.f32 %v673, %v679
    %v684 = vadd.f32 %v674, %v680
    %s685 = sld [smem:[#allocation2 + $0xd]]
    %v686 = vstv %s685
    %v687 = vmul.f32 %v84, %v686
    %v688 = vmul.f32 %v85, %v686
    %v689 = vmul.f32 %v86, %v686
    %v690 = vmul.f32 %v87, %v686
    %v691 = vadd.f32 %v681, %v687
    %v692 = vadd.f32 %v682, %v688
    %v693 = vadd.f32 %v683, %v689
    %v694 = vadd.f32 %v684, %v690
    %s695 = sld [smem:[#allocation2 + $0xe]]
    %v696 = vstv %s695
    %v697 = vmul.f32 %v89, %v696
    %v698 = vmul.f32 %v90, %v696
    %v699 = vmul.f32 %v91, %v696
    %v700 = vmul.f32 %v92, %v696
    %v701 = vadd.f32 %v691, %v697
    %v702 = vadd.f32 %v692, %v698
    %v703 = vadd.f32 %v693, %v699
    %v704 = vadd.f32 %v694, %v700
    %s705 = sld [smem:[#allocation2 + $0xf]]
    %v706 = vstv %s705
    %v707 = vmul.f32 %v94, %v706
    %v708 = vmul.f32 %v95, %v706
    %v709 = vmul.f32 %v96, %v706
    %v710 = vmul.f32 %v97, %v706
    %v711 = vadd.f32 %v701, %v707
    %v712 = vadd.f32 %v702, %v708
    %v713 = vadd.f32 %v703, %v709
    %v714 = vadd.f32 %v704, %v710
    %s715 = sld [smem:[#allocation2 + $0x10]]
    %v716 = vstv %s715
    %v717 = vmul.f32 %v99, %v716
    %v718 = vmul.f32 %v100, %v716
    %v719 = vmul.f32 %v101, %v716
    %v720 = vmul.f32 %v102, %v716
    %v721 = vadd.f32 %v711, %v717
    %v722 = vadd.f32 %v712, %v718
    %v723 = vadd.f32 %v713, %v719
    %v724 = vadd.f32 %v714, %v720
    %s725 = sld [smem:[#allocation2 + $0x11]]
    %v726 = vstv %s725
    %v727 = vmul.f32 %v104, %v726
    %v728 = vmul.f32 %v105, %v726
    %v729 = vmul.f32 %v106, %v726
    %v730 = vmul.f32 %v107, %v726
    %v731 = vadd.f32 %v721, %v727
    %v732 = vadd.f32 %v722, %v728
    %v733 = vadd.f32 %v723, %v729
    %v734 = vadd.f32 %v724, %v730
    %s735 = sld [smem:[#allocation5 + $0x1]]
    %v736 = vstv %s735
    %v737 = vadd.f32 %v731, %v736
    %v738 = vadd.f32 %v732, %v736
    %v739 = vadd.f32 %v733, %v736
    %v740 = vadd.f32 %v734, %v736
    %v741 = vmax.f32 %v737, 0.0
    %v742 = vmax.f32 %v738, 0.0
    %v743 = vmax.f32 %v739, 0.0
    %v744 = vmax.f32 %v740, 0.0
    %745 = vmatprep.subr.mxu0 0.0
    %746 = vmatpush1.msra.mxu0 %v208
    %747 = vmatprep.subr.mxu0 0.0
    %748 = vmatpush1.msra.mxu0 %v209
    %749 = vmatprep.subr.mxu0 0.0
    %750 = vmatpush1.msra.mxu0 %v210
    %751 = vmatprep.subr.mxu0 0.0
    %752 = vmatpush1.msra.mxu0 %v211
    %753 = vmatprep.subr.mxu0 0.0
    %754 = vmatpush1.msra.mxu0 %v212
    %755 = vmatprep.subr.mxu0 0.0
    %756 = vmatpush1.msra.mxu0 %v213
    %757 = vmatprep.subr.mxu0 0.0
    %758 = vmatpush1.msra.mxu0 %v214
    %759 = vmatprep.subr.mxu0 0.0
    %760 = vmatpush1.msra.mxu0 %v215
    %761 = vmatprep.subr.mxu0 0.0
    %762 = vmatpush1.msra.mxu0 %v216
    %763 = vmatprep.subr.mxu0 0.0
    %764 = vmatpush1.msra.mxu0 %v217
    %765 = vmatprep.subr.mxu0 0.0
    %766 = vmatpush1.msra.mxu0 %v218
    %767 = vmatprep.subr.mxu0 0.0
    %768 = vmatpush1.msra.mxu0 %v219
    %769 = vmatprep.subr.mxu0 0.0
    %770 = vmatpush1.msra.mxu0 %v220
    %771 = vmatprep.subr.mxu0 0.0
    %772 = vmatpush1.msra.mxu0 %v221
    %773 = vmatprep.subr.mxu0 0.0
    %774 = vmatpush1.msra.mxu0 %v222
    %775 = vmatprep.subr.mxu0 0.0
    %776 = vmatpush1.msra.mxu0 %v223
    %777 = vmatprep.subr.mxu0 0.0
    %778 = vmatpush1.msra.mxu0 %v224
    %779 = vmatprep.subr.mxu0 0.0
    %780 = vmatpush1.msra.mxu0 %v225
    %781 = vmatprep.subr.mxu0 0.0
    %782 = vmatpush1.msra.mxu0 %v226
    %783 = vmatprep.subr.mxu0 0.0
    %784 = vmatpush1.msra.mxu0 %v227
    %785 = vmatprep.subr.mxu0 0.0
    %786 = vmatpush1.msra.mxu0 %v228
    %787 = vmatprep.subr.mxu0 0.0
    %788 = vmatpush1.msra.mxu0 %v229
    %789 = vmatprep.subr.mxu0 0.0
    %790 = vmatpush1.msra.mxu0 %v230
    %791 = vmatprep.subr.mxu0 0.0
    %792 = vmatpush1.msra.mxu0 %v231
    %793 = vmatprep.subr.mxu0 0.0
    %794 = vmatpush1.msra.mxu0 %v232
    %795 = vmatprep.subr.mxu0 0.0
    %796 = vmatpush1.msra.mxu0 %v233
    %797 = vmatprep.subr.mxu0 0.0
    %798 = vmatpush1.msra.mxu0 %v234
    %799 = vmatprep.subr.mxu0 0.0
    %800 = vmatpush1.msra.mxu0 %v235
    %801 = vmatprep.subr.mxu0 0.0
    %802 = vmatpush1.msra.mxu0 %v236
    %803 = vmatprep.subr.mxu0 0.0
    %804 = vmatpush1.msra.mxu0 %v237
    %805 = vmatprep.subr.mxu0 0.0
    %806 = vmatpush1.msra.mxu0 %v238
    %807 = vmatprep.subr.mxu0 0.0
    %808 = vmatpush1.msra.mxu0 %v239
    %809 = vmatprep.mubr.f32.mxu0 %v742
    %810 = vmatmul.mubr.f32.gmra.mrb[0].mxu0 %v741
    %v811 = vpop.f32.mrb[0].mxu0
    %v812 = vadd.f32 0.0, %v811
    %v813 = vpop.f32.mrb[0].mxu0
    %814 = vmatprep.mubr.f32.mxu0 %v744
    %815 = vmatmul.mubr.f32.gmra.mrb[0].mxu0 %v743
    %v816 = vpop.f32.mrb[0].mxu0
    %v817 = vadd.f32 0.0, %v816
    %v818 = vpop.f32.mrb[0].mxu0
    %819 = vdwg.mxu0
    %820 = vmatprep.subr.mxu0 0.0
    %821 = vmatpush1.msra.mxu0 %v316
    %822 = vmatprep.subr.mxu0 0.0
    %823 = vmatpush1.msra.mxu0 %v317
    %824 = vmatprep.subr.mxu0 0.0
    %825 = vmatpush1.msra.mxu0 %v318
    %826 = vmatprep.subr.mxu0 0.0
    %827 = vmatpush1.msra.mxu0 %v319
    %828 = vmatprep.subr.mxu0 0.0
    %829 = vmatpush1.msra.mxu0 %v320
    %830 = vmatprep.subr.mxu0 0.0
    %831 = vmatpush1.msra.mxu0 %v321
    %832 = vmatprep.subr.mxu0 0.0
    %833 = vmatpush1.msra.mxu0 %v322
    %834 = vmatprep.subr.mxu0 0.0
    %835 = vmatpush1.msra.mxu0 %v323
    %836 = vmatprep.subr.mxu0 0.0
    %837 = vmatpush1.msra.mxu0 %v324
    %838 = vmatprep.subr.mxu0 0.0
    %839 = vmatpush1.msra.mxu0 %v325
    %840 = vmatprep.subr.mxu0 0.0
    %841 = vmatpush1.msra.mxu0 %v326
    %842 = vmatprep.subr.mxu0 0.0
    %843 = vmatpush1.msra.mxu0 %v327
    %844 = vmatprep.subr.mxu0 0.0
    %845 = vmatpush1.msra.mxu0 %v328
    %846 = vmatprep.subr.mxu0 0.0
    %847 = vmatpush1.msra.mxu0 %v329
    %848 = vmatprep.subr.mxu0 0.0
    %849 = vmatpush1.msra.mxu0 %v330
    %850 = vmatprep.subr.mxu0 0.0
    %851 = vmatpush1.msra.mxu0 %v331
    %852 = vmatprep.subr.mxu0 0.0
    %853 = vmatpush1.msra.mxu0 %v332
    %854 = vmatprep.subr.mxu0 0.0
    %855 = vmatpush1.msra.mxu0 %v333
    %856 = vmatprep.subr.mxu0 0.0
    %857 = vmatpush1.msra.mxu0 %v334
    %858 = vmatprep.subr.mxu0 0.0
    %859 = vmatpush1.msra.mxu0 %v335
    %860 = vmatprep.subr.mxu0 0.0
    %861 = vmatpush1.msra.mxu0 %v336
    %862 = vmatprep.subr.mxu0 0.0
    %863 = vmatpush1.msra.mxu0 %v337
    %864 = vmatprep.subr.mxu0 0.0
    %865 = vmatpush1.msra.mxu0 %v338
    %866 = vmatprep.subr.mxu0 0.0
    %867 = vmatpush1.msra.mxu0 %v339
    %868 = vmatprep.subr.mxu0 0.0
    %869 = vmatpush1.msra.mxu0 %v340
    %870 = vmatprep.subr.mxu0 0.0
    %871 = vmatpush1.msra.mxu0 %v341
    %872 = vmatprep.subr.mxu0 0.0
    %873 = vmatpush1.msra.mxu0 %v342
    %874 = vmatprep.subr.mxu0 0.0
    %875 = vmatpush1.msra.mxu0 %v343
    %876 = vmatprep.subr.mxu0 0.0
    %877 = vmatpush1.msra.mxu0 %v344
    %878 = vmatprep.subr.mxu0 0.0
    %879 = vmatpush1.msra.mxu0 %v345
    %880 = vmatprep.subr.mxu0 0.0
    %881 = vmatpush1.msra.mxu0 %v346
    %882 = vmatprep.subr.mxu0 0.0
    %883 = vmatpush1.msra.mxu0 %v347
    %884 = vmatprep.mubr.f32.mxu0 %v742
    %885 = vmatmul.mubr.f32.gmra.mrb[0].mxu0 %v741
    %v886 = vpop.f32.mrb[0].mxu0
    %v887 = vadd.f32 0.0, %v886
    %v888 = vpop.f32.mrb[0].mxu0
    %889 = vmatprep.mubr.f32.mxu0 %v744
    %890 = vmatmul.mubr.f32.gmra.mrb[0].mxu0 %v743
    %v891 = vpop.f32.mrb[0].mxu0
    %v892 = vadd.f32 0.0, %v891
    %v893 = vpop.f32.mrb[0].mxu0
    %894 = vdwg.mxu0
    %v895 = vmax.f32 %v812, %v887
    %v896 = vmax.f32 %v817, %v892
    %897 = vmatprep.subr.mxu0 0.0
    %898 = vmatpush1.msra.mxu0 %v426
    %899 = vmatprep.subr.mxu0 0.0
    %900 = vmatpush1.msra.mxu0 %v427
    %901 = vmatprep.subr.mxu0 0.0
    %902 = vmatpush1.msra.mxu0 %v428
    %903 = vmatprep.subr.mxu0 0.0
    %904 = vmatpush1.msra.mxu0 %v429
    %905 = vmatprep.subr.mxu0 0.0
    %906 = vmatpush1.msra.mxu0 %v430
    %907 = vmatprep.subr.mxu0 0.0
    %908 = vmatpush1.msra.mxu0 %v431
    %909 = vmatprep.subr.mxu0 0.0
    %910 = vmatpush1.msra.mxu0 %v432
    %911 = vmatprep.subr.mxu0 0.0
    %912 = vmatpush1.msra.mxu0 %v433
    %913 = vmatprep.subr.mxu0 0.0
    %914 = vmatpush1.msra.mxu0 %v434
    %915 = vmatprep.subr.mxu0 0.0
    %916 = vmatpush1.msra.mxu0 %v435
    %917 = vmatprep.subr.mxu0 0.0
    %918 = vmatpush1.msra.mxu0 %v436
    %919 = vmatprep.subr.mxu0 0.0
    %920 = vmatpush1.msra.mxu0 %v437
    %921 = vmatprep.subr.mxu0 0.0
    %922 = vmatpush1.msra.mxu0 %v438
    %923 = vmatprep.subr.mxu0 0.0
    %924 = vmatpush1.msra.mxu0 %v439
    %925 = vmatprep.subr.mxu0 0.0
    %926 = vmatpush1.msra.mxu0 %v440
    %927 = vmatprep.subr.mxu0 0.0
    %928 = vmatpush1.msra.mxu0 %v441
    %929 = vmatprep.subr.mxu0 0.0
    %930 = vmatpush1.msra.mxu0 %v442
    %931 = vmatprep.subr.mxu0 0.0
    %932 = vmatpush1.msra.mxu0 %v443
    %933 = vmatprep.subr.mxu0 0.0
    %934 = vmatpush1.msra.mxu0 %v444
    %935 = vmatprep.subr.mxu0 0.0
    %936 = vmatpush1.msra.mxu0 %v445
    %937 = vmatprep.subr.mxu0 0.0
    %938 = vmatpush1.msra.mxu0 %v446
    %939 = vmatprep.subr.mxu0 0.0
    %940 = vmatpush1.msra.mxu0 %v447
    %941 = vmatprep.subr.mxu0 0.0
    %942 = vmatpush1.msra.mxu0 %v448
    %943 = vmatprep.subr.mxu0 0.0
    %944 = vmatpush1.msra.mxu0 %v449
    %945 = vmatprep.subr.mxu0 0.0
    %946 = vmatpush1.msra.mxu0 %v450
    %947 = vmatprep.subr.mxu0 0.0
    %948 = vmatpush1.msra.mxu0 %v451
    %949 = vmatprep.subr.mxu0 0.0
    %950 = vmatpush1.msra.mxu0 %v452
    %951 = vmatprep.subr.mxu0 0.0
    %952 = vmatpush1.msra.mxu0 %v453
    %953 = vmatprep.subr.mxu0 0.0
    %954 = vmatpush1.msra.mxu0 %v454
    %955 = vmatprep.subr.mxu0 0.0
    %956 = vmatpush1.msra.mxu0 %v455
    %957 = vmatprep.subr.mxu0 0.0
    %958 = vmatpush1.msra.mxu0 %v456
    %959 = vmatprep.subr.mxu0 0.0
    %960 = vmatpush1.msra.mxu0 %v457
    %961 = vmatprep.mubr.f32.mxu0 %v742
    %962 = vmatmul.mubr.f32.gmra.mrb[0].mxu0 %v741
    %v963 = vpop.f32.mrb[0].mxu0
    %v964 = vadd.f32 0.0, %v963
    %v965 = vpop.f32.mrb[0].mxu0
    %966 = vmatprep.mubr.f32.mxu0 %v744
    %967 = vmatmul.mubr.f32.gmra.mrb[0].mxu0 %v743
    %v968 = vpop.f32.mrb[0].mxu0
    %v969 = vadd.f32 0.0, %v968
    %v970 = vpop.f32.mrb[0].mxu0
    %971 = vdwg.mxu0
    %v972 = vmax.f32 %v895, %v964
    %v973 = vmax.f32 %v896, %v969
    %974 = vmatprep.subr.mxu0 0.0
    %975 = vmatpush1.msra.mxu0 %v536
    %976 = vmatprep.subr.mxu0 0.0
    %977 = vmatpush1.msra.mxu0 %v537
    %978 = vmatprep.subr.mxu0 0.0
    %979 = vmatpush1.msra.mxu0 %v538
    %980 = vmatprep.subr.mxu0 0.0
    %981 = vmatpush1.msra.mxu0 %v539
    %982 = vmatprep.subr.mxu0 0.0
    %983 = vmatpush1.msra.mxu0 %v540
    %984 = vmatprep.subr.mxu0 0.0
    %985 = vmatpush1.msra.mxu0 %v541
    %986 = vmatprep.subr.mxu0 0.0
    %987 = vmatpush1.msra.mxu0 %v542
    %988 = vmatprep.subr.mxu0 0.0
    %989 = vmatpush1.msra.mxu0 %v543
    %990 = vmatprep.subr.mxu0 0.0
    %991 = vmatpush1.msra.mxu0 %v544
    %992 = vmatprep.subr.mxu0 0.0
    %993 = vmatpush1.msra.mxu0 %v545
    %994 = vmatprep.subr.mxu0 0.0
    %995 = vmatpush1.msra.mxu0 %v546
    %996 = vmatprep.subr.mxu0 0.0
    %997 = vmatpush1.msra.mxu0 %v547
    %998 = vmatprep.subr.mxu0 0.0
    %999 = vmatpush1.msra.mxu0 %v548
    %1000 = vmatprep.subr.mxu0 0.0
    %1001 = vmatpush1.msra.mxu0 %v549
    %1002 = vmatprep.subr.mxu0 0.0
    %1003 = vmatpush1.msra.mxu0 %v550
    %1004 = vmatprep.subr.mxu0 0.0
    %1005 = vmatpush1.msra.mxu0 %v551
    %1006 = vmatprep.subr.mxu0 0.0
    %1007 = vmatpush1.msra.mxu0 %v552
    %1008 = vmatprep.subr.mxu0 0.0
    %1009 = vmatpush1.msra.mxu0 %v553
    %1010 = vmatprep.subr.mxu0 0.0
    %1011 = vmatpush1.msra.mxu0 %v554
    %1012 = vmatprep.subr.mxu0 0.0
    %1013 = vmatpush1.msra.mxu0 %v555
    %1014 = vmatprep.subr.mxu0 0.0
    %1015 = vmatpush1.msra.mxu0 %v556
    %1016 = vmatprep.subr.mxu0 0.0
    %1017 = vmatpush1.msra.mxu0 %v557
    %1018 = vmatprep.subr.mxu0 0.0
    %1019 = vmatpush1.msra.mxu0 %v558
    %1020 = vmatprep.subr.mxu0 0.0
    %1021 = vmatpush1.msra.mxu0 %v559
    %1022 = vmatprep.subr.mxu0 0.0
    %1023 = vmatpush1.msra.mxu0 %v560
    %1024 = vmatprep.subr.mxu0 0.0
    %1025 = vmatpush1.msra.mxu0 %v561
    %1026 = vmatprep.subr.mxu0 0.0
    %1027 = vmatpush1.msra.mxu0 %v562
    %1028 = vmatprep.subr.mxu0 0.0
    %1029 = vmatpush1.msra.mxu0 %v563
    %1030 = vmatprep.subr.mxu0 0.0
    %1031 = vmatpush1.msra.mxu0 %v564
    %1032 = vmatprep.subr.mxu0 0.0
    %1033 = vmatpush1.msra.mxu0 %v565
    %1034 = vmatprep.subr.mxu0 0.0
    %1035 = vmatpush1.msra.mxu0 %v566
    %1036 = vmatprep.subr.mxu0 0.0
    %1037 = vmatpush1.msra.mxu0 %v567
    %1038 = vmatprep.mubr.f32.mxu0 %v742
    %1039 = vmatmul.mubr.f32.gmra.mrb[0].mxu0 %v741
    %v1040 = vpop.f32.mrb[0].mxu0
    %v1041 = vadd.f32 0.0, %v1040
    %v1042 = vpop.f32.mrb[0].mxu0
    %1043 = vmatprep.mubr.f32.mxu0 %v744
    %1044 = vmatmul.mubr.f32.gmra.mrb[0].mxu0 %v743
    %v1045 = vpop.f32.mrb[0].mxu0
    %v1046 = vadd.f32 0.0, %v1045
    %v1047 = vpop.f32.mrb[0].mxu0
    %1048 = vdwg.mxu0
    %v1049 = vmax.f32 %v972, %v1041
    %v1050 = vmax.f32 %v973, %v1046
    %s1051 = sld [smem:[#allocation2 + $0x12]]
    %v1052 = vstv %s1051
    %v1053 = vmul.f32 %v64, %v1052
    %v1054 = vmul.f32 %v65, %v1052
    %v1055 = vmul.f32 %v66, %v1052
    %v1056 = vmul.f32 %v67, %v1052
    %v1057 = vadd.f32 %v1053, 0.0
    %v1058 = vadd.f32 %v1054, 0.0
    %v1059 = vadd.f32 %v1055, 0.0
    %v1060 = vadd.f32 %v1056, 0.0
    %s1061 = sld [smem:[#allocation2 + $0x13]]
    %v1062 = vstv %s1061
    %v1063 = vmul.f32 %v69, %v1062
    %v1064 = vmul.f32 %v70, %v1062
    %v1065 = vmul.f32 %v71, %v1062
    %v1066 = vmul.f32 %v72, %v1062
    %v1067 = vadd.f32 %v1057, %v1063
    %v1068 = vadd.f32 %v1058, %v1064
    %v1069 = vadd.f32 %v1059, %v1065
    %v1070 = vadd.f32 %v1060, %v1066
    %s1071 = sld [smem:[#allocation2 + $0x14]]
    %v1072 = vstv %s1071
    %v1073 = vmul.f32 %v74, %v1072
    %v1074 = vmul.f32 %v75, %v1072
    %v1075 = vmul.f32 %v76, %v1072
    %v1076 = vmul.f32 %v77, %v1072
    %v1077 = vadd.f32 %v1067, %v1073
    %v1078 = vadd.f32 %v1068, %v1074
    %v1079 = vadd.f32 %v1069, %v1075
    %v1080 = vadd.f32 %v1070, %v1076
    %s1081 = sld [smem:[#allocation2 + $0x15]]
    %v1082 = vstv %s1081
    %v1083 = vmul.f32 %v79, %v1082
    %v1084 = vmul.f32 %v80, %v1082
    %v1085 = vmul.f32 %v81, %v1082
    %v1086 = vmul.f32 %v82, %v1082
    %v1087 = vadd.f32 %v1077, %v1083
    %v1088 = vadd.f32 %v1078, %v1084
    %v1089 = vadd.f32 %v1079, %v1085
    %v1090 = vadd.f32 %v1080, %v1086
    %s1091 = sld [smem:[#allocation2 + $0x16]]
    %v1092 = vstv %s1091
    %v1093 = vmul.f32 %v84, %v1092
    %v1094 = vmul.f32 %v85, %v1092
    %v1095 = vmul.f32 %v86, %v1092
    %v1096 = vmul.f32 %v87, %v1092
    %v1097 = vadd.f32 %v1087, %v1093
    %v1098 = vadd.f32 %v1088, %v1094
    %v1099 = vadd.f32 %v1089, %v1095
    %v1100 = vadd.f32 %v1090, %v1096
    %s1101 = sld [smem:[#allocation2 + $0x17]]
    %v1102 = vstv %s1101
    %v1103 = vmul.f32 %v89, %v1102
    %v1104 = vmul.f32 %v90, %v1102
    %v1105 = vmul.f32 %v91, %v1102
    %v1106 = vmul.f32 %v92, %v1102
    %v1107 = vadd.f32 %v1097, %v1103
    %v1108 = vadd.f32 %v1098, %v1104
    %v1109 = vadd.f32 %v1099, %v1105
    %v1110 = vadd.f32 %v1100, %v1106
    %s1111 = sld [smem:[#allocation2 + $0x18]]
    %v1112 = vstv %s1111
    %v1113 = vmul.f32 %v94, %v1112
    %v1114 = vmul.f32 %v95, %v1112
    %v1115 = vmul.f32 %v96, %v1112
    %v1116 = vmul.f32 %v97, %v1112
    %v1117 = vadd.f32 %v1107, %v1113
    %v1118 = vadd.f32 %v1108, %v1114
    %v1119 = vadd.f32 %v1109, %v1115
    %v1120 = vadd.f32 %v1110, %v1116
    %s1121 = sld [smem:[#allocation2 + $0x19]]
    %v1122 = vstv %s1121
    %v1123 = vmul.f32 %v99, %v1122
    %v1124 = vmul.f32 %v100, %v1122
    %v1125 = vmul.f32 %v101, %v1122
    %v1126 = vmul.f32 %v102, %v1122
    %v1127 = vadd.f32 %v1117, %v1123
    %v1128 = vadd.f32 %v1118, %v1124
    %v1129 = vadd.f32 %v1119, %v1125
    %v1130 = vadd.f32 %v1120, %v1126
    %s1131 = sld [smem:[#allocation2 + $0x1a]]
    %v1132 = vstv %s1131
    %v1133 = vmul.f32 %v104, %v1132
    %v1134 = vmul.f32 %v105, %v1132
    %v1135 = vmul.f32 %v106, %v1132
    %v1136 = vmul.f32 %v107, %v1132
    %v1137 = vadd.f32 %v1127, %v1133
    %v1138 = vadd.f32 %v1128, %v1134
    %v1139 = vadd.f32 %v1129, %v1135
    %v1140 = vadd.f32 %v1130, %v1136
    %s1141 = sld [smem:[#allocation5 + $0x2]]
    %v1142 = vstv %s1141
    %v1143 = vadd.f32 %v1137, %v1142
    %v1144 = vadd.f32 %v1138, %v1142
    %v1145 = vadd.f32 %v1139, %v1142
    %v1146 = vadd.f32 %v1140, %v1142
    %v1147 = vmax.f32 %v1143, 0.0
    %v1148 = vmax.f32 %v1144, 0.0
    %v1149 = vmax.f32 %v1145, 0.0
    %v1150 = vmax.f32 %v1146, 0.0
    %1151 = vmatprep.subr.mxu0 0.0
    %1152 = vmatpush1.msra.mxu0 %v208
    %1153 = vmatprep.subr.mxu0 0.0
    %1154 = vmatpush1.msra.mxu0 %v209
    %1155 = vmatprep.subr.mxu0 0.0
    %1156 = vmatpush1.msra.mxu0 %v210
    %1157 = vmatprep.subr.mxu0 0.0
    %1158 = vmatpush1.msra.mxu0 %v211
    %1159 = vmatprep.subr.mxu0 0.0
    %1160 = vmatpush1.msra.mxu0 %v212
    %1161 = vmatprep.subr.mxu0 0.0
    %1162 = vmatpush1.msra.mxu0 %v213
    %1163 = vmatprep.subr.mxu0 0.0
    %1164 = vmatpush1.msra.mxu0 %v214
    %1165 = vmatprep.subr.mxu0 0.0
    %1166 = vmatpush1.msra.mxu0 %v215
    %1167 = vmatprep.subr.mxu0 0.0
    %1168 = vmatpush1.msra.mxu0 %v216
    %1169 = vmatprep.subr.mxu0 0.0
    %1170 = vmatpush1.msra.mxu0 %v217
    %1171 = vmatprep.subr.mxu0 0.0
    %1172 = vmatpush1.msra.mxu0 %v218
    %1173 = vmatprep.subr.mxu0 0.0
    %1174 = vmatpush1.msra.mxu0 %v219
    %1175 = vmatprep.subr.mxu0 0.0
    %1176 = vmatpush1.msra.mxu0 %v220
    %1177 = vmatprep.subr.mxu0 0.0
    %1178 = vmatpush1.msra.mxu0 %v221
    %1179 = vmatprep.subr.mxu0 0.0
    %1180 = vmatpush1.msra.mxu0 %v222
    %1181 = vmatprep.subr.mxu0 0.0
    %1182 = vmatpush1.msra.mxu0 %v223
    %1183 = vmatprep.subr.mxu0 0.0
    %1184 = vmatpush1.msra.mxu0 %v224
    %1185 = vmatprep.subr.mxu0 0.0
    %1186 = vmatpush1.msra.mxu0 %v225
    %1187 = vmatprep.subr.mxu0 0.0
    %1188 = vmatpush1.msra.mxu0 %v226
    %1189 = vmatprep.subr.mxu0 0.0
    %1190 = vmatpush1.msra.mxu0 %v227
    %1191 = vmatprep.subr.mxu0 0.0
    %1192 = vmatpush1.msra.mxu0 %v228
    %1193 = vmatprep.subr.mxu0 0.0
    %1194 = vmatpush1.msra.mxu0 %v229
    %1195 = vmatprep.subr.mxu0 0.0
    %1196 = vmatpush1.msra.mxu0 %v230
    %1197 = vmatprep.subr.mxu0 0.0
    %1198 = vmatpush1.msra.mxu0 %v231
    %1199 = vmatprep.subr.mxu0 0.0
    %1200 = vmatpush1.msra.mxu0 %v232
    %1201 = vmatprep.subr.mxu0 0.0
    %1202 = vmatpush1.msra.mxu0 %v233
    %1203 = vmatprep.subr.mxu0 0.0
    %1204 = vmatpush1.msra.mxu0 %v234
    %1205 = vmatprep.subr.mxu0 0.0
    %1206 = vmatpush1.msra.mxu0 %v235
    %1207 = vmatprep.subr.mxu0 0.0
    %1208 = vmatpush1.msra.mxu0 %v236
    %1209 = vmatprep.subr.mxu0 0.0
    %1210 = vmatpush1.msra.mxu0 %v237
    %1211 = vmatprep.subr.mxu0 0.0
    %1212 = vmatpush1.msra.mxu0 %v238
    %1213 = vmatprep.subr.mxu0 0.0
    %1214 = vmatpush1.msra.mxu0 %v239
    %1215 = vmatprep.mubr.f32.mxu0 %v1148
    %1216 = vmatmul.mubr.f32.gmra.mrb[0].mxu0 %v1147
    %v1217 = vpop.f32.mrb[0].mxu0
    %v1218 = vadd.f32 0.0, %v1217
    %v1219 = vpop.f32.mrb[0].mxu0
    %1220 = vmatprep.mubr.f32.mxu0 %v1150
    %1221 = vmatmul.mubr.f32.gmra.mrb[0].mxu0 %v1149
    %v1222 = vpop.f32.mrb[0].mxu0
    %v1223 = vadd.f32 0.0, %v1222
    %v1224 = vpop.f32.mrb[0].mxu0
    %1225 = vdwg.mxu0
    %1226 = vmatprep.subr.mxu0 0.0
    %1227 = vmatpush1.msra.mxu0 %v316
    %1228 = vmatprep.subr.mxu0 0.0
    %1229 = vmatpush1.msra.mxu0 %v317
    %1230 = vmatprep.subr.mxu0 0.0
    %1231 = vmatpush1.msra.mxu0 %v318
    %1232 = vmatprep.subr.mxu0 0.0
    %1233 = vmatpush1.msra.mxu0 %v319
    %1234 = vmatprep.subr.mxu0 0.0
    %1235 = vmatpush1.msra.mxu0 %v320
    %1236 = vmatprep.subr.mxu0 0.0
    %1237 = vmatpush1.msra.mxu0 %v321
    %1238 = vmatprep.subr.mxu0 0.0
    %1239 = vmatpush1.msra.mxu0 %v322
    %1240 = vmatprep.subr.mxu0 0.0
    %1241 = vmatpush1.msra.mxu0 %v323
    %1242 = vmatprep.subr.mxu0 0.0
    %1243 = vmatpush1.msra.mxu0 %v324
    %1244 = vmatprep.subr.mxu0 0.0
    %1245 = vmatpush1.msra.mxu0 %v325
    %1246 = vmatprep.subr.mxu0 0.0
    %1247 = vmatpush1.msra.mxu0 %v326
    %1248 = vmatprep.subr.mxu0 0.0
    %1249 = vmatpush1.msra.mxu0 %v327
    %1250 = vmatprep.subr.mxu0 0.0
    %1251 = vmatpush1.msra.mxu0 %v328
    %1252 = vmatprep.subr.mxu0 0.0
    %1253 = vmatpush1.msra.mxu0 %v329
    %1254 = vmatprep.subr.mxu0 0.0
    %1255 = vmatpush1.msra.mxu0 %v330
    %1256 = vmatprep.subr.mxu0 0.0
    %1257 = vmatpush1.msra.mxu0 %v331
    %1258 = vmatprep.subr.mxu0 0.0
    %1259 = vmatpush1.msra.mxu0 %v332
    %1260 = vmatprep.subr.mxu0 0.0
    %1261 = vmatpush1.msra.mxu0 %v333
    %1262 = vmatprep.subr.mxu0 0.0
    %1263 = vmatpush1.msra.mxu0 %v334
    %1264 = vmatprep.subr.mxu0 0.0
    %1265 = vmatpush1.msra.mxu0 %v335
    %1266 = vmatprep.subr.mxu0 0.0
    %1267 = vmatpush1.msra.mxu0 %v336
    %1268 = vmatprep.subr.mxu0 0.0
    %1269 = vmatpush1.msra.mxu0 %v337
    %1270 = vmatprep.subr.mxu0 0.0
    %1271 = vmatpush1.msra.mxu0 %v338
    %1272 = vmatprep.subr.mxu0 0.0
    %1273 = vmatpush1.msra.mxu0 %v339
    %1274 = vmatprep.subr.mxu0 0.0
    %1275 = vmatpush1.msra.mxu0 %v340
    %1276 = vmatprep.subr.mxu0 0.0
    %1277 = vmatpush1.msra.mxu0 %v341
    %1278 = vmatprep.subr.mxu0 0.0
    %1279 = vmatpush1.msra.mxu0 %v342
    %1280 = vmatprep.subr.mxu0 0.0
    %1281 = vmatpush1.msra.mxu0 %v343
    %1282 = vmatprep.subr.mxu0 0.0
    %1283 = vmatpush1.msra.mxu0 %v344
    %1284 = vmatprep.subr.mxu0 0.0
    %1285 = vmatpush1.msra.mxu0 %v345
    %1286 = vmatprep.subr.mxu0 0.0
    %1287 = vmatpush1.msra.mxu0 %v346
    %1288 = vmatprep.subr.mxu0 0.0
    %1289 = vmatpush1.msra.mxu0 %v347
    %1290 = vmatprep.mubr.f32.mxu0 %v1148
    %1291 = vmatmul.mubr.f32.gmra.mrb[0].mxu0 %v1147
    %v1292 = vpop.f32.mrb[0].mxu0
    %v1293 = vadd.f32 0.0, %v1292
    %v1294 = vpop.f32.mrb[0].mxu0
    %1295 = vmatprep.mubr.f32.mxu0 %v1150
    %1296 = vmatmul.mubr.f32.gmra.mrb[0].mxu0 %v1149
    %v1297 = vpop.f32.mrb[0].mxu0
    %v1298 = vadd.f32 0.0, %v1297
    %v1299 = vpop.f32.mrb[0].mxu0
    %1300 = vdwg.mxu0
    %v1301 = vmax.f32 %v1218, %v1293
    %v1302 = vmax.f32 %v1223, %v1298
    %1303 = vmatprep.subr.mxu0 0.0
    %1304 = vmatpush1.msra.mxu0 %v426
    %1305 = vmatprep.subr.mxu0 0.0
    %1306 = vmatpush1.msra.mxu0 %v427
    %1307 = vmatprep.subr.mxu0 0.0
    %1308 = vmatpush1.msra.mxu0 %v428
    %1309 = vmatprep.subr.mxu0 0.0
    %1310 = vmatpush1.msra.mxu0 %v429
    %1311 = vmatprep.subr.mxu0 0.0
    %1312 = vmatpush1.msra.mxu0 %v430
    %1313 = vmatprep.subr.mxu0 0.0
    %1314 = vmatpush1.msra.mxu0 %v431
    %1315 = vmatprep.subr.mxu0 0.0
    %1316 = vmatpush1.msra.mxu0 %v432
    %1317 = vmatprep.subr.mxu0 0.0
    %1318 = vmatpush1.msra.mxu0 %v433
    %1319 = vmatprep.subr.mxu0 0.0
    %1320 = vmatpush1.msra.mxu0 %v434
    %1321 = vmatprep.subr.mxu0 0.0
    %1322 = vmatpush1.msra.mxu0 %v435
    %1323 = vmatprep.subr.mxu0 0.0
    %1324 = vmatpush1.msra.mxu0 %v436
    %1325 = vmatprep.subr.mxu0 0.0
    %1326 = vmatpush1.msra.mxu0 %v437
    %1327 = vmatprep.subr.mxu0 0.0
    %1328 = vmatpush1.msra.mxu0 %v438
    %1329 = vmatprep.subr.mxu0 0.0
    %1330 = vmatpush1.msra.mxu0 %v439
    %1331 = vmatprep.subr.mxu0 0.0
    %1332 = vmatpush1.msra.mxu0 %v440
    %1333 = vmatprep.subr.mxu0 0.0
    %1334 = vmatpush1.msra.mxu0 %v441
    %1335 = vmatprep.subr.mxu0 0.0
    %1336 = vmatpush1.msra.mxu0 %v442
    %1337 = vmatprep.subr.mxu0 0.0
    %1338 = vmatpush1.msra.mxu0 %v443
    %1339 = vmatprep.subr.mxu0 0.0
    %1340 = vmatpush1.msra.mxu0 %v444
    %1341 = vmatprep.subr.mxu0 0.0
    %1342 = vmatpush1.msra.mxu0 %v445
    %1343 = vmatprep.subr.mxu0 0.0
    %1344 = vmatpush1.msra.mxu0 %v446
    %1345 = vmatprep.subr.mxu0 0.0
    %1346 = vmatpush1.msra.mxu0 %v447
    %1347 = vmatprep.subr.mxu0 0.0
    %1348 = vmatpush1.msra.mxu0 %v448
    %1349 = vmatprep.subr.mxu0 0.0
    %1350 = vmatpush1.msra.mxu0 %v449
    %1351 = vmatprep.subr.mxu0 0.0
    %1352 = vmatpush1.msra.mxu0 %v450
    %1353 = vmatprep.subr.mxu0 0.0
    %1354 = vmatpush1.msra.mxu0 %v451
    %1355 = vmatprep.subr.mxu0 0.0
    %1356 = vmatpush1.msra.mxu0 %v452
    %1357 = vmatprep.subr.mxu0 0.0
    %1358 = vmatpush1.msra.mxu0 %v453
    %1359 = vmatprep.subr.mxu0 0.0
    %1360 = vmatpush1.msra.mxu0 %v454
    %1361 = vmatprep.subr.mxu0 0.0
    %1362 = vmatpush1.msra.mxu0 %v455
    %1363 = vmatprep.subr.mxu0 0.0
    %1364 = vmatpush1.msra.mxu0 %v456
    %1365 = vmatprep.subr.mxu0 0.0
    %1366 = vmatpush1.msra.mxu0 %v457
    %1367 = vmatprep.mubr.f32.mxu0 %v1148
    %1368 = vmatmul.mubr.f32.gmra.mrb[0].mxu0 %v1147
    %v1369 = vpop.f32.mrb[0].mxu0
    %v1370 = vadd.f32 0.0, %v1369
    %v1371 = vpop.f32.mrb[0].mxu0
    %1372 = vmatprep.mubr.f32.mxu0 %v1150
    %1373 = vmatmul.mubr.f32.gmra.mrb[0].mxu0 %v1149
    %v1374 = vpop.f32.mrb[0].mxu0
    %v1375 = vadd.f32 0.0, %v1374
    %v1376 = vpop.f32.mrb[0].mxu0
    %1377 = vdwg.mxu0
    %v1378 = vmax.f32 %v1301, %v1370
    %v1379 = vmax.f32 %v1302, %v1375
    %1380 = vmatprep.subr.mxu0 0.0
    %1381 = vmatpush1.msra.mxu0 %v536
    %1382 = vmatprep.subr.mxu0 0.0
    %1383 = vmatpush1.msra.mxu0 %v537
    %1384 = vmatprep.subr.mxu0 0.0
    %1385 = vmatpush1.msra.mxu0 %v538
    %1386 = vmatprep.subr.mxu0 0.0
    %1387 = vmatpush1.msra.mxu0 %v539
    %1388 = vmatprep.subr.mxu0 0.0
    %1389 = vmatpush1.msra.mxu0 %v540
    %1390 = vmatprep.subr.mxu0 0.0
    %1391 = vmatpush1.msra.mxu0 %v541
    %1392 = vmatprep.subr.mxu0 0.0
    %1393 = vmatpush1.msra.mxu0 %v542
    %1394 = vmatprep.subr.mxu0 0.0
    %1395 = vmatpush1.msra.mxu0 %v543
    %1396 = vmatprep.subr.mxu0 0.0
    %1397 = vmatpush1.msra.mxu0 %v544
    %1398 = vmatprep.subr.mxu0 0.0
    %1399 = vmatpush1.msra.mxu0 %v545
    %1400 = vmatprep.subr.mxu0 0.0
    %1401 = vmatpush1.msra.mxu0 %v546
    %1402 = vmatprep.subr.mxu0 0.0
    %1403 = vmatpush1.msra.mxu0 %v547
    %1404 = vmatprep.subr.mxu0 0.0
    %1405 = vmatpush1.msra.mxu0 %v548
    %1406 = vmatprep.subr.mxu0 0.0
    %1407 = vmatpush1.msra.mxu0 %v549
    %1408 = vmatprep.subr.mxu0 0.0
    %1409 = vmatpush1.msra.mxu0 %v550
    %1410 = vmatprep.subr.mxu0 0.0
    %1411 = vmatpush1.msra.mxu0 %v551
    %1412 = vmatprep.subr.mxu0 0.0
    %1413 = vmatpush1.msra.mxu0 %v552
    %1414 = vmatprep.subr.mxu0 0.0
    %1415 = vmatpush1.msra.mxu0 %v553
    %1416 = vmatprep.subr.mxu0 0.0
    %1417 = vmatpush1.msra.mxu0 %v554
    %1418 = vmatprep.subr.mxu0 0.0
    %1419 = vmatpush1.msra.mxu0 %v555
    %1420 = vmatprep.subr.mxu0 0.0
    %1421 = vmatpush1.msra.mxu0 %v556
    %1422 = vmatprep.subr.mxu0 0.0
    %1423 = vmatpush1.msra.mxu0 %v557
    %1424 = vmatprep.subr.mxu0 0.0
    %1425 = vmatpush1.msra.mxu0 %v558
    %1426 = vmatprep.subr.mxu0 0.0
    %1427 = vmatpush1.msra.mxu0 %v559
    %1428 = vmatprep.subr.mxu0 0.0
    %1429 = vmatpush1.msra.mxu0 %v560
    %1430 = vmatprep.subr.mxu0 0.0
    %1431 = vmatpush1.msra.mxu0 %v561
    %1432 = vmatprep.subr.mxu0 0.0
    %1433 = vmatpush1.msra.mxu0 %v562
    %1434 = vmatprep.subr.mxu0 0.0
    %1435 = vmatpush1.msra.mxu0 %v563
    %1436 = vmatprep.subr.mxu0 0.0
    %1437 = vmatpush1.msra.mxu0 %v564
    %1438 = vmatprep.subr.mxu0 0.0
    %1439 = vmatpush1.msra.mxu0 %v565
    %1440 = vmatprep.subr.mxu0 0.0
    %1441 = vmatpush1.msra.mxu0 %v566
    %1442 = vmatprep.subr.mxu0 0.0
    %1443 = vmatpush1.msra.mxu0 %v567
    %1444 = vmatprep.mubr.f32.mxu0 %v1148
    %1445 = vmatmul.mubr.f32.gmra.mrb[0].mxu0 %v1147
    %v1446 = vpop.f32.mrb[0].mxu0
    %v1447 = vadd.f32 0.0, %v1446
    %v1448 = vpop.f32.mrb[0].mxu0
    %1449 = vmatprep.mubr.f32.mxu0 %v1150
    %1450 = vmatmul.mubr.f32.gmra.mrb[0].mxu0 %v1149
    %v1451 = vpop.f32.mrb[0].mxu0
    %v1452 = vadd.f32 0.0, %v1451
    %v1453 = vpop.f32.mrb[0].mxu0
    %1454 = vdwg.mxu0
    %v1455 = vmax.f32 %v1378, %v1447
    %v1456 = vmax.f32 %v1379, %v1452
    %s1457 = sld [smem:[#allocation2 + $0x1b]]
    %v1458 = vstv %s1457
    %v1459 = vmul.f32 %v64, %v1458
    %v1460 = vmul.f32 %v65, %v1458
    %v1461 = vmul.f32 %v66, %v1458
    %v1462 = vmul.f32 %v67, %v1458
    %v1463 = vadd.f32 %v1459, 0.0
    %v1464 = vadd.f32 %v1460, 0.0
    %v1465 = vadd.f32 %v1461, 0.0
    %v1466 = vadd.f32 %v1462, 0.0
    %s1467 = sld [smem:[#allocation2 + $0x1c]]
    %v1468 = vstv %s1467
    %v1469 = vmul.f32 %v69, %v1468
    %v1470 = vmul.f32 %v70, %v1468
    %v1471 = vmul.f32 %v71, %v1468
    %v1472 = vmul.f32 %v72, %v1468
    %v1473 = vadd.f32 %v1463, %v1469
    %v1474 = vadd.f32 %v1464, %v1470
    %v1475 = vadd.f32 %v1465, %v1471
    %v1476 = vadd.f32 %v1466, %v1472
    %s1477 = sld [smem:[#allocation2 + $0x1d]]
    %v1478 = vstv %s1477
    %v1479 = vmul.f32 %v74, %v1478
    %v1480 = vmul.f32 %v75, %v1478
    %v1481 = vmul.f32 %v76, %v1478
    %v1482 = vmul.f32 %v77, %v1478
    %v1483 = vadd.f32 %v1473, %v1479
    %v1484 = vadd.f32 %v1474, %v1480
    %v1485 = vadd.f32 %v1475, %v1481
    %v1486 = vadd.f32 %v1476, %v1482
    %s1487 = sld [smem:[#allocation2 + $0x1e]]
    %v1488 = vstv %s1487
    %v1489 = vmul.f32 %v79, %v1488
    %v1490 = vmul.f32 %v80, %v1488
    %v1491 = vmul.f32 %v81, %v1488
    %v1492 = vmul.f32 %v82, %v1488
    %v1493 = vadd.f32 %v1483, %v1489
    %v1494 = vadd.f32 %v1484, %v1490
    %v1495 = vadd.f32 %v1485, %v1491
    %v1496 = vadd.f32 %v1486, %v1492
    %s1497 = sld [smem:[#allocation2 + $0x1f]]
    %v1498 = vstv %s1497
    %v1499 = vmul.f32 %v84, %v1498
    %v1500 = vmul.f32 %v85, %v1498
    %v1501 = vmul.f32 %v86, %v1498
    %v1502 = vmul.f32 %v87, %v1498
    %v1503 = vadd.f32 %v1493, %v1499
    %v1504 = vadd.f32 %v1494, %v1500
    %v1505 = vadd.f32 %v1495, %v1501
    %v1506 = vadd.f32 %v1496, %v1502
    %s1507 = sld [smem:[#allocation2 + $0x20]]
    %v1508 = vstv %s1507
    %v1509 = vmul.f32 %v89, %v1508
    %v1510 = vmul.f32 %v90, %v1508
    %v1511 = vmul.f32 %v91, %v1508
    %v1512 = vmul.f32 %v92, %v1508
    %v1513 = vadd.f32 %v1503, %v1509
    %v1514 = vadd.f32 %v1504, %v1510
    %v1515 = vadd.f32 %v1505, %v1511
    %v1516 = vadd.f32 %v1506, %v1512
    %s1517 = sld [smem:[#allocation2 + $0x21]]
    %v1518 = vstv %s1517
    %v1519 = vmul.f32 %v94, %v1518
    %v1520 = vmul.f32 %v95, %v1518
    %v1521 = vmul.f32 %v96, %v1518
    %v1522 = vmul.f32 %v97, %v1518
    %v1523 = vadd.f32 %v1513, %v1519
    %v1524 = vadd.f32 %v1514, %v1520
    %v1525 = vadd.f32 %v1515, %v1521
    %v1526 = vadd.f32 %v1516, %v1522
    %s1527 = sld [smem:[#allocation2 + $0x22]]
    %v1528 = vstv %s1527
    %v1529 = vmul.f32 %v99, %v1528
    %v1530 = vmul.f32 %v100, %v1528
    %v1531 = vmul.f32 %v101, %v1528
    %v1532 = vmul.f32 %v102, %v1528
    %v1533 = vadd.f32 %v1523, %v1529
    %v1534 = vadd.f32 %v1524, %v1530
    %v1535 = vadd.f32 %v1525, %v1531
    %v1536 = vadd.f32 %v1526, %v1532
    %s1537 = sld [smem:[#allocation2 + $0x23]]
    %v1538 = vstv %s1537
    %v1539 = vmul.f32 %v104, %v1538
    %v1540 = vmul.f32 %v105, %v1538
    %v1541 = vmul.f32 %v106, %v1538
    %v1542 = vmul.f32 %v107, %v1538
    %v1543 = vadd.f32 %v1533, %v1539
    %v1544 = vadd.f32 %v1534, %v1540
    %v1545 = vadd.f32 %v1535, %v1541
    %v1546 = vadd.f32 %v1536, %v1542
    %s1547 = sld [smem:[#allocation5 + $0x3]]
    %v1548 = vstv %s1547
    %v1549 = vadd.f32 %v1543, %v1548
    %v1550 = vadd.f32 %v1544, %v1548
    %v1551 = vadd.f32 %v1545, %v1548
    %v1552 = vadd.f32 %v1546, %v1548
    %v1553 = vmax.f32 %v1549, 0.0
    %v1554 = vmax.f32 %v1550, 0.0
    %v1555 = vmax.f32 %v1551, 0.0
    %v1556 = vmax.f32 %v1552, 0.0
    %1557 = vmatprep.subr.mxu0 0.0
    %1558 = vmatpush1.msra.mxu0 %v208
    %1559 = vmatprep.subr.mxu0 0.0
    %1560 = vmatpush1.msra.mxu0 %v209
    %1561 = vmatprep.subr.mxu0 0.0
    %1562 = vmatpush1.msra.mxu0 %v210
    %1563 = vmatprep.subr.mxu0 0.0
    %1564 = vmatpush1.msra.mxu0 %v211
    %1565 = vmatprep.subr.mxu0 0.0
    %1566 = vmatpush1.msra.mxu0 %v212
    %1567 = vmatprep.subr.mxu0 0.0
    %1568 = vmatpush1.msra.mxu0 %v213
    %1569 = vmatprep.subr.mxu0 0.0
    %1570 = vmatpush1.msra.mxu0 %v214
    %1571 = vmatprep.subr.mxu0 0.0
    %1572 = vmatpush1.msra.mxu0 %v215
    %1573 = vmatprep.subr.mxu0 0.0
    %1574 = vmatpush1.msra.mxu0 %v216
    %1575 = vmatprep.subr.mxu0 0.0
    %1576 = vmatpush1.msra.mxu0 %v217
    %1577 = vmatprep.subr.mxu0 0.0
    %1578 = vmatpush1.msra.mxu0 %v218
    %1579 = vmatprep.subr.mxu0 0.0
    %1580 = vmatpush1.msra.mxu0 %v219
    %1581 = vmatprep.subr.mxu0 0.0
    %1582 = vmatpush1.msra.mxu0 %v220
    %1583 = vmatprep.subr.mxu0 0.0
    %1584 = vmatpush1.msra.mxu0 %v221
    %1585 = vmatprep.subr.mxu0 0.0
    %1586 = vmatpush1.msra.mxu0 %v222
    %1587 = vmatprep.subr.mxu0 0.0
    %1588 = vmatpush1.msra.mxu0 %v223
    %1589 = vmatprep.subr.mxu0 0.0
    %1590 = vmatpush1.msra.mxu0 %v224
    %1591 = vmatprep.subr.mxu0 0.0
    %1592 = vmatpush1.msra.mxu0 %v225
    %1593 = vmatprep.subr.mxu0 0.0
    %1594 = vmatpush1.msra.mxu0 %v226
    %1595 = vmatprep.subr.mxu0 0.0
    %1596 = vmatpush1.msra.mxu0 %v227
    %1597 = vmatprep.subr.mxu0 0.0
    %1598 = vmatpush1.msra.mxu0 %v228
    %1599 = vmatprep.subr.mxu0 0.0
    %1600 = vmatpush1.msra.mxu0 %v229
    %1601 = vmatprep.subr.mxu0 0.0
    %1602 = vmatpush1.msra.mxu0 %v230
    %1603 = vmatprep.subr.mxu0 0.0
    %1604 = vmatpush1.msra.mxu0 %v231
    %1605 = vmatprep.subr.mxu0 0.0
    %1606 = vmatpush1.msra.mxu0 %v232
    %1607 = vmatprep.subr.mxu0 0.0
    %1608 = vmatpush1.msra.mxu0 %v233
    %1609 = vmatprep.subr.mxu0 0.0
    %1610 = vmatpush1.msra.mxu0 %v234
    %1611 = vmatprep.subr.mxu0 0.0
    %1612 = vmatpush1.msra.mxu0 %v235
    %1613 = vmatprep.subr.mxu0 0.0
    %1614 = vmatpush1.msra.mxu0 %v236
    %1615 = vmatprep.subr.mxu0 0.0
    %1616 = vmatpush1.msra.mxu0 %v237
    %1617 = vmatprep.subr.mxu0 0.0
    %1618 = vmatpush1.msra.mxu0 %v238
    %1619 = vmatprep.subr.mxu0 0.0
    %1620 = vmatpush1.msra.mxu0 %v239
    %1621 = vmatprep.mubr.f32.mxu0 %v1554
    %1622 = vmatmul.mubr.f32.gmra.mrb[0].mxu0 %v1553
    %v1623 = vpop.f32.mrb[0].mxu0
    %v1624 = vadd.f32 0.0, %v1623
    %v1625 = vpop.f32.mrb[0].mxu0
    %1626 = vmatprep.mubr.f32.mxu0 %v1556
    %1627 = vmatmul.mubr.f32.gmra.mrb[0].mxu0 %v1555
    %v1628 = vpop.f32.mrb[0].mxu0
    %v1629 = vadd.f32 0.0, %v1628
    %v1630 = vpop.f32.mrb[0].mxu0
    %1631 = vdwg.mxu0
    %1632 = vmatprep.subr.mxu0 0.0
    %1633 = vmatpush1.msra.mxu0 %v316
    %1634 = vmatprep.subr.mxu0 0.0
    %1635 = vmatpush1.msra.mxu0 %v317
    %1636 = vmatprep.subr.mxu0 0.0
    %1637 = vmatpush1.msra.mxu0 %v318
    %1638 = vmatprep.subr.mxu0 0.0
    %1639 = vmatpush1.msra.mxu0 %v319
    %1640 = vmatprep.subr.mxu0 0.0
    %1641 = vmatpush1.msra.mxu0 %v320
    %1642 = vmatprep.subr.mxu0 0.0
    %1643 = vmatpush1.msra.mxu0 %v321
    %1644 = vmatprep.subr.mxu0 0.0
    %1645 = vmatpush1.msra.mxu0 %v322
    %1646 = vmatprep.subr.mxu0 0.0
    %1647 = vmatpush1.msra.mxu0 %v323
    %1648 = vmatprep.subr.mxu0 0.0
    %1649 = vmatpush1.msra.mxu0 %v324
    %1650 = vmatprep.subr.mxu0 0.0
    %1651 = vmatpush1.msra.mxu0 %v325
    %1652 = vmatprep.subr.mxu0 0.0
    %1653 = vmatpush1.msra.mxu0 %v326
    %1654 = vmatprep.subr.mxu0 0.0
    %1655 = vmatpush1.msra.mxu0 %v327
    %1656 = vmatprep.subr.mxu0 0.0
    %1657 = vmatpush1.msra.mxu0 %v328
    %1658 = vmatprep.subr.mxu0 0.0
    %1659 = vmatpush1.msra.mxu0 %v329
    %1660 = vmatprep.subr.mxu0 0.0
    %1661 = vmatpush1.msra.mxu0 %v330
    %1662 = vmatprep.subr.mxu0 0.0
    %1663 = vmatpush1.msra.mxu0 %v331
    %1664 = vmatprep.subr.mxu0 0.0
    %1665 = vmatpush1.msra.mxu0 %v332
    %1666 = vmatprep.subr.mxu0 0.0
    %1667 = vmatpush1.msra.mxu0 %v333
    %1668 = vmatprep.subr.mxu0 0.0
    %1669 = vmatpush1.msra.mxu0 %v334
    %1670 = vmatprep.subr.mxu0 0.0
    %1671 = vmatpush1.msra.mxu0 %v335
    %1672 = vmatprep.subr.mxu0 0.0
    %1673 = vmatpush1.msra.mxu0 %v336
    %1674 = vmatprep.subr.mxu0 0.0
    %1675 = vmatpush1.msra.mxu0 %v337
    %1676 = vmatprep.subr.mxu0 0.0
    %1677 = vmatpush1.msra.mxu0 %v338
    %1678 = vmatprep.subr.mxu0 0.0
    %1679 = vmatpush1.msra.mxu0 %v339
    %1680 = vmatprep.subr.mxu0 0.0
    %1681 = vmatpush1.msra.mxu0 %v340
    %1682 = vmatprep.subr.mxu0 0.0
    %1683 = vmatpush1.msra.mxu0 %v341
    %1684 = vmatprep.subr.mxu0 0.0
    %1685 = vmatpush1.msra.mxu0 %v342
    %1686 = vmatprep.subr.mxu0 0.0
    %1687 = vmatpush1.msra.mxu0 %v343
    %1688 = vmatprep.subr.mxu0 0.0
    %1689 = vmatpush1.msra.mxu0 %v344
    %1690 = vmatprep.subr.mxu0 0.0
    %1691 = vmatpush1.msra.mxu0 %v345
    %1692 = vmatprep.subr.mxu0 0.0
    %1693 = vmatpush1.msra.mxu0 %v346
    %1694 = vmatprep.subr.mxu0 0.0
    %1695 = vmatpush1.msra.mxu0 %v347
    %1696 = vmatprep.mubr.f32.mxu0 %v1554
    %1697 = vmatmul.mubr.f32.gmra.mrb[0].mxu0 %v1553
    %v1698 = vpop.f32.mrb[0].mxu0
    %v1699 = vadd.f32 0.0, %v1698
    %v1700 = vpop.f32.mrb[0].mxu0
    %1701 = vmatprep.mubr.f32.mxu0 %v1556
    %1702 = vmatmul.mubr.f32.gmra.mrb[0].mxu0 %v1555
    %v1703 = vpop.f32.mrb[0].mxu0
    %v1704 = vadd.f32 0.0, %v1703
    %v1705 = vpop.f32.mrb[0].mxu0
    %1706 = vdwg.mxu0
    %v1707 = vmax.f32 %v1624, %v1699
    %v1708 = vmax.f32 %v1629, %v1704
    %1709 = vmatprep.subr.mxu0 0.0
    %1710 = vmatpush1.msra.mxu0 %v426
    %1711 = vmatprep.subr.mxu0 0.0
    %1712 = vmatpush1.msra.mxu0 %v427
    %1713 = vmatprep.subr.mxu0 0.0
    %1714 = vmatpush1.msra.mxu0 %v428
    %1715 = vmatprep.subr.mxu0 0.0
    %1716 = vmatpush1.msra.mxu0 %v429
    %1717 = vmatprep.subr.mxu0 0.0
    %1718 = vmatpush1.msra.mxu0 %v430
    %1719 = vmatprep.subr.mxu0 0.0
    %1720 = vmatpush1.msra.mxu0 %v431
    %1721 = vmatprep.subr.mxu0 0.0
    %1722 = vmatpush1.msra.mxu0 %v432
    %1723 = vmatprep.subr.mxu0 0.0
    %1724 = vmatpush1.msra.mxu0 %v433
    %1725 = vmatprep.subr.mxu0 0.0
    %1726 = vmatpush1.msra.mxu0 %v434
    %1727 = vmatprep.subr.mxu0 0.0
    %1728 = vmatpush1.msra.mxu0 %v435
    %1729 = vmatprep.subr.mxu0 0.0
    %1730 = vmatpush1.msra.mxu0 %v436
    %1731 = vmatprep.subr.mxu0 0.0
    %1732 = vmatpush1.msra.mxu0 %v437
    %1733 = vmatprep.subr.mxu0 0.0
    %1734 = vmatpush1.msra.mxu0 %v438
    %1735 = vmatprep.subr.mxu0 0.0
    %1736 = vmatpush1.msra.mxu0 %v439
    %1737 = vmatprep.subr.mxu0 0.0
    %1738 = vmatpush1.msra.mxu0 %v440
    %1739 = vmatprep.subr.mxu0 0.0
    %1740 = vmatpush1.msra.mxu0 %v441
    %1741 = vmatprep.subr.mxu0 0.0
    %1742 = vmatpush1.msra.mxu0 %v442
    %1743 = vmatprep.subr.mxu0 0.0
    %1744 = vmatpush1.msra.mxu0 %v443
    %1745 = vmatprep.subr.mxu0 0.0
    %1746 = vmatpush1.msra.mxu0 %v444
    %1747 = vmatprep.subr.mxu0 0.0
    %1748 = vmatpush1.msra.mxu0 %v445
    %1749 = vmatprep.subr.mxu0 0.0
    %1750 = vmatpush1.msra.mxu0 %v446
    %1751 = vmatprep.subr.mxu0 0.0
    %1752 = vmatpush1.msra.mxu0 %v447
    %1753 = vmatprep.subr.mxu0 0.0
    %1754 = vmatpush1.msra.mxu0 %v448
    %1755 = vmatprep.subr.mxu0 0.0
    %1756 = vmatpush1.msra.mxu0 %v449
    %1757 = vmatprep.subr.mxu0 0.0
    %1758 = vmatpush1.msra.mxu0 %v450
    %1759 = vmatprep.subr.mxu0 0.0
    %1760 = vmatpush1.msra.mxu0 %v451
    %1761 = vmatprep.subr.mxu0 0.0
    %1762 = vmatpush1.msra.mxu0 %v452
    %1763 = vmatprep.subr.mxu0 0.0
    %1764 = vmatpush1.msra.mxu0 %v453
    %1765 = vmatprep.subr.mxu0 0.0
    %1766 = vmatpush1.msra.mxu0 %v454
    %1767 = vmatprep.subr.mxu0 0.0
    %1768 = vmatpush1.msra.mxu0 %v455
    %1769 = vmatprep.subr.mxu0 0.0
    %1770 = vmatpush1.msra.mxu0 %v456
    %1771 = vmatprep.subr.mxu0 0.0
    %1772 = vmatpush1.msra.mxu0 %v457
    %1773 = vmatprep.mubr.f32.mxu0 %v1554
    %1774 = vmatmul.mubr.f32.gmra.mrb[0].mxu0 %v1553
    %v1775 = vpop.f32.mrb[0].mxu0
    %v1776 = vadd.f32 0.0, %v1775
    %v1777 = vpop.f32.mrb[0].mxu0
    %1778 = vmatprep.mubr.f32.mxu0 %v1556
    %1779 = vmatmul.mubr.f32.gmra.mrb[0].mxu0 %v1555
    %v1780 = vpop.f32.mrb[0].mxu0
    %v1781 = vadd.f32 0.0, %v1780
    %v1782 = vpop.f32.mrb[0].mxu0
    %1783 = vdwg.mxu0
    %v1784 = vmax.f32 %v1707, %v1776
    %v1785 = vmax.f32 %v1708, %v1781
    %1786 = vmatprep.subr.mxu0 0.0
    %1787 = vmatpush1.msra.mxu0 %v536
    %1788 = vmatprep.subr.mxu0 0.0
    %1789 = vmatpush1.msra.mxu0 %v537
    %1790 = vmatprep.subr.mxu0 0.0
    %1791 = vmatpush1.msra.mxu0 %v538
    %1792 = vmatprep.subr.mxu0 0.0
    %1793 = vmatpush1.msra.mxu0 %v539
    %1794 = vmatprep.subr.mxu0 0.0
    %1795 = vmatpush1.msra.mxu0 %v540
    %1796 = vmatprep.subr.mxu0 0.0
    %1797 = vmatpush1.msra.mxu0 %v541
    %1798 = vmatprep.subr.mxu0 0.0
    %1799 = vmatpush1.msra.mxu0 %v542
    %1800 = vmatprep.subr.mxu0 0.0
    %1801 = vmatpush1.msra.mxu0 %v543
    %1802 = vmatprep.subr.mxu0 0.0
    %1803 = vmatpush1.msra.mxu0 %v544
    %1804 = vmatprep.subr.mxu0 0.0
    %1805 = vmatpush1.msra.mxu0 %v545
    %1806 = vmatprep.subr.mxu0 0.0
    %1807 = vmatpush1.msra.mxu0 %v546
    %1808 = vmatprep.subr.mxu0 0.0
    %1809 = vmatpush1.msra.mxu0 %v547
    %1810 = vmatprep.subr.mxu0 0.0
    %1811 = vmatpush1.msra.mxu0 %v548
    %1812 = vmatprep.subr.mxu0 0.0
    %1813 = vmatpush1.msra.mxu0 %v549
    %1814 = vmatprep.subr.mxu0 0.0
    %1815 = vmatpush1.msra.mxu0 %v550
    %1816 = vmatprep.subr.mxu0 0.0
    %1817 = vmatpush1.msra.mxu0 %v551
    %1818 = vmatprep.subr.mxu0 0.0
    %1819 = vmatpush1.msra.mxu0 %v552
    %1820 = vmatprep.subr.mxu0 0.0
    %1821 = vmatpush1.msra.mxu0 %v553
    %1822 = vmatprep.subr.mxu0 0.0
    %1823 = vmatpush1.msra.mxu0 %v554
    %1824 = vmatprep.subr.mxu0 0.0
    %1825 = vmatpush1.msra.mxu0 %v555
    %1826 = vmatprep.subr.mxu0 0.0
    %1827 = vmatpush1.msra.mxu0 %v556
    %1828 = vmatprep.subr.mxu0 0.0
    %1829 = vmatpush1.msra.mxu0 %v557
    %1830 = vmatprep.subr.mxu0 0.0
    %1831 = vmatpush1.msra.mxu0 %v558
    %1832 = vmatprep.subr.mxu0 0.0
    %1833 = vmatpush1.msra.mxu0 %v559
    %1834 = vmatprep.subr.mxu0 0.0
    %1835 = vmatpush1.msra.mxu0 %v560
    %1836 = vmatprep.subr.mxu0 0.0
    %1837 = vmatpush1.msra.mxu0 %v561
    %1838 = vmatprep.subr.mxu0 0.0
    %1839 = vmatpush1.msra.mxu0 %v562
    %1840 = vmatprep.subr.mxu0 0.0
    %1841 = vmatpush1.msra.mxu0 %v563
    %1842 = vmatprep.subr.mxu0 0.0
    %1843 = vmatpush1.msra.mxu0 %v564
    %1844 = vmatprep.subr.mxu0 0.0
    %1845 = vmatpush1.msra.mxu0 %v565
    %1846 = vmatprep.subr.mxu0 0.0
    %1847 = vmatpush1.msra.mxu0 %v566
    %1848 = vmatprep.subr.mxu0 0.0
    %1849 = vmatpush1.msra.mxu0 %v567
    %1850 = vmatprep.mubr.f32.mxu0 %v1554
    %1851 = vmatmul.mubr.f32.gmra.mrb[0].mxu0 %v1553
    %v1852 = vpop.f32.mrb[0].mxu0
    %v1853 = vadd.f32 0.0, %v1852
    %v1854 = vpop.f32.mrb[0].mxu0
    %1855 = vmatprep.mubr.f32.mxu0 %v1556
    %1856 = vmatmul.mubr.f32.gmra.mrb[0].mxu0 %v1555
    %v1857 = vpop.f32.mrb[0].mxu0
    %v1858 = vadd.f32 0.0, %v1857
    %v1859 = vpop.f32.mrb[0].mxu0
    %1860 = vdwg.mxu0
    %v1861 = vmax.f32 %v1784, %v1853
    %v1862 = vmax.f32 %v1785, %v1858
    %1865 = vrot.lane.b32.xlu0 %v1049, 64
    %v1866 = vpop.permute.xlu0 %1865
    %1867 = vrot.lane.b32.xlu0 %v1050, 64
    %v1868 = vpop.permute.xlu0 %1867
    %1873 = vrot.lane.b32.xlu0 %v1861, 64
    %v1874 = vpop.permute.xlu0 %1873
    %1875 = vrot.lane.b32.xlu0 %v1862, 64
    %v1876 = vpop.permute.xlu0 %1875
    %vm1879 = vcmask 523264
    %v1880 = vsel %vm1879, %v643, %v1866
    %v1881 = vsel %vm1879, %v644, %v1868
    %v1882 = vsel %vm1879, %v1455, %v1874
    %v1883 = vsel %vm1879, %v1456, %v1876
    %v1884 = vld [vmem:[%s4] sm:$0xff]
    %v1885 = vld [vmem:[%s4 + $0x8] sm:$0xff]
    %v1886 = vld [vmem:[%s4 + $0x10] sm:$0xff]
    %v1887 = vld [vmem:[%s4 + $0x18] sm:$0xff]
    %v1888 = vld [vmem:[%s4 + $0x20] sm:$0xff]
    %v1889 = vld [vmem:[%s4 + $0x28] sm:$0xff]
    %v1890 = vld [vmem:[%s4 + $0x30] sm:$0xff]
    %v1891 = vld [vmem:[%s4 + $0x38] sm:$0xff]
    %v1892 = vld [vmem:[%s4 + $0x40] sm:$0xff]
    %v1893 = vld [vmem:[%s4 + $0x48] sm:$0xff]
    %v1894 = vld [vmem:[%s4 + $0x50] sm:$0xff]
    %v1895 = vld [vmem:[%s4 + $0x58] sm:$0xff]
    %v1896 = vld [vmem:[%s4 + $0x60] sm:$0xff]
    %v1897 = vld [vmem:[%s4 + $0x68] sm:$0xff]
    %v1898 = vld [vmem:[%s4 + $0x70] sm:$0xff]
    %v1899 = vld [vmem:[%s4 + $0x78] sm:$0xff]
    %v1900 = vld [vmem:[%s4 + $0x80] sm:$0xff]
    %v1901 = vld [vmem:[%s4 + $0x88] sm:$0xff]
    %v1902 = vld [vmem:[%s4 + $0x90] sm:$0xff]
    %v1903 = vld [vmem:[%s4 + $0x98] sm:$0xff]
    %v1904 = vld [vmem:[%s4 + $0xa0] sm:$0xff]
    %v1905 = vld [vmem:[%s4 + $0xa8] sm:$0xff]
    %v1906 = vld [vmem:[%s4 + $0xb0] sm:$0xff]
    %v1907 = vld [vmem:[%s4 + $0xb8] sm:$0xff]
    %v1908 = vld [vmem:[%s4 + $0xc0] sm:$0xff]
    %v1909 = vld [vmem:[%s4 + $0xc8] sm:$0xff]
    %v1910 = vld [vmem:[%s4 + $0xd0] sm:$0xff]
    %v1911 = vld [vmem:[%s4 + $0xd8] sm:$0xff]
    %v1912 = vld [vmem:[%s4 + $0xe0] sm:$0xff]
    %v1913 = vld [vmem:[%s4 + $0xe8] sm:$0xff]
    %v1914 = vld [vmem:[%s4 + $0xf0] sm:$0xff]
    %v1915 = vld [vmem:[%s4 + $0xf8] sm:$0xff]
    %v1916 = vld [vmem:[%s6] sm:$0x1]
    %v1918 = vlaneseq
    %v1919 = vshrl.u32 %v1918, 7
    %v1920 = vsub.s32 0, %v1919
    %v1921 = vrot.slane %v1916, %v1920
    %1923 = vmatprep.subr.mxu0 0.0
    %1924 = vmatpush1.msra.mxu0 %v1884
    %1925 = vmatprep.subr.mxu0 0.0
    %1926 = vmatpush1.msra.mxu0 %v1885
    %1927 = vmatprep.subr.mxu0 0.0
    %1928 = vmatpush1.msra.mxu0 %v1886
    %1929 = vmatprep.subr.mxu0 0.0
    %1930 = vmatpush1.msra.mxu0 %v1887
    %1931 = vmatprep.subr.mxu0 0.0
    %1932 = vmatpush1.msra.mxu0 %v1888
    %1933 = vmatprep.subr.mxu0 0.0
    %1934 = vmatpush1.msra.mxu0 %v1889
    %1935 = vmatprep.subr.mxu0 0.0
    %1936 = vmatpush1.msra.mxu0 %v1890
    %1937 = vmatprep.subr.mxu0 0.0
    %1938 = vmatpush1.msra.mxu0 %v1891
    %1939 = vmatprep.subr.mxu0 0.0
    %1940 = vmatpush1.msra.mxu0 %v1892
    %1941 = vmatprep.subr.mxu0 0.0
    %1942 = vmatpush1.msra.mxu0 %v1893
    %1943 = vmatprep.subr.mxu0 0.0
    %1944 = vmatpush1.msra.mxu0 %v1894
    %1945 = vmatprep.subr.mxu0 0.0
    %1946 = vmatpush1.msra.mxu0 %v1895
    %1947 = vmatprep.subr.mxu0 0.0
    %1948 = vmatpush1.msra.mxu0 %v1896
    %1949 = vmatprep.subr.mxu0 0.0
    %1950 = vmatpush1.msra.mxu0 %v1897
    %1951 = vmatprep.subr.mxu0 0.0
    %1952 = vmatpush1.msra.mxu0 %v1898
    %1953 = vmatprep.subr.mxu0 0.0
    %1954 = vmatpush1.msra.mxu0 %v1899
    %1955 = vmatprep.subr.mxu0 0.0
    %1956 = vmatpush1.msra.mxu0 %v1900
    %1957 = vmatprep.subr.mxu0 0.0
    %1958 = vmatpush1.msra.mxu0 %v1901
    %1959 = vmatprep.subr.mxu0 0.0
    %1960 = vmatpush1.msra.mxu0 %v1902
    %1961 = vmatprep.subr.mxu0 0.0
    %1962 = vmatpush1.msra.mxu0 %v1903
    %1963 = vmatprep.subr.mxu0 0.0
    %1964 = vmatpush1.msra.mxu0 %v1904
    %1965 = vmatprep.subr.mxu0 0.0
    %1966 = vmatpush1.msra.mxu0 %v1905
    %1967 = vmatprep.subr.mxu0 0.0
    %1968 = vmatpush1.msra.mxu0 %v1906
    %1969 = vmatprep.subr.mxu0 0.0
    %1970 = vmatpush1.msra.mxu0 %v1907
    %1971 = vmatprep.subr.mxu0 0.0
    %1972 = vmatpush1.msra.mxu0 %v1908
    %1973 = vmatprep.subr.mxu0 0.0
    %1974 = vmatpush1.msra.mxu0 %v1909
    %1975 = vmatprep.subr.mxu0 0.0
    %1976 = vmatpush1.msra.mxu0 %v1910
    %1977 = vmatprep.subr.mxu0 0.0
    %1978 = vmatpush1.msra.mxu0 %v1911
    %1979 = vmatprep.subr.mxu0 0.0
    %1980 = vmatpush1.msra.mxu0 %v1912
    %1981 = vmatprep.subr.mxu0 0.0
    %1982 = vmatpush1.msra.mxu0 %v1913
    %1983 = vmatprep.subr.mxu0 0.0
    %1984 = vmatpush1.msra.mxu0 %v1914
    %1985 = vmatprep.subr.mxu0 0.0
    %1986 = vmatpush1.msra.mxu0 %v1915
    %1987 = vmatprep.mubr.f32.mxu0 %v1882
    %1988 = vmatmul.mubr.f32.gmra.mrb[0].mxu0 %v1880
    %v1989 = vpop.f32.mrb[0].mxu0
    %v1990 = vadd.f32 %v1921, %v1989
    %v1991 = vpop.f32.mrb[0].mxu0
    %1992 = vmatprep.mubr.f32.mxu0 %v1883
    %1993 = vmatmul.mubr.f32.gmra.mrb[0].mxu0 %v1881
    %v1994 = vpop.f32.mrb[0].mxu0
    %v1995 = vadd.f32 %v1921, %v1994
    %v1996 = vpop.f32.mrb[0].mxu0
    %1997 = vdwg.mxu0
    %v1998 = vld [vmem:[%s7] sm:$0x3]
    %v1999 = vld [vmem:[%s8] sm:$0x3]
    %v2000 = vld [vmem:[%s5] sm:$0xff]
    %v2001 = vld [vmem:[%s5 + $0x8] sm:$0xff]
    %v2002 = vld [vmem:[%s5 + $0x10] sm:$0xff]
    %v2003 = vld [vmem:[%s5 + $0x18] sm:$0xff]
    %vm2004 = vcmask 261120
    %v2006 = vsel %vm2004, %v1998, 0
    %2008 = vmatprep.subr.mxu0 0.0
    %2009 = vmatpush1.msra.mxu0 %v2000
    %2010 = vmatprep.subr.mxu0 0.0
    %2011 = vmatpush1.msra.mxu0 %v2001
    %2012 = vmatprep.subr.mxu0 0.0
    %2013 = vmatpush1.msra.mxu0 %v2002
    %2014 = vmatprep.subr.mxu0 0.0
    %2015 = vmatpush1.msra.mxu0 %v2003
    %2016 = vmatprep.subr.mxu0 0.0
    %2017 = vmatpush1.msra.mxu0 0.0
    %2018 = vmatprep.subr.mxu0 0.0
    %2019 = vmatpush1.msra.mxu0 0.0
    %2020 = vmatprep.subr.mxu0 0.0
    %2021 = vmatpush1.msra.mxu0 0.0
    %2022 = vmatprep.subr.mxu0 0.0
    %2023 = vmatpush1.msra.mxu0 0.0
    %2024 = vmatprep.subr.mxu0 0.0
    %2025 = vmatpush1.msra.mxu0 0.0
    %2026 = vmatprep.subr.mxu0 0.0
    %2027 = vmatpush1.msra.mxu0 0.0
    %2028 = vmatprep.subr.mxu0 0.0
    %2029 = vmatpush1.msra.mxu0 0.0
    %2030 = vmatprep.subr.mxu0 0.0
    %2031 = vmatpush1.msra.mxu0 0.0
    %2032 = vmatprep.subr.mxu0 0.0
    %2033 = vmatpush1.msra.mxu0 0.0
    %2034 = vmatprep.subr.mxu0 0.0
    %2035 = vmatpush1.msra.mxu0 0.0
    %2036 = vmatprep.subr.mxu0 0.0
    %2037 = vmatpush1.msra.mxu0 0.0
    %2038 = vmatprep.subr.mxu0 0.0
    %2039 = vmatpush1.msra.mxu0 0.0
    %2040 = vmatprep.subr.mxu0 0.0
    %2041 = vmatpush1.msra.mxu0 0.0
    %2042 = vmatprep.subr.mxu0 0.0
    %2043 = vmatpush1.msra.mxu0 0.0
    %2044 = vmatprep.subr.mxu0 0.0
    %2045 = vmatpush1.msra.mxu0 0.0
    %2046 = vmatprep.subr.mxu0 0.0
    %2047 = vmatpush1.msra.mxu0 0.0
    %2048 = vmatprep.subr.mxu0 0.0
    %2049 = vmatpush1.msra.mxu0 0.0
    %2050 = vmatprep.subr.mxu0 0.0
    %2051 = vmatpush1.msra.mxu0 0.0
    %2052 = vmatprep.subr.mxu0 0.0
    %2053 = vmatpush1.msra.mxu0 0.0
    %2054 = vmatprep.subr.mxu0 0.0
    %2055 = vmatpush1.msra.mxu0 0.0
    %2056 = vmatprep.subr.mxu0 0.0
    %2057 = vmatpush1.msra.mxu0 0.0
    %2058 = vmatprep.subr.mxu0 0.0
    %2059 = vmatpush1.msra.mxu0 0.0
    %2060 = vmatprep.subr.mxu0 0.0
    %2061 = vmatpush1.msra.mxu0 0.0
    %2062 = vmatprep.subr.mxu0 0.0
    %2063 = vmatpush1.msra.mxu0 0.0
    %2064 = vmatprep.subr.mxu0 0.0
    %2065 = vmatpush1.msra.mxu0 0.0
    %2066 = vmatprep.subr.mxu0 0.0
    %2067 = vmatpush1.msra.mxu0 0.0
    %2068 = vmatprep.subr.mxu0 0.0
    %2069 = vmatpush1.msra.mxu0 0.0
    %2070 = vmatprep.subr.mxu0 0.0
    %2071 = vmatpush1.msra.mxu0 0.0
    %2072 = vmatprep.mubr.f32.mxu0 0.0
    %2073 = vmatmul.mubr.f32.gmra.mrb[0].mxu0 %v2006
    %v2074 = vpop.f32.mrb[0].mxu0
    %v2075 = vadd.f32 0.0, %v2074
    %v2076 = vpop.f32.mrb[0].mxu0
    %2077 = vdwg.mxu0
    %v2078 = vadd.f32 %v1990, %v2075
    %v2079 = vxor.u32 %v2078, 2147483648
    %v2080 = vmul.f32 %v2079, 1.442695
    %v2081 = vpow.pop %v2080
    %v2082 = vadd.f32 %v2081, 1.0
    %v2083 = vrcp.pop %v2082
    %v2084 = vmul.f32 1.0, %v2083
    %v2085 = vtanh.pop %v2078
    %2087 = vrot.lane.b32.xlu0 %v1999, 32
    %v2088 = vpop.permute.xlu0 %2087
    %v2090 = vmul.f32 %v2084, %v2088
    %2092 = vrot.lane.b32.xlu0 %v2085, 64
    %v2093 = vpop.permute.xlu0 %2092
    %v2095 = vmul.f32 %v2084, %v2093
    %2097 = vrot.lane.b32.xlu0 %v2095, 32
    %v2098 = vpop.permute.xlu0 %2097
    %v2100 = vadd.f32 %v2090, %v2098
    %v2101 = vtanh.pop %v2100
    %2103 = vrot.lane.b32.xlu0 %v2101, 64
    %v2104 = vpop.permute.xlu0 %2103
    %v2106 = vmul.f32 %v2084, %v2104
    %2108 = vrot.lane.b32.xlu0 %v2106, 32
    %v2109 = vpop.permute.xlu0 %2108
    %v2110 = vsel %vm2004, %v2109, 0
    %2112 = vmatprep.subr.mxu0 0.0
    %2113 = vmatpush1.msra.mxu0 %v2000
    %2114 = vmatprep.subr.mxu0 0.0
    %2115 = vmatpush1.msra.mxu0 %v2001
    %2116 = vmatprep.subr.mxu0 0.0
    %2117 = vmatpush1.msra.mxu0 %v2002
    %2118 = vmatprep.subr.mxu0 0.0
    %2119 = vmatpush1.msra.mxu0 %v2003
    %2120 = vmatprep.subr.mxu0 0.0
    %2121 = vmatpush1.msra.mxu0 0.0
    %2122 = vmatprep.subr.mxu0 0.0
    %2123 = vmatpush1.msra.mxu0 0.0
    %2124 = vmatprep.subr.mxu0 0.0
    %2125 = vmatpush1.msra.mxu0 0.0
    %2126 = vmatprep.subr.mxu0 0.0
    %2127 = vmatpush1.msra.mxu0 0.0
    %2128 = vmatprep.subr.mxu0 0.0
    %2129 = vmatpush1.msra.mxu0 0.0
    %2130 = vmatprep.subr.mxu0 0.0
    %2131 = vmatpush1.msra.mxu0 0.0
    %2132 = vmatprep.subr.mxu0 0.0
    %2133 = vmatpush1.msra.mxu0 0.0
    %2134 = vmatprep.subr.mxu0 0.0
    %2135 = vmatpush1.msra.mxu0 0.0
    %2136 = vmatprep.subr.mxu0 0.0
    %2137 = vmatpush1.msra.mxu0 0.0
    %2138 = vmatprep.subr.mxu0 0.0
    %2139 = vmatpush1.msra.mxu0 0.0
    %2140 = vmatprep.subr.mxu0 0.0
    %2141 = vmatpush1.msra.mxu0 0.0
    %2142 = vmatprep.subr.mxu0 0.0
    %2143 = vmatpush1.msra.mxu0 0.0
    %2144 = vmatprep.subr.mxu0 0.0
    %2145 = vmatpush1.msra.mxu0 0.0
    %2146 = vmatprep.subr.mxu0 0.0
    %2147 = vmatpush1.msra.mxu0 0.0
    %2148 = vmatprep.subr.mxu0 0.0
    %2149 = vmatpush1.msra.mxu0 0.0
    %2150 = vmatprep.subr.mxu0 0.0
    %2151 = vmatpush1.msra.mxu0 0.0
    %2152 = vmatprep.subr.mxu0 0.0
    %2153 = vmatpush1.msra.mxu0 0.0
    %2154 = vmatprep.subr.mxu0 0.0
    %2155 = vmatpush1.msra.mxu0 0.0
    %2156 = vmatprep.subr.mxu0 0.0
    %2157 = vmatpush1.msra.mxu0 0.0
    %2158 = vmatprep.subr.mxu0 0.0
    %2159 = vmatpush1.msra.mxu0 0.0
    %2160 = vmatprep.subr.mxu0 0.0
    %2161 = vmatpush1.msra.mxu0 0.0
    %2162 = vmatprep.subr.mxu0 0.0
    %2163 = vmatpush1.msra.mxu0 0.0
    %2164 = vmatprep.subr.mxu0 0.0
    %2165 = vmatpush1.msra.mxu0 0.0
    %2166 = vmatprep.subr.mxu0 0.0
    %2167 = vmatpush1.msra.mxu0 0.0
    %2168 = vmatprep.subr.mxu0 0.0
    %2169 = vmatpush1.msra.mxu0 0.0
    %2170 = vmatprep.subr.mxu0 0.0
    %2171 = vmatpush1.msra.mxu0 0.0
    %2172 = vmatprep.subr.mxu0 0.0
    %2173 = vmatpush1.msra.mxu0 0.0
    %2174 = vmatprep.subr.mxu0 0.0
    %2175 = vmatpush1.msra.mxu0 0.0
    %2176 = vmatprep.mubr.f32.mxu0 0.0
    %2177 = vmatmul.mubr.f32.gmra.mrb[0].mxu0 %v2110
    %v2178 = vpop.f32.mrb[0].mxu0
    %v2179 = vadd.f32 0.0, %v2178
    %v2180 = vpop.f32.mrb[0].mxu0
    %2181 = vdwg.mxu0
    %v2183 = vrot.slane %v2179, 6
    %v2185 = vadd.f32 %v1990, %v2183
    %v2186 = vxor.u32 %v2185, 2147483648
    %v2187 = vmul.f32 %v2186, 1.442695
    %v2188 = vpow.pop %v2187
    %v2189 = vadd.f32 %v2188, 1.0
    %v2190 = vrcp.pop %v2189
    %v2191 = vmul.f32 1.0, %v2190
    %v2192 = vtanh.pop %v2185
    %v2194 = vrot.slane %v2100, 6
    %v2196 = vmul.f32 %v2191, %v2194
    %2198 = vrot.lane.b32.xlu0 %v2192, 64
    %v2199 = vpop.permute.xlu0 %2198
    %v2201 = vmul.f32 %v2191, %v2199
    %2203 = vrot.lane.b32.xlu0 %v2201, 32
    %v2204 = vpop.permute.xlu0 %2203
    %v2206 = vadd.f32 %v2196, %v2204
    %v2207 = vtanh.pop %v2206
    %2209 = vrot.lane.b32.xlu0 %v2207, 64
    %v2210 = vpop.permute.xlu0 %2209
    %v2212 = vmul.f32 %v2191, %v2210
    %v2214 = vrot.slane %v2212, 2
    %2215 = vrot.lane.b32.xlu0 %v2214, 32
    %v2216 = vpop.permute.xlu0 %2215
    %v2217 = vsel %vm2004, %v2216, 0
    %2219 = vmatprep.subr.mxu0 0.0
    %2220 = vmatpush1.msra.mxu0 %v2000
    %2221 = vmatprep.subr.mxu0 0.0
    %2222 = vmatpush1.msra.mxu0 %v2001
    %2223 = vmatprep.subr.mxu0 0.0
    %2224 = vmatpush1.msra.mxu0 %v2002
    %2225 = vmatprep.subr.mxu0 0.0
    %2226 = vmatpush1.msra.mxu0 %v2003
    %2227 = vmatprep.subr.mxu0 0.0
    %2228 = vmatpush1.msra.mxu0 0.0
    %2229 = vmatprep.subr.mxu0 0.0
    %2230 = vmatpush1.msra.mxu0 0.0
    %2231 = vmatprep.subr.mxu0 0.0
    %2232 = vmatpush1.msra.mxu0 0.0
    %2233 = vmatprep.subr.mxu0 0.0
    %2234 = vmatpush1.msra.mxu0 0.0
    %2235 = vmatprep.subr.mxu0 0.0
    %2236 = vmatpush1.msra.mxu0 0.0
    %2237 = vmatprep.subr.mxu0 0.0
    %2238 = vmatpush1.msra.mxu0 0.0
    %2239 = vmatprep.subr.mxu0 0.0
    %2240 = vmatpush1.msra.mxu0 0.0
    %2241 = vmatprep.subr.mxu0 0.0
    %2242 = vmatpush1.msra.mxu0 0.0
    %2243 = vmatprep.subr.mxu0 0.0
    %2244 = vmatpush1.msra.mxu0 0.0
    %2245 = vmatprep.subr.mxu0 0.0
    %2246 = vmatpush1.msra.mxu0 0.0
    %2247 = vmatprep.subr.mxu0 0.0
    %2248 = vmatpush1.msra.mxu0 0.0
    %2249 = vmatprep.subr.mxu0 0.0
    %2250 = vmatpush1.msra.mxu0 0.0
    %2251 = vmatprep.subr.mxu0 0.0
    %2252 = vmatpush1.msra.mxu0 0.0
    %2253 = vmatprep.subr.mxu0 0.0
    %2254 = vmatpush1.msra.mxu0 0.0
    %2255 = vmatprep.subr.mxu0 0.0
    %2256 = vmatpush1.msra.mxu0 0.0
    %2257 = vmatprep.subr.mxu0 0.0
    %2258 = vmatpush1.msra.mxu0 0.0
    %2259 = vmatprep.subr.mxu0 0.0
    %2260 = vmatpush1.msra.mxu0 0.0
    %2261 = vmatprep.subr.mxu0 0.0
    %2262 = vmatpush1.msra.mxu0 0.0
    %2263 = vmatprep.subr.mxu0 0.0
    %2264 = vmatpush1.msra.mxu0 0.0
    %2265 = vmatprep.subr.mxu0 0.0
    %2266 = vmatpush1.msra.mxu0 0.0
    %2267 = vmatprep.subr.mxu0 0.0
    %2268 = vmatpush1.msra.mxu0 0.0
    %2269 = vmatprep.subr.mxu0 0.0
    %2270 = vmatpush1.msra.mxu0 0.0
    %2271 = vmatprep.subr.mxu0 0.0
    %2272 = vmatpush1.msra.mxu0 0.0
    %2273 = vmatprep.subr.mxu0 0.0
    %2274 = vmatpush1.msra.mxu0 0.0
    %2275 = vmatprep.subr.mxu0 0.0
    %2276 = vmatpush1.msra.mxu0 0.0
    %2277 = vmatprep.subr.mxu0 0.0
    %2278 = vmatpush1.msra.mxu0 0.0
    %2279 = vmatprep.subr.mxu0 0.0
    %2280 = vmatpush1.msra.mxu0 0.0
    %2281 = vmatprep.subr.mxu0 0.0
    %2282 = vmatpush1.msra.mxu0 0.0
    %2283 = vmatprep.mubr.f32.mxu0 0.0
    %2284 = vmatmul.mubr.f32.gmra.mrb[0].mxu0 %v2217
    %v2285 = vpop.f32.mrb[0].mxu0
    %v2286 = vadd.f32 0.0, %v2285
    %v2287 = vpop.f32.mrb[0].mxu0
    %2288 = vdwg.mxu0
    %v2290 = vrot.slane %v2286, 4
    %v2292 = vadd.f32 %v1990, %v2290
    %v2293 = vxor.u32 %v2292, 2147483648
    %v2294 = vmul.f32 %v2293, 1.442695
    %v2295 = vpow.pop %v2294
    %v2296 = vadd.f32 %v2295, 1.0
    %v2297 = vrcp.pop %v2296
    %v2298 = vmul.f32 1.0, %v2297
    %v2299 = vtanh.pop %v2292
    %v2301 = vrot.slane %v2206, 6
    %v2303 = vmul.f32 %v2298, %v2301
    %2305 = vrot.lane.b32.xlu0 %v2299, 64
    %v2306 = vpop.permute.xlu0 %2305
    %v2308 = vmul.f32 %v2298, %v2306
    %2310 = vrot.lane.b32.xlu0 %v2308, 32
    %v2311 = vpop.permute.xlu0 %2310
    %v2313 = vadd.f32 %v2303, %v2311
    %v2314 = vtanh.pop %v2313
    %2316 = vrot.lane.b32.xlu0 %v2314, 64
    %v2317 = vpop.permute.xlu0 %2316
    %v2319 = vmul.f32 %v2298, %v2317
    %v2321 = vrot.slane %v2319, 4
    %2322 = vrot.lane.b32.xlu0 %v2321, 32
    %v2323 = vpop.permute.xlu0 %2322
    %v2324 = vsel %vm2004, %v2323, 0
    %2326 = vmatprep.subr.mxu0 0.0
    %2327 = vmatpush1.msra.mxu0 %v2000
    %2328 = vmatprep.subr.mxu0 0.0
    %2329 = vmatpush1.msra.mxu0 %v2001
    %2330 = vmatprep.subr.mxu0 0.0
    %2331 = vmatpush1.msra.mxu0 %v2002
    %2332 = vmatprep.subr.mxu0 0.0
    %2333 = vmatpush1.msra.mxu0 %v2003
    %2334 = vmatprep.subr.mxu0 0.0
    %2335 = vmatpush1.msra.mxu0 0.0
    %2336 = vmatprep.subr.mxu0 0.0
    %2337 = vmatpush1.msra.mxu0 0.0
    %2338 = vmatprep.subr.mxu0 0.0
    %2339 = vmatpush1.msra.mxu0 0.0
    %2340 = vmatprep.subr.mxu0 0.0
    %2341 = vmatpush1.msra.mxu0 0.0
    %2342 = vmatprep.subr.mxu0 0.0
    %2343 = vmatpush1.msra.mxu0 0.0
    %2344 = vmatprep.subr.mxu0 0.0
    %2345 = vmatpush1.msra.mxu0 0.0
    %2346 = vmatprep.subr.mxu0 0.0
    %2347 = vmatpush1.msra.mxu0 0.0
    %2348 = vmatprep.subr.mxu0 0.0
    %2349 = vmatpush1.msra.mxu0 0.0
    %2350 = vmatprep.subr.mxu0 0.0
    %2351 = vmatpush1.msra.mxu0 0.0
    %2352 = vmatprep.subr.mxu0 0.0
    %2353 = vmatpush1.msra.mxu0 0.0
    %2354 = vmatprep.subr.mxu0 0.0
    %2355 = vmatpush1.msra.mxu0 0.0
    %2356 = vmatprep.subr.mxu0 0.0
    %2357 = vmatpush1.msra.mxu0 0.0
    %2358 = vmatprep.subr.mxu0 0.0
    %2359 = vmatpush1.msra.mxu0 0.0
    %2360 = vmatprep.subr.mxu0 0.0
    %2361 = vmatpush1.msra.mxu0 0.0
    %2362 = vmatprep.subr.mxu0 0.0
    %2363 = vmatpush1.msra.mxu0 0.0
    %2364 = vmatprep.subr.mxu0 0.0
    %2365 = vmatpush1.msra.mxu0 0.0
    %2366 = vmatprep.subr.mxu0 0.0
    %2367 = vmatpush1.msra.mxu0 0.0
    %2368 = vmatprep.subr.mxu0 0.0
    %2369 = vmatpush1.msra.mxu0 0.0
    %2370 = vmatprep.subr.mxu0 0.0
    %2371 = vmatpush1.msra.mxu0 0.0
    %2372 = vmatprep.subr.mxu0 0.0
    %2373 = vmatpush1.msra.mxu0 0.0
    %2374 = vmatprep.subr.mxu0 0.0
    %2375 = vmatpush1.msra.mxu0 0.0
    %2376 = vmatprep.subr.mxu0 0.0
    %2377 = vmatpush1.msra.mxu0 0.0
    %2378 = vmatprep.subr.mxu0 0.0
    %2379 = vmatpush1.msra.mxu0 0.0
    %2380 = vmatprep.subr.mxu0 0.0
    %2381 = vmatpush1.msra.mxu0 0.0
    %2382 = vmatprep.subr.mxu0 0.0
    %2383 = vmatpush1.msra.mxu0 0.0
    %2384 = vmatprep.subr.mxu0 0.0
    %2385 = vmatpush1.msra.mxu0 0.0
    %2386 = vmatprep.subr.mxu0 0.0
    %2387 = vmatpush1.msra.mxu0 0.0
    %2388 = vmatprep.subr.mxu0 0.0
    %2389 = vmatpush1.msra.mxu0 0.0
    %2390 = vmatprep.mubr.f32.mxu0 0.0
    %2391 = vmatmul.mubr.f32.gmra.mrb[0].mxu0 %v2324
    %v2392 = vpop.f32.mrb[0].mxu0
    %v2393 = vadd.f32 0.0, %v2392
    %v2394 = vpop.f32.mrb[0].mxu0
    %2395 = vdwg.mxu0
    %v2397 = vrot.slane %v2393, 2
    %v2399 = vadd.f32 %v1990, %v2397
    %v2400 = vxor.u32 %v2399, 2147483648
    %v2401 = vmul.f32 %v2400, 1.442695
    %v2402 = vpow.pop %v2401
    %v2403 = vadd.f32 %v2402, 1.0
    %v2404 = vrcp.pop %v2403
    %v2405 = vmul.f32 1.0, %v2404
    %v2406 = vtanh.pop %v2399
    %v2408 = vrot.slane %v2313, 6
    %v2410 = vmul.f32 %v2405, %v2408
    %2412 = vrot.lane.b32.xlu0 %v2406, 64
    %v2413 = vpop.permute.xlu0 %2412
    %v2415 = vmul.f32 %v2405, %v2413
    %2417 = vrot.lane.b32.xlu0 %v2415, 32
    %v2418 = vpop.permute.xlu0 %2417
    %v2420 = vadd.f32 %v2410, %v2418
    %v2421 = vtanh.pop %v2420
    %2423 = vrot.lane.b32.xlu0 %v2421, 64
    %v2424 = vpop.permute.xlu0 %2423
    %v2426 = vmul.f32 %v2405, %v2424
    %v2428 = vrot.slane %v2426, 6
    %2429 = vrot.lane.b32.xlu0 %v2428, 32
    %v2430 = vpop.permute.xlu0 %2429
    %v2431 = vsel %vm2004, %v2430, 0
    %2433 = vmatprep.subr.mxu0 0.0
    %2434 = vmatpush1.msra.mxu0 %v2000
    %2435 = vmatprep.subr.mxu0 0.0
    %2436 = vmatpush1.msra.mxu0 %v2001
    %2437 = vmatprep.subr.mxu0 0.0
    %2438 = vmatpush1.msra.mxu0 %v2002
    %2439 = vmatprep.subr.mxu0 0.0
    %2440 = vmatpush1.msra.mxu0 %v2003
    %2441 = vmatprep.subr.mxu0 0.0
    %2442 = vmatpush1.msra.mxu0 0.0
    %2443 = vmatprep.subr.mxu0 0.0
    %2444 = vmatpush1.msra.mxu0 0.0
    %2445 = vmatprep.subr.mxu0 0.0
    %2446 = vmatpush1.msra.mxu0 0.0
    %2447 = vmatprep.subr.mxu0 0.0
    %2448 = vmatpush1.msra.mxu0 0.0
    %2449 = vmatprep.subr.mxu0 0.0
    %2450 = vmatpush1.msra.mxu0 0.0
    %2451 = vmatprep.subr.mxu0 0.0
    %2452 = vmatpush1.msra.mxu0 0.0
    %2453 = vmatprep.subr.mxu0 0.0
    %2454 = vmatpush1.msra.mxu0 0.0
    %2455 = vmatprep.subr.mxu0 0.0
    %2456 = vmatpush1.msra.mxu0 0.0
    %2457 = vmatprep.subr.mxu0 0.0
    %2458 = vmatpush1.msra.mxu0 0.0
    %2459 = vmatprep.subr.mxu0 0.0
    %2460 = vmatpush1.msra.mxu0 0.0
    %2461 = vmatprep.subr.mxu0 0.0
    %2462 = vmatpush1.msra.mxu0 0.0
    %2463 = vmatprep.subr.mxu0 0.0
    %2464 = vmatpush1.msra.mxu0 0.0
    %2465 = vmatprep.subr.mxu0 0.0
    %2466 = vmatpush1.msra.mxu0 0.0
    %2467 = vmatprep.subr.mxu0 0.0
    %2468 = vmatpush1.msra.mxu0 0.0
    %2469 = vmatprep.subr.mxu0 0.0
    %2470 = vmatpush1.msra.mxu0 0.0
    %2471 = vmatprep.subr.mxu0 0.0
    %2472 = vmatpush1.msra.mxu0 0.0
    %2473 = vmatprep.subr.mxu0 0.0
    %2474 = vmatpush1.msra.mxu0 0.0
    %2475 = vmatprep.subr.mxu0 0.0
    %2476 = vmatpush1.msra.mxu0 0.0
    %2477 = vmatprep.subr.mxu0 0.0
    %2478 = vmatpush1.msra.mxu0 0.0
    %2479 = vmatprep.subr.mxu0 0.0
    %2480 = vmatpush1.msra.mxu0 0.0
    %2481 = vmatprep.subr.mxu0 0.0
    %2482 = vmatpush1.msra.mxu0 0.0
    %2483 = vmatprep.subr.mxu0 0.0
    %2484 = vmatpush1.msra.mxu0 0.0
    %2485 = vmatprep.subr.mxu0 0.0
    %2486 = vmatpush1.msra.mxu0 0.0
    %2487 = vmatprep.subr.mxu0 0.0
    %2488 = vmatpush1.msra.mxu0 0.0
    %2489 = vmatprep.subr.mxu0 0.0
    %2490 = vmatpush1.msra.mxu0 0.0
    %2491 = vmatprep.subr.mxu0 0.0
    %2492 = vmatpush1.msra.mxu0 0.0
    %2493 = vmatprep.subr.mxu0 0.0
    %2494 = vmatpush1.msra.mxu0 0.0
    %2495 = vmatprep.subr.mxu0 0.0
    %2496 = vmatpush1.msra.mxu0 0.0
    %2497 = vmatprep.mubr.f32.mxu0 0.0
    %2498 = vmatmul.mubr.f32.gmra.mrb[0].mxu0 %v2431
    %v2499 = vpop.f32.mrb[0].mxu0
    %v2500 = vadd.f32 0.0, %v2499
    %v2501 = vpop.f32.mrb[0].mxu0
    %2502 = vdwg.mxu0
    %v2503 = vadd.f32 %v1995, %v2500
    %v2504 = vxor.u32 %v2503, 2147483648
    %v2505 = vmul.f32 %v2504, 1.442695
    %v2506 = vpow.pop %v2505
    %v2507 = vadd.f32 %v2506, 1.0
    %v2508 = vrcp.pop %v2507
    %v2509 = vmul.f32 1.0, %v2508
    %v2510 = vtanh.pop %v2503
    %v2512 = vrot.slane %v2420, 6
    %v2514 = vmul.f32 %v2509, %v2512
    %2516 = vrot.lane.b32.xlu0 %v2510, 64
    %v2517 = vpop.permute.xlu0 %2516
    %v2519 = vmul.f32 %v2509, %v2517
    %2521 = vrot.lane.b32.xlu0 %v2519, 32
    %v2522 = vpop.permute.xlu0 %2521
    %v2524 = vadd.f32 %v2514, %v2522
    %v2525 = vtanh.pop %v2524
    %2527 = vrot.lane.b32.xlu0 %v2525, 64
    %v2528 = vpop.permute.xlu0 %2527
    %v2530 = vmul.f32 %v2509, %v2528
    %2532 = vrot.lane.b32.xlu0 %v2530, 32
    %v2533 = vpop.permute.xlu0 %2532
    %v2534 = vsel %vm2004, %v2533, 0
    %2536 = vmatprep.subr.mxu0 0.0
    %2537 = vmatpush1.msra.mxu0 %v2000
    %2538 = vmatprep.subr.mxu0 0.0
    %2539 = vmatpush1.msra.mxu0 %v2001
    %2540 = vmatprep.subr.mxu0 0.0
    %2541 = vmatpush1.msra.mxu0 %v2002
    %2542 = vmatprep.subr.mxu0 0.0
    %2543 = vmatpush1.msra.mxu0 %v2003
    %2544 = vmatprep.subr.mxu0 0.0
    %2545 = vmatpush1.msra.mxu0 0.0
    %2546 = vmatprep.subr.mxu0 0.0
    %2547 = vmatpush1.msra.mxu0 0.0
    %2548 = vmatprep.subr.mxu0 0.0
    %2549 = vmatpush1.msra.mxu0 0.0
    %2550 = vmatprep.subr.mxu0 0.0
    %2551 = vmatpush1.msra.mxu0 0.0
    %2552 = vmatprep.subr.mxu0 0.0
    %2553 = vmatpush1.msra.mxu0 0.0
    %2554 = vmatprep.subr.mxu0 0.0
    %2555 = vmatpush1.msra.mxu0 0.0
    %2556 = vmatprep.subr.mxu0 0.0
    %2557 = vmatpush1.msra.mxu0 0.0
    %2558 = vmatprep.subr.mxu0 0.0
    %2559 = vmatpush1.msra.mxu0 0.0
    %2560 = vmatprep.subr.mxu0 0.0
    %2561 = vmatpush1.msra.mxu0 0.0
    %2562 = vmatprep.subr.mxu0 0.0
    %2563 = vmatpush1.msra.mxu0 0.0
    %2564 = vmatprep.subr.mxu0 0.0
    %2565 = vmatpush1.msra.mxu0 0.0
    %2566 = vmatprep.subr.mxu0 0.0
    %2567 = vmatpush1.msra.mxu0 0.0
    %2568 = vmatprep.subr.mxu0 0.0
    %2569 = vmatpush1.msra.mxu0 0.0
    %2570 = vmatprep.subr.mxu0 0.0
    %2571 = vmatpush1.msra.mxu0 0.0
    %2572 = vmatprep.subr.mxu0 0.0
    %2573 = vmatpush1.msra.mxu0 0.0
    %2574 = vmatprep.subr.mxu0 0.0
    %2575 = vmatpush1.msra.mxu0 0.0
    %2576 = vmatprep.subr.mxu0 0.0
    %2577 = vmatpush1.msra.mxu0 0.0
    %2578 = vmatprep.subr.mxu0 0.0
    %2579 = vmatpush1.msra.mxu0 0.0
    %2580 = vmatprep.subr.mxu0 0.0
    %2581 = vmatpush1.msra.mxu0 0.0
    %2582 = vmatprep.subr.mxu0 0.0
    %2583 = vmatpush1.msra.mxu0 0.0
    %2584 = vmatprep.subr.mxu0 0.0
    %2585 = vmatpush1.msra.mxu0 0.0
    %2586 = vmatprep.subr.mxu0 0.0
    %2587 = vmatpush1.msra.mxu0 0.0
    %2588 = vmatprep.subr.mxu0 0.0
    %2589 = vmatpush1.msra.mxu0 0.0
    %2590 = vmatprep.subr.mxu0 0.0
    %2591 = vmatpush1.msra.mxu0 0.0
    %2592 = vmatprep.subr.mxu0 0.0
    %2593 = vmatpush1.msra.mxu0 0.0
    %2594 = vmatprep.subr.mxu0 0.0
    %2595 = vmatpush1.msra.mxu0 0.0
    %2596 = vmatprep.subr.mxu0 0.0
    %2597 = vmatpush1.msra.mxu0 0.0
    %2598 = vmatprep.subr.mxu0 0.0
    %2599 = vmatpush1.msra.mxu0 0.0
    %2600 = vmatprep.mubr.f32.mxu0 0.0
    %2601 = vmatmul.mubr.f32.gmra.mrb[0].mxu0 %v2534
    %v2602 = vpop.f32.mrb[0].mxu0
    %v2603 = vadd.f32 0.0, %v2602
    %v2604 = vpop.f32.mrb[0].mxu0
    %2605 = vdwg.mxu0
    %v2607 = vrot.slane %v2603, 6
    %v2609 = vadd.f32 %v1995, %v2607
    %v2610 = vxor.u32 %v2609, 2147483648
    %v2611 = vmul.f32 %v2610, 1.442695
    %v2612 = vpow.pop %v2611
    %v2613 = vadd.f32 %v2612, 1.0
    %v2614 = vrcp.pop %v2613
    %v2615 = vmul.f32 1.0, %v2614
    %v2616 = vtanh.pop %v2609
    %v2618 = vrot.slane %v2524, 6
    %v2620 = vmul.f32 %v2615, %v2618
    %2622 = vrot.lane.b32.xlu0 %v2616, 64
    %v2623 = vpop.permute.xlu0 %2622
    %v2625 = vmul.f32 %v2615, %v2623
    %2627 = vrot.lane.b32.xlu0 %v2625, 32
    %v2628 = vpop.permute.xlu0 %2627
    %v2630 = vadd.f32 %v2620, %v2628
    %v2631 = vtanh.pop %v2630
    %2633 = vrot.lane.b32.xlu0 %v2631, 64
    %v2634 = vpop.permute.xlu0 %2633
    %v2636 = vmul.f32 %v2615, %v2634
    %v2638 = vrot.slane %v2636, 2
    %2639 = vrot.lane.b32.xlu0 %v2638, 32
    %v2640 = vpop.permute.xlu0 %2639
    %v2641 = vsel %vm2004, %v2640, 0
    %2643 = vmatprep.subr.mxu0 0.0
    %2644 = vmatpush1.msra.mxu0 %v2000
    %2645 = vmatprep.subr.mxu0 0.0
    %2646 = vmatpush1.msra.mxu0 %v2001
    %2647 = vmatprep.subr.mxu0 0.0
    %2648 = vmatpush1.msra.mxu0 %v2002
    %2649 = vmatprep.subr.mxu0 0.0
    %2650 = vmatpush1.msra.mxu0 %v2003
    %2651 = vmatprep.subr.mxu0 0.0
    %2652 = vmatpush1.msra.mxu0 0.0
    %2653 = vmatprep.subr.mxu0 0.0
    %2654 = vmatpush1.msra.mxu0 0.0
    %2655 = vmatprep.subr.mxu0 0.0
    %2656 = vmatpush1.msra.mxu0 0.0
    %2657 = vmatprep.subr.mxu0 0.0
    %2658 = vmatpush1.msra.mxu0 0.0
    %2659 = vmatprep.subr.mxu0 0.0
    %2660 = vmatpush1.msra.mxu0 0.0
    %2661 = vmatprep.subr.mxu0 0.0
    %2662 = vmatpush1.msra.mxu0 0.0
    %2663 = vmatprep.subr.mxu0 0.0
    %2664 = vmatpush1.msra.mxu0 0.0
    %2665 = vmatprep.subr.mxu0 0.0
    %2666 = vmatpush1.msra.mxu0 0.0
    %2667 = vmatprep.subr.mxu0 0.0
    %2668 = vmatpush1.msra.mxu0 0.0
    %2669 = vmatprep.subr.mxu0 0.0
    %2670 = vmatpush1.msra.mxu0 0.0
    %2671 = vmatprep.subr.mxu0 0.0
    %2672 = vmatpush1.msra.mxu0 0.0
    %2673 = vmatprep.subr.mxu0 0.0
    %2674 = vmatpush1.msra.mxu0 0.0
    %2675 = vmatprep.subr.mxu0 0.0
    %2676 = vmatpush1.msra.mxu0 0.0
    %2677 = vmatprep.subr.mxu0 0.0
    %2678 = vmatpush1.msra.mxu0 0.0
    %2679 = vmatprep.subr.mxu0 0.0
    %2680 = vmatpush1.msra.mxu0 0.0
    %2681 = vmatprep.subr.mxu0 0.0
    %2682 = vmatpush1.msra.mxu0 0.0
    %2683 = vmatprep.subr.mxu0 0.0
    %2684 = vmatpush1.msra.mxu0 0.0
    %2685 = vmatprep.subr.mxu0 0.0
    %2686 = vmatpush1.msra.mxu0 0.0
    %2687 = vmatprep.subr.mxu0 0.0
    %2688 = vmatpush1.msra.mxu0 0.0
    %2689 = vmatprep.subr.mxu0 0.0
    %2690 = vmatpush1.msra.mxu0 0.0
    %2691 = vmatprep.subr.mxu0 0.0
    %2692 = vmatpush1.msra.mxu0 0.0
    %2693 = vmatprep.subr.mxu0 0.0
    %2694 = vmatpush1.msra.mxu0 0.0
    %2695 = vmatprep.subr.mxu0 0.0
    %2696 = vmatpush1.msra.mxu0 0.0
    %2697 = vmatprep.subr.mxu0 0.0
    %2698 = vmatpush1.msra.mxu0 0.0
    %2699 = vmatprep.subr.mxu0 0.0
    %2700 = vmatpush1.msra.mxu0 0.0
    %2701 = vmatprep.subr.mxu0 0.0
    %2702 = vmatpush1.msra.mxu0 0.0
    %2703 = vmatprep.subr.mxu0 0.0
    %2704 = vmatpush1.msra.mxu0 0.0
    %2705 = vmatprep.subr.mxu0 0.0
    %2706 = vmatpush1.msra.mxu0 0.0
    %2707 = vmatprep.mubr.f32.mxu0 0.0
    %2708 = vmatmul.mubr.f32.gmra.mrb[0].mxu0 %v2641
    %v2709 = vpop.f32.mrb[0].mxu0
    %v2710 = vadd.f32 0.0, %v2709
    %v2711 = vpop.f32.mrb[0].mxu0
    %2712 = vdwg.mxu0
    %v2714 = vrot.slane %v2710, 4
    %v2716 = vadd.f32 %v1995, %v2714
    %v2717 = vxor.u32 %v2716, 2147483648
    %v2718 = vmul.f32 %v2717, 1.442695
    %v2719 = vpow.pop %v2718
    %v2720 = vadd.f32 %v2719, 1.0
    %v2721 = vrcp.pop %v2720
    %v2722 = vmul.f32 1.0, %v2721
    %v2723 = vtanh.pop %v2716
    %v2725 = vrot.slane %v2630, 6
    %v2727 = vmul.f32 %v2722, %v2725
    %2729 = vrot.lane.b32.xlu0 %v2723, 64
    %v2730 = vpop.permute.xlu0 %2729
    %v2732 = vmul.f32 %v2722, %v2730
    %2734 = vrot.lane.b32.xlu0 %v2732, 32
    %v2735 = vpop.permute.xlu0 %2734
    %v2737 = vadd.f32 %v2727, %v2735
    %v2738 = vtanh.pop %v2737
    %2740 = vrot.lane.b32.xlu0 %v2738, 64
    %v2741 = vpop.permute.xlu0 %2740
    %v2743 = vmul.f32 %v2722, %v2741
    %v2745 = vrot.slane %v2743, 4
    %2746 = vrot.lane.b32.xlu0 %v2745, 32
    %v2747 = vpop.permute.xlu0 %2746
    %v2748 = vsel %vm2004, %v2747, 0
    %2750 = vmatprep.subr.mxu0 0.0
    %2751 = vmatpush1.msra.mxu0 %v2000
    %2752 = vmatprep.subr.mxu0 0.0
    %2753 = vmatpush1.msra.mxu0 %v2001
    %2754 = vmatprep.subr.mxu0 0.0
    %2755 = vmatpush1.msra.mxu0 %v2002
    %2756 = vmatprep.subr.mxu0 0.0
    %2757 = vmatpush1.msra.mxu0 %v2003
    %2758 = vmatprep.subr.mxu0 0.0
    %2759 = vmatpush1.msra.mxu0 0.0
    %2760 = vmatprep.subr.mxu0 0.0
    %2761 = vmatpush1.msra.mxu0 0.0
    %2762 = vmatprep.subr.mxu0 0.0
    %2763 = vmatpush1.msra.mxu0 0.0
    %2764 = vmatprep.subr.mxu0 0.0
    %2765 = vmatpush1.msra.mxu0 0.0
    %2766 = vmatprep.subr.mxu0 0.0
    %2767 = vmatpush1.msra.mxu0 0.0
    %2768 = vmatprep.subr.mxu0 0.0
    %2769 = vmatpush1.msra.mxu0 0.0
    %2770 = vmatprep.subr.mxu0 0.0
    %2771 = vmatpush1.msra.mxu0 0.0
    %2772 = vmatprep.subr.mxu0 0.0
    %2773 = vmatpush1.msra.mxu0 0.0
    %2774 = vmatprep.subr.mxu0 0.0
    %2775 = vmatpush1.msra.mxu0 0.0
    %2776 = vmatprep.subr.mxu0 0.0
    %2777 = vmatpush1.msra.mxu0 0.0
    %2778 = vmatprep.subr.mxu0 0.0
    %2779 = vmatpush1.msra.mxu0 0.0
    %2780 = vmatprep.subr.mxu0 0.0
    %2781 = vmatpush1.msra.mxu0 0.0
    %2782 = vmatprep.subr.mxu0 0.0
    %2783 = vmatpush1.msra.mxu0 0.0
    %2784 = vmatprep.subr.mxu0 0.0
    %2785 = vmatpush1.msra.mxu0 0.0
    %2786 = vmatprep.subr.mxu0 0.0
    %2787 = vmatpush1.msra.mxu0 0.0
    %2788 = vmatprep.subr.mxu0 0.0
    %2789 = vmatpush1.msra.mxu0 0.0
    %2790 = vmatprep.subr.mxu0 0.0
    %2791 = vmatpush1.msra.mxu0 0.0
    %2792 = vmatprep.subr.mxu0 0.0
    %2793 = vmatpush1.msra.mxu0 0.0
    %2794 = vmatprep.subr.mxu0 0.0
    %2795 = vmatpush1.msra.mxu0 0.0
    %2796 = vmatprep.subr.mxu0 0.0
    %2797 = vmatpush1.msra.mxu0 0.0
    %2798 = vmatprep.subr.mxu0 0.0
    %2799 = vmatpush1.msra.mxu0 0.0
    %2800 = vmatprep.subr.mxu0 0.0
    %2801 = vmatpush1.msra.mxu0 0.0
    %2802 = vmatprep.subr.mxu0 0.0
    %2803 = vmatpush1.msra.mxu0 0.0
    %2804 = vmatprep.subr.mxu0 0.0
    %2805 = vmatpush1.msra.mxu0 0.0
    %2806 = vmatprep.subr.mxu0 0.0
    %2807 = vmatpush1.msra.mxu0 0.0
    %2808 = vmatprep.subr.mxu0 0.0
    %2809 = vmatpush1.msra.mxu0 0.0
    %2810 = vmatprep.subr.mxu0 0.0
    %2811 = vmatpush1.msra.mxu0 0.0
    %2812 = vmatprep.subr.mxu0 0.0
    %2813 = vmatpush1.msra.mxu0 0.0
    %2814 = vmatprep.mubr.f32.mxu0 0.0
    %2815 = vmatmul.mubr.f32.gmra.mrb[0].mxu0 %v2748
    %v2816 = vpop.f32.mrb[0].mxu0
    %v2817 = vadd.f32 0.0, %v2816
    %v2818 = vpop.f32.mrb[0].mxu0
    %2819 = vdwg.mxu0
    %v2821 = vrot.slane %v2817, 2
    %v2823 = vadd.f32 %v1995, %v2821
    %v2824 = vxor.u32 %v2823, 2147483648
    %v2825 = vmul.f32 %v2824, 1.442695
    %v2826 = vpow.pop %v2825
    %v2827 = vadd.f32 %v2826, 1.0
    %v2828 = vrcp.pop %v2827
    %v2829 = vmul.f32 1.0, %v2828
    %v2830 = vtanh.pop %v2823
    %v2832 = vrot.slane %v2737, 6
    %v2834 = vmul.f32 %v2829, %v2832
    %2836 = vrot.lane.b32.xlu0 %v2830, 64
    %v2837 = vpop.permute.xlu0 %2836
    %v2839 = vmul.f32 %v2829, %v2837
    %2841 = vrot.lane.b32.xlu0 %v2839, 32
    %v2842 = vpop.permute.xlu0 %2841
    %v2844 = vadd.f32 %v2834, %v2842
    %v2845 = vtanh.pop %v2844
    %2847 = vrot.lane.b32.xlu0 %v2845, 64
    %v2848 = vpop.permute.xlu0 %2847
    %v2850 = vmul.f32 %v2829, %v2848
    %v2851 = vld [vmem:[%s9] sm:$0xff]
    %v2852 = vld [vmem:[%s9 + $0x8] sm:$0xff]
    %v2853 = vld [vmem:[%s9 + $0x10] sm:$0xff]
    %v2854 = vld [vmem:[%s9 + $0x18] sm:$0xff]
    %v2855 = vld [vmem:[%s10] sm:$0x1]
    %v2857 = vlaneseq
    %v2858 = vshrl.u32 %v2857, 7
    %v2859 = vsub.s32 0, %v2858
    %v2860 = vrot.slane %v2855, %v2859
    %v2863 = vrot.slane %v2850, 6
    %2864 = vrot.lane.b32.xlu0 %v2863, 32
    %v2865 = vpop.permute.xlu0 %2864
    %v2866 = vsel %vm2004, %v2865, 0
    %2868 = vmatprep.subr.mxu0 0.0
    %2869 = vmatpush1.msra.mxu0 %v2851
    %2870 = vmatprep.subr.mxu0 0.0
    %2871 = vmatpush1.msra.mxu0 %v2852
    %2872 = vmatprep.subr.mxu0 0.0
    %2873 = vmatpush1.msra.mxu0 %v2853
    %2874 = vmatprep.subr.mxu0 0.0
    %2875 = vmatpush1.msra.mxu0 %v2854
    %2876 = vmatprep.subr.mxu0 0.0
    %2877 = vmatpush1.msra.mxu0 0.0
    %2878 = vmatprep.subr.mxu0 0.0
    %2879 = vmatpush1.msra.mxu0 0.0
    %2880 = vmatprep.subr.mxu0 0.0
    %2881 = vmatpush1.msra.mxu0 0.0
    %2882 = vmatprep.subr.mxu0 0.0
    %2883 = vmatpush1.msra.mxu0 0.0
    %2884 = vmatprep.subr.mxu0 0.0
    %2885 = vmatpush1.msra.mxu0 0.0
    %2886 = vmatprep.subr.mxu0 0.0
    %2887 = vmatpush1.msra.mxu0 0.0
    %2888 = vmatprep.subr.mxu0 0.0
    %2889 = vmatpush1.msra.mxu0 0.0
    %2890 = vmatprep.subr.mxu0 0.0
    %2891 = vmatpush1.msra.mxu0 0.0
    %2892 = vmatprep.subr.mxu0 0.0
    %2893 = vmatpush1.msra.mxu0 0.0
    %2894 = vmatprep.subr.mxu0 0.0
    %2895 = vmatpush1.msra.mxu0 0.0
    %2896 = vmatprep.subr.mxu0 0.0
    %2897 = vmatpush1.msra.mxu0 0.0
    %2898 = vmatprep.subr.mxu0 0.0
    %2899 = vmatpush1.msra.mxu0 0.0
    %2900 = vmatprep.subr.mxu0 0.0
    %2901 = vmatpush1.msra.mxu0 0.0
    %2902 = vmatprep.subr.mxu0 0.0
    %2903 = vmatpush1.msra.mxu0 0.0
    %2904 = vmatprep.subr.mxu0 0.0
    %2905 = vmatpush1.msra.mxu0 0.0
    %2906 = vmatprep.subr.mxu0 0.0
    %2907 = vmatpush1.msra.mxu0 0.0
    %2908 = vmatprep.subr.mxu0 0.0
    %2909 = vmatpush1.msra.mxu0 0.0
    %2910 = vmatprep.subr.mxu0 0.0
    %2911 = vmatpush1.msra.mxu0 0.0
    %2912 = vmatprep.subr.mxu0 0.0
    %2913 = vmatpush1.msra.mxu0 0.0
    %2914 = vmatprep.subr.mxu0 0.0
    %2915 = vmatpush1.msra.mxu0 0.0
    %2916 = vmatprep.subr.mxu0 0.0
    %2917 = vmatpush1.msra.mxu0 0.0
    %2918 = vmatprep.subr.mxu0 0.0
    %2919 = vmatpush1.msra.mxu0 0.0
    %2920 = vmatprep.subr.mxu0 0.0
    %2921 = vmatpush1.msra.mxu0 0.0
    %2922 = vmatprep.subr.mxu0 0.0
    %2923 = vmatpush1.msra.mxu0 0.0
    %2924 = vmatprep.subr.mxu0 0.0
    %2925 = vmatpush1.msra.mxu0 0.0
    %2926 = vmatprep.subr.mxu0 0.0
    %2927 = vmatpush1.msra.mxu0 0.0
    %2928 = vmatprep.subr.mxu0 0.0
    %2929 = vmatpush1.msra.mxu0 0.0
    %2930 = vmatprep.subr.mxu0 0.0
    %2931 = vmatpush1.msra.mxu0 0.0
    %2932 = vmatprep.mubr.f32.mxu0 0.0
    %2933 = vmatmul.mubr.f32.gmra.mrb[0].mxu0 %v2866
    %v2934 = vpop.f32.mrb[0].mxu0
    %v2935 = vadd.f32 %v2860, %v2934
    %v2936 = vpop.f32.mrb[0].mxu0
    %2937 = vdwg.mxu0
    %vm2938 = vcmask 123904
    %v2939 = vsel %vm2938, %v2935, -inf
    %2940 = vmax.xlane.f32.xlu0 %v2939
    %v2941 = vpop.xlane.xlu0 %2940
    %v2942 = vsub.f32 %v2935, %v2941
    %v2943 = vmul.f32 %v2942, 1.442695
    %v2944 = vpow.pop %v2943
    %v2945 = vsel %vm2938, %v2944, 0.0
    %2946 = vadd.xlane.f32.xlu0 %v2945
    %v2947 = vpop.xlane.xlu0 %2946
    %v2948 = vrcp.pop %v2947
    %v2949 = vmul.f32 %v2944, %v2948
    %2950 = vst.msk [vmem:[#allocation7] sm:$0x3] %vm2938, %v2949
    // Predicated region
    $region54: #{cnnlstm_forward.1} parent=1 // pred_check
      _
    $region55: #{cnnlstm_forward.1} parent=1 // pred_check_branch
      %2952 = sbr.rel (0) target = $region57
    $region56: #{cnnlstm_forward.1} parent=1 // pred_region
      %s2954 = ssub.s32 32, 32
      %2955 = vsyncadd [#allocation3], %s2954
      %s2957 = sshll.u32 [#allocation7], 4
      %s2958 = int_to_ptr.vmem [resolvable:$true] %s2957
      %2960 = dma.vmem_to_hbm [thread:$0]  %s2958, 32, %s11, [#allocation3]
    $region57: #{cnnlstm_forward.1} parent=1 // pred_fallthru
      _
    // Predicated region
    $region58: #{cnnlstm_forward.1} parent=1 // pred_check
      _
    $region59: #{cnnlstm_forward.1} parent=1 // pred_check_branch
      %2962 = sbr.rel (0) target = $region61
    $region60: #{cnnlstm_forward.1} parent=1 // pred_region
      %2963 = dma.done [#allocation3], 32
    $region61: #{cnnlstm_forward.1} parent=1 // pred_fallthru
      _
    %2964 = vsyncpa [#allocation3], 1
    %2965 = vsyncpa [#allocation4], 1
    %2966 = vsyncpa [#allocation6], 1

</llo_original>
